<compile_context>
chip_gen: v5e
topology: v5e:2x2
jax: 0.10.0
libtpu: 0.0.40
codegen_flags: <defaults>
</compile_context>

<pallas_src>
import math
from functools import partial

import jax
import jax.numpy as jnp
from jax import lax
from jax.experimental import pallas as pl
from jax.experimental.pallas import tpu as pltpu

_LN_EPS = 1e-5          # torch.nn.LayerNorm default
_NEG_MASK = -10000.0    # matches torch (1 - mask) * -10000
_NEG_PAD = -1e30        # hard mask for padded kv columns


def _round_up(n, m):
    return ((n + m - 1) // m) * m


def _tile_and_pad(n, cap, align):
    """Return (tile, padded_extent); tile is a multiple of `align`, <= cap.

    Never returns an unbounded full-sequence tile: awkward extents are padded
    up to the tile instead (padding handled by the caller / in-kernel masks).
    """
    if n > cap:
        t = max(cap - cap % align, align)
    else:
        t = _round_up(n, align)
    return t, _round_up(n, t)


def _vmem_limit_bytes():
    """~3/4 of physical VMEM, capped at 96 MiB (96 on v5e/v6e, 48 on v7x)."""
    try:
        cap = int(pltpu.get_tpu_info().vmem_capacity_bytes)
    except Exception:
        return 48 * 1024 * 1024      # conservative: safe on every generation
    return int(min(3 * cap // 4, 96 * 1024 * 1024))


# ---------------------------------------------------------------------------
# Fused flash-MHA + output projection + residual + LayerNorm kernel
# ---------------------------------------------------------------------------
def _mha_kernel(*refs, num_heads, head_dim, tq, tk, have_mask, causal, skv,
                kv_padded, eps):
    if have_mask:
        mask_ref, rest = refs[0], refs[1:]
    else:
        mask_ref, rest = None, refs
    (k_ref, v_ref, xres_ref, wq_ref, bq_ref, wo_ref, bo_ref, g_ref, beta_ref,
     o_ref, qproj_scr, m_scr, l_scr, acc_scr, ctx_scr) = rest

    f32 = jnp.float32
    cdt = k_ref.dtype                       # MXU operand dtype (bf16 path if bf16 in)
    H, D = num_heads, head_dim
    qi = pl.program_id(1)
    ki = pl.program_id(2)
    nk = pl.num_programs(2)

    @pl.when(ki == 0)
    def _init():
        # Project Q once per (batch, q-tile) from the residual stream; the
        # 1/sqrt(D) scale is folded into wq/bq by the wrapper.
        x = xres_ref[0]                                        # (TQ, E)
        for h in range(H):
            xh = x[:, h * D:(h + 1) * D].astype(cdt)           # (TQ, D)
            qp = jnp.dot(xh, wq_ref[h], preferred_element_type=f32) + bq_ref[h]
            qproj_scr[h] = qp.astype(cdt)
        m_scr[...] = jnp.full_like(m_scr, -jnp.inf)
        l_scr[...] = jnp.zeros_like(l_scr)
        acc_scr[...] = jnp.zeros_like(acc_scr)

    def _attend():
        kp = k_ref[0]                                          # (H, TK, D) pre-projected
        vp = v_ref[0]                                          # (H, TK, D) pre-projected

        # QK^T contracting the last dims (no explicit K transpose).
        s = jnp.einsum("hqd,hkd->hqk", qproj_scr[...], kp,
                       preferred_element_type=f32)             # (H, TQ, TK)

        if have_mask:
            # Compact bf16 0/1 mask -> additive bias computed on the VPU.
            mbias = (1.0 - mask_ref[0].astype(f32)) * _NEG_MASK
            s = s + mbias[None, :, :]
        if causal:
            # Causal bias generated in-kernel from iota (no mask stream).
            q_idx = qi * tq + lax.broadcasted_iota(jnp.int32, (tq, tk), 0)
            k_idx = ki * tk + lax.broadcasted_iota(jnp.int32, (tq, tk), 1)
            s = s + jnp.where(q_idx >= k_idx, 0.0, _NEG_MASK)[None, :, :]
        if kv_padded:
            # Hard-mask kv columns beyond the true sequence length.
            k_idx = ki * tk + lax.broadcasted_iota(jnp.int32, (1, tk), 1)
            s = jnp.where((k_idx < skv)[None, :, :], s, _NEG_PAD)

        # Online softmax update; statistics stay f32.
        m_prev = m_scr[...]
        m_new = jnp.maximum(m_prev, jnp.max(s, axis=-1, keepdims=True))
        alpha = jnp.exp(m_prev - m_new)
        if cdt == jnp.bfloat16:
            # bf16 exp relieves the single EUP slot on v6e/v7x.
            p = jnp.exp((s - m_new).astype(jnp.bfloat16))
            l_scr[...] = alpha * l_scr[...] + jnp.sum(p.astype(f32), axis=-1,
                                                      keepdims=True)
            pv = p
        else:
            p = jnp.exp(s - m_new)
            l_scr[...] = alpha * l_scr[...] + jnp.sum(p, axis=-1, keepdims=True)
            pv = p.astype(cdt)
        acc_scr[...] = alpha * acc_scr[...] + jnp.einsum(
            "hqk,hkd->hqd", pv, vp, preferred_element_type=f32)
        m_scr[...] = m_new

    if causal:
        # Skip kv tiles that are entirely above the diagonal (MXU/EUP saving;
        # tile 0 always runs so the accumulators are always initialized).
        pl.when((ki * tk) < ((qi + 1) * tq))(_attend)
    else:
        _attend()

    @pl.when(ki == nk - 1)
    def _finalize():
        l = l_scr[...]
        inv = pl.reciprocal(l, approx=True)        # EUP
        inv = inv * (2.0 - l * inv)                # one Newton step (VPU)

        # Assemble head contexts lane-dense into (TQ, E) once per q-tile so the
        # output projection is a single depth-E MXU matmul.
        for h in range(H):
            ctx_scr[:, h * D:(h + 1) * D] = (acc_scr[h] * inv[h]).astype(ctx_scr.dtype)
        out = jnp.dot(ctx_scr[...], wo_ref[...],
                      preferred_element_type=f32) + bo_ref[...]

        # Residual + LayerNorm fused epilogue; lane-dense (TQ, E) store.
        y = xres_ref[0].astype(f32) + out
        mu = jnp.mean(y, axis=-1, keepdims=True)
        yc = y - mu
        var = jnp.mean(yc * yc, axis=-1, keepdims=True)
        yn = yc * lax.rsqrt(var + eps)
        o_ref[0] = (yn * g_ref[...] + beta_ref[...]).astype(o_ref.dtype)


def _mha_residual_ln(x_q, x_kv, p, ln, attn_mask=None, *, causal=False,
                     q_tile=256, kv_tile=256):
    """LN(x_q + OutProj(softmax(Q K^T/sqrt(D) + maskbias) V)); heads from E=H*D.

    kv_tile defaults to 256 so the f32 score/prob temporaries stay well inside
    v7x's 64 MiB VMEM; on v5e/v6e (128 MiB) it can be raised to 512-1024.
    """
    B, Sq, E = x_q.shape
    Skv = x_kv.shape[1]
    H, D, _ = p["wq"].shape
    assert H * D == E, "emb_dim must equal num_heads * head_dim"
    cdt = x_q.dtype
    f32 = jnp.float32
    scale = 1.0 / math.sqrt(float(D))

    # --- K/V projection hoisted out of the flash loop (one XLA einsum). -----
    kvh = x_kv.reshape(B, Skv, H, D)
    kp = (jnp.einsum("bshd,hde->bhse", kvh, p["wk"],
                     preferred_element_type=f32)
          + p["bk"].reshape(1, H, 1, D)).astype(cdt)           # (B, H, Skv, D)
    vp = (jnp.einsum("bshd,hde->bhse", kvh, p["wv"],
                     preferred_element_type=f32)
          + p["bv"].reshape(1, H, 1, D)).astype(cdt)

    # --- Tiling + padding (never an unbounded full-sequence tile). ----------
    seq_align = 16 if cdt == jnp.bfloat16 else 8
    TQ, Sq_p = _tile_and_pad(Sq, q_tile, seq_align)
    TK, Skv_p = _tile_and_pad(Skv, kv_tile, seq_align)
    pad_q, pad_kv = Sq_p - Sq, Skv_p - Skv

    xres = jnp.pad(x_q, ((0, 0), (0, pad_q), (0, 0))) if pad_q else x_q
    if pad_kv:
        kp = jnp.pad(kp, ((0, 0), (0, 0), (0, pad_kv), (0, 0)))
        vp = jnp.pad(vp, ((0, 0), (0, 0), (0, pad_kv), (0, 0)))

    # 1/sqrt(D) folded into the Q projection; weights in the compute dtype,
    # biases kept in f32 (added onto f32 matmul accumulators).
    wq = (p["wq"] * scale).astype(cdt)                 # (H, D, D)
    bq = (p["bq"] * scale).astype(f32)                 # (H, 1, D)
    wo = p["wo"].astype(cdt)                           # (E, E) single block
    bo = p["bo"].reshape(1, E).astype(f32)
    gamma = ln["gamma"].reshape(1, E).astype(f32)
    beta = ln["beta"].reshape(1, E).astype(f32)

    have_mask = attn_mask is not None
    grid = (B, Sq_p // TQ, Skv_p // TK)

    def full(shape):
        return pl.BlockSpec(shape, lambda b, qi, ki: (0,) * len(shape))

    in_specs = []
    args = []
    if have_mask:
        m = jnp.asarray(attn_mask)
        if m.ndim == 4:
            # TODO(synk): distinct per-head masks are not supported; the head-0
            # mask is applied to all heads.
            m = m[:, 0]
        m = jnp.broadcast_to(m, (B, Sq, Skv)).astype(jnp.bfloat16)   # 0/1 exact
        if pad_q or pad_kv:
            m = jnp.pad(m, ((0, 0), (0, pad_q), (0, pad_kv)))
        in_specs.append(pl.BlockSpec((1, TQ, TK), lambda b, qi, ki: (b, qi, ki)))
        args.append(m)

    in_specs += [
        pl.BlockSpec((1, H, TK, D), lambda b, qi, ki: (b, 0, ki, 0)),  # K (seq axis!)
        pl.BlockSpec((1, H, TK, D), lambda b, qi, ki: (b, 0, ki, 0)),  # V (seq axis!)
        pl.BlockSpec((1, TQ, E), lambda b, qi, ki: (b, qi, 0)),        # residual / Q src
        full((H, D, D)), full((H, 1, D)),                              # wq, bq
        full((E, E)), full((1, E)),                                    # wo, bo
        full((1, E)), full((1, E)),                                    # gamma, beta
    ]
    args += [kp, vp, xres, wq, bq, wo, bo, gamma, beta]

    kern = partial(_mha_kernel, num_heads=H, head_dim=D, tq=TQ, tk=TK,
                   have_mask=have_mask, causal=causal, skv=Skv,
                   kv_padded=pad_kv > 0, eps=_LN_EPS)

    out = pl.pallas_call(
        kern,
        out_shape=jax.ShapeDtypeStruct((B, Sq_p, E), cdt),
        grid_spec=pltpu.PrefetchScalarGridSpec(
            num_scalar_prefetch=0,
            grid=grid,
            in_specs=in_specs,
            out_specs=pl.BlockSpec((1, TQ, E), lambda b, qi, ki: (b, qi, 0)),
            scratch_shapes=[
                pltpu.VMEM((H, TQ, D), cdt),           # projected Q (held over kv)
                pltpu.VMEM((H, TQ, 1), jnp.float32),   # running max
                pltpu.VMEM((H, TQ, 1), jnp.float32),   # running denominator
                pltpu.VMEM((H, TQ, D), jnp.float32),   # running numerator
                pltpu.VMEM((TQ, E), cdt),              # lane-dense ctx for out-proj
            ],
        ),
        compiler_params=pltpu.CompilerParams(
            dimension_semantics=("parallel", "parallel", "arbitrary"),
            vmem_limit_bytes=_vmem_limit_bytes(),
        ),
    )(*args)
    return out[:, :Sq] if pad_q else out


# ---------------------------------------------------------------------------
# Fused MLP (Linear-ReLU-Linear) + residual + LayerNorm kernel
# ---------------------------------------------------------------------------
def _mlp_ln_kernel(x_ref, w1_ref, b1_ref, w2_ref, b2_ref, g_ref, beta_ref,
                   o_ref, *, eps):
    f32 = jnp.float32
    x = x_ref[...]
    h = jnp.dot(x, w1_ref[...], preferred_element_type=f32) + b1_ref[...]
    h = jnp.maximum(h, 0.0).astype(x.dtype)
    m = jnp.dot(h, w2_ref[...], preferred_element_type=f32) + b2_ref[...]
    y = x.astype(f32) + m
    mu = jnp.mean(y, axis=-1, keepdims=True)
    yc = y - mu
    var = jnp.mean(yc * yc, axis=-1, keepdims=True)
    yn = yc * lax.rsqrt(var + eps)
    o_ref[...] = (yn * g_ref[...] + beta_ref[...]).astype(o_ref.dtype)


def _mlp_residual_ln(x, p, ln, *, row_tile=512):
    B, S, E = x.shape
    rows = B * S
    cdt = x.dtype
    align = 16 if cdt == jnp.bfloat16 else 8
    TR, rows_p = _tile_and_pad(rows, row_tile, align)
    xf = x.reshape(rows, E)
    if rows_p != rows:
        xf = jnp.pad(xf, ((0, rows_p - rows), (0, 0)))

    Eh = p["w1"].shape[1]
    w1 = p["w1"].astype(cdt)
    b1 = p["b1"].reshape(1, Eh).astype(jnp.float32)
    w2 = p["w2"].astype(cdt)
    b2 = p["b2"].reshape(1, E).astype(jnp.float32)
    gamma = ln["gamma"].reshape(1, E).astype(jnp.float32)
    beta = ln["beta"].reshape(1, E).astype(jnp.float32)

    def full(shape):
        return pl.BlockSpec(shape, lambda i: (0,) * len(shape))

    # TODO(synk): for very large E*Eh (resident weights >~16 MiB) add a hidden-
    # dim grid axis with a flash-style accumulator so w1/w2 need not be fully
    # resident (matters first on v7x's 64 MiB VMEM).
    out = pl.pallas_call(
        partial(_mlp_ln_kernel, eps=_LN_EPS),
        out_shape=jax.ShapeDtypeStruct((rows_p, E), cdt),
        grid_spec=pltpu.PrefetchScalarGridSpec(
            num_scalar_prefetch=0,
            grid=(rows_p // TR,),
            in_specs=[pl.BlockSpec((TR, E), lambda i: (i, 0)),
                      full((E, Eh)), full((1, Eh)),
                      full((Eh, E)), full((1, E)),
                      full((1, E)), full((1, E))],
            out_specs=pl.BlockSpec((TR, E), lambda i: (i, 0)),
        ),
        compiler_params=pltpu.CompilerParams(
            dimension_semantics=("parallel",),
            vmem_limit_bytes=_vmem_limit_bytes(),
        ),
    )(xf, w1, b1, w2, b2, gamma, beta)
    if rows_p != rows:
        out = out[:rows]
    return out.reshape(B, S, E)


# ---------------------------------------------------------------------------
# DecoderBlock forward
# ---------------------------------------------------------------------------
def decoder_block(x, encoder_output, params, attn_mask=None,
                  self_attn_causal=False):
    """x: (B, S, E), encoder_output: (B, S_enc, E); attn_mask 1=attend, 0=mask.

    If `self_attn_causal` is True, the causal mask for the self-attention path
    is generated in-kernel (no mask needs to be streamed) and fully-masked kv
    tiles are skipped.
    """
    x1 = _mha_residual_ln(x, x, params["mask_mha"], params["norm_mask_attn"],
                          attn_mask=attn_mask, causal=self_attn_causal)
    x2 = _mha_residual_ln(x1, encoder_output, params["mha"],
                          params["norm_attn"], attn_mask=None)
    x3 = _mlp_residual_ln(x2, params["mlp"], params["norm_mlp"])
    return x3


def init_decoder_params(key, emb_dim, num_heads, dtype=jnp.float32):
    E, H = emb_dim, num_heads
    D = E // H
    keys = iter(jax.random.split(key, 20))

    def u(shape, fan_in):
        lim = 1.0 / math.sqrt(fan_in)
        return jax.random.uniform(next(keys), shape, dtype, minval=-lim, maxval=lim)

    def mha_params():
        return {
            "wq": u((H, D, D), D), "bq": u((H, 1, D), D),
            "wk": u((H, D, D), D), "bk": u((H, 1, D), D),
            "wv": u((H, D, D), D), "bv": u((H, 1, D), D),
            "wo": u((E, E), E), "bo": u((1, E), E),
        }

    def ln_params():
        return {"gamma": jnp.ones((E,), dtype), "beta": jnp.zeros((E,), dtype)}

    return {
        "mask_mha": mha_params(),
        "mha": mha_params(),
        "mlp": {"w1": u((E, E), E), "b1": u((E,), E),
                "w2": u((E, E), E), "b2": u((E,), E)},
        "norm_mask_attn": ln_params(),
        "norm_attn": ln_params(),
        "norm_mlp": ln_params(),
    }


# ---------------------------------------------------------------------------
# Pure-JAX reference of the intended semantics (for in-script verification)
# ---------------------------------------------------------------------------
def _ln_ref(y, g, b, eps=_LN_EPS):
    mu = jnp.mean(y, axis=-1, keepdims=True)
    var = jnp.mean((y - mu) ** 2, axis=-1, keepdims=True)
    return (y - mu) * lax.rsqrt(var + eps) * g.reshape(1, 1, -1) + b.reshape(1, 1, -1)


def _mha_ref(xq, xkv, p, mask):
    B, Sq, E = xq.shape
    Skv = xkv.shape[1]
    H, D, _ = p["wq"].shape
    qh = jnp.transpose(xq.reshape(B, Sq, H, D), (0, 2, 1, 3))
    kh = jnp.transpose(xkv.reshape(B, Skv, H, D), (0, 2, 1, 3))
    Q = jnp.einsum("bhsd,hde->bhse", qh, p["wq"]) + p["bq"][None]
    K = jnp.einsum("bhtd,hde->bhte", kh, p["wk"]) + p["bk"][None]
    V = jnp.einsum("bhtd,hde->bhte", kh, p["wv"]) + p["bv"][None]
    s = jnp.einsum("bhqd,bhkd->bhqk", Q, K) / jnp.sqrt(jnp.float32(D))
    if mask is not None:
        m = jnp.asarray(mask)
        if m.ndim == 4:
            m = m[:, 0]
        m = jnp.broadcast_to(m, (B, Sq, Skv)).astype(jnp.float32)
        s = s + (1.0 - m)[:, None] * _NEG_MASK
    a = jax.nn.softmax(s, axis=-1)
    ctx = jnp.einsum("bhqk,bhkd->bhqd", a, V)
    ctx = jnp.transpose(ctx, (0, 2, 1, 3)).reshape(B, Sq, E)
    return ctx @ p["wo"] + p["bo"]


def _reference_decoder_block(x, enc, params, attn_mask=None):
    a1 = _mha_ref(x, x, params["mask_mha"], attn_mask)
    x1 = _ln_ref(x + a1, params["norm_mask_attn"]["gamma"], params["norm_mask_attn"]["beta"])
    a2 = _mha_ref(x1, enc, params["mha"], None)
    x2 = _ln_ref(x1 + a2, params["norm_attn"]["gamma"], params["norm_attn"]["beta"])
    h = jnp.maximum(x2 @ params["mlp"]["w1"] + params["mlp"]["b1"], 0.0)
    m = h @ params["mlp"]["w2"] + params["mlp"]["b2"]
    x3 = _ln_ref(x2 + m, params["norm_mlp"]["gamma"], params["norm_mlp"]["beta"])
    return x3


if __name__ == "__main__":
    B, S, S_ENC, EMB, HEADS = 2, 8, 16, 32, 2

    key = jax.random.PRNGKey(0)
    kparam, kx, ke = jax.random.split(key, 3)
    params = init_decoder_params(kparam, EMB, HEADS)

    x = jax.random.normal(kx, (B, S, EMB), jnp.float32)
    enc = jax.random.normal(ke, (B, S_ENC, EMB), jnp.float32)
    causal_mask = jnp.tril(jnp.ones((S, S), jnp.float32))   # 1 = attend, 0 = masked

    fwd = jax.jit(decoder_block, static_argnames=("self_attn_causal",))

    # 1) Explicit streamed mask (matches the PyTorch call with attn_mask).
    out = jax.block_until_ready(fwd(x, enc, params, attn_mask=causal_mask))
    assert out.shape == (B, S, EMB), out.shape
    ref = _reference_decoder_block(x, enc, params, attn_mask=causal_mask)
    err = float(jnp.max(jnp.abs(out - ref)))
    assert jnp.allclose(out, ref, atol=2e-3, rtol=2e-3), f"masked mismatch, max err {err}"

    # 2) In-kernel causal mask (no mask stream, masked kv tiles skipped).
    out_c = jax.block_until_ready(fwd(x, enc, params, attn_mask=None,
                                      self_attn_causal=True))
    err_c = float(jnp.max(jnp.abs(out_c - ref)))
    assert jnp.allclose(out_c, ref, atol=2e-3, rtol=2e-3), f"causal mismatch, max err {err_c}"

    # 3) Mask-less kernel variant on the self-attention path.
    out_nm = jax.block_until_ready(fwd(x, enc, params, attn_mask=None))
    ref_nm = _reference_decoder_block(x, enc, params, attn_mask=None)
    err_nm = float(jnp.max(jnp.abs(out_nm - ref_nm)))
    assert jnp.allclose(out_nm, ref_nm, atol=2e-3, rtol=2e-3), f"no-mask mismatch, max err {err_nm}"

    print("KERNEL_OK")
</pallas_src>

<mosaic_0001>
module attributes {stable_mosaic.version = 11 : i64} {
  func.func @_mha_kernel(%arg0: i32, %arg1: i32, %arg2: i32, %arg3: memref<1x8x8xbf16, #tpu.memory_space<vmem>>, %arg4: memref<1x2x8x16xf32, #tpu.memory_space<vmem>>, %arg5: memref<1x2x8x16xf32, #tpu.memory_space<vmem>>, %arg6: memref<1x8x32xf32, #tpu.memory_space<vmem>>, %arg7: memref<2x16x16xf32, #tpu.memory_space<vmem>>, %arg8: memref<2x1x16xf32, #tpu.memory_space<vmem>>, %arg9: memref<32x32xf32, #tpu.memory_space<vmem>>, %arg10: memref<1x32xf32, #tpu.memory_space<vmem>>, %arg11: memref<1x32xf32, #tpu.memory_space<vmem>>, %arg12: memref<1x32xf32, #tpu.memory_space<vmem>>, %arg13: memref<1x8x32xf32, #tpu.memory_space<vmem>>, %arg14: memref<2x8x16xf32, #tpu.memory_space<vmem>>, %arg15: memref<2x8x1xf32, #tpu.memory_space<vmem>>, %arg16: memref<2x8x1xf32, #tpu.memory_space<vmem>>, %arg17: memref<2x8x16xf32, #tpu.memory_space<vmem>>, %arg18: memref<8x32xf32, #tpu.memory_space<vmem>>) attributes {dimension_semantics = [#tpu.dimension_semantics<parallel>, #tpu.dimension_semantics<parallel>, #tpu.dimension_semantics<arbitrary>], iteration_bounds = array<i64: 2, 1, 1>, scalar_prefetch = 0 : i64, scratch_operands = 5 : i64, tpu.core_type = #tpu.core_type<tc>, window_params = [{transform_indices = @transform_0, window_bounds = array<i64: 1, 8, 8>}, {transform_indices = @transform_1, window_bounds = array<i64: 1, 2, 8, 16>}, {transform_indices = @transform_2, window_bounds = array<i64: 1, 2, 8, 16>}, {transform_indices = @transform_3, window_bounds = array<i64: 1, 8, 32>}, {pipeline_mode = #tpu.pipeline_mode<synchronous>, transform_indices = @transform_4, window_bounds = array<i64: 2, 16, 16>}, {pipeline_mode = #tpu.pipeline_mode<synchronous>, transform_indices = @transform_5, window_bounds = array<i64: 2, 1, 16>}, {pipeline_mode = #tpu.pipeline_mode<synchronous>, transform_indices = @transform_6, window_bounds = array<i64: 32, 32>}, {pipeline_mode = #tpu.pipeline_mode<synchronous>, transform_indices = @transform_7, window_bounds = array<i64: 1, 32>}, {pipeline_mode = #tpu.pipeline_mode<synchronous>, transform_indices = @transform_8, window_bounds = array<i64: 1, 32>}, {pipeline_mode = #tpu.pipeline_mode<synchronous>, transform_indices = @transform_9, window_bounds = array<i64: 1, 32>}, {transform_indices = @transform_10, window_bounds = array<i64: 1, 8, 32>}]} {
    %c0_i32 = arith.constant 0 : i32
    %0 = arith.cmpi eq, %arg2, %c0_i32 : i32
    %1 = arith.extui %0 : i1 to i32
    %c0_i32_0 = arith.constant 0 : i32
    %2 = arith.cmpi ne, %1, %c0_i32_0 : i32
    scf.if %2 {
      %c0_39 = arith.constant 0 : index
      %c0_40 = arith.constant 0 : index
      %c0_41 = arith.constant 0 : index
      %44 = vector.load %arg6[%c0_39, %c0_40, %c0_41] : memref<1x8x32xf32, #tpu.memory_space<vmem>>, vector<1x8x32xf32>
      %45 = vector.shape_cast %44 : vector<1x8x32xf32> to vector<8x32xf32>
      %46 = vector.extract_strided_slice %45 {offsets = [0, 0], sizes = [8, 16], strides = [1, 1]} : vector<8x32xf32> to vector<8x16xf32>
      %c0_42 = arith.constant 0 : index
      %c0_43 = arith.constant 0 : index
      %c0_44 = arith.constant 0 : index
      %47 = vector.load %arg7[%c0_42, %c0_43, %c0_44] : memref<2x16x16xf32, #tpu.memory_space<vmem>>, vector<1x16x16xf32>
      %48 = vector.shape_cast %47 : vector<1x16x16xf32> to vector<16x16xf32>
      %cst_45 = arith.constant dense<0.000000e+00> : vector<8x16xf32>
      %49 = tpu.matmul %46, %48, %cst_45 {dimension_numbers = #tpu.dot_dimension_numbers<[1], [0], [0], [1], [0, 0, 1, 1], [], []>} : vector<8x16xf32>, vector<16x16xf32>, vector<8x16xf32> -> vector<8x16xf32>
      %c0_46 = arith.constant 0 : index
      %c0_47 = arith.constant 0 : index
      %c0_48 = arith.constant 0 : index
      %50 = vector.load %arg8[%c0_46, %c0_47, %c0_48] : memref<2x1x16xf32, #tpu.memory_space<vmem>>, vector<1x1x16xf32>
      %51 = vector.shape_cast %50 : vector<1x1x16xf32> to vector<1x16xf32>
      %52 = vector.broadcast %51 : vector<1x16xf32> to vector<8x16xf32>
      %53 = arith.addf %49, %52 : vector<8x16xf32>
      %c0_49 = arith.constant 0 : index
      %c0_50 = arith.constant 0 : index
      %c0_51 = arith.constant 0 : index
      %54 = vector.load %arg14[%c0_49, %c0_50, %c0_51] : memref<2x8x16xf32, #tpu.memory_space<vmem>>, vector<1x8x16xf32>
      %55 = vector.shape_cast %54 : vector<1x8x16xf32> to vector<8x16xf32>
      %56 = vector.shape_cast %53 : vector<8x16xf32> to vector<1x8x16xf32>
      tpu.vector_store %arg14[%c0_49, %c0_50, %c0_51], %56 {strides = array<i32>} : memref<2x8x16xf32, #tpu.memory_space<vmem>>, vector<1x8x16xf32>,
      %57 = vector.extract_strided_slice %45 {offsets = [0, 16], sizes = [8, 16], strides = [1, 1]} : vector<8x32xf32> to vector<8x16xf32>
      %c1 = arith.constant 1 : index
      %c0_52 = arith.constant 0 : index
      %c0_53 = arith.constant 0 : index
      %58 = vector.load %arg7[%c1, %c0_52, %c0_53] : memref<2x16x16xf32, #tpu.memory_space<vmem>>, vector<1x16x16xf32>
      %59 = vector.shape_cast %58 : vector<1x16x16xf32> to vector<16x16xf32>
      %cst_54 = arith.constant dense<0.000000e+00> : vector<8x16xf32>
      %60 = tpu.matmul %57, %59, %cst_54 {dimension_numbers = #tpu.dot_dimension_numbers<[1], [0], [0], [1], [0, 0, 1, 1], [], []>} : vector<8x16xf32>, vector<16x16xf32>, vector<8x16xf32> -> vector<8x16xf32>
      %c1_55 = arith.constant 1 : index
      %c0_56 = arith.constant 0 : index
      %c0_57 = arith.constant 0 : index
      %61 = vector.load %arg8[%c1_55, %c0_56, %c0_57] : memref<2x1x16xf32, #tpu.memory_space<vmem>>, vector<1x1x16xf32>
      %62 = vector.shape_cast %61 : vector<1x1x16xf32> to vector<1x16xf32>
      %63 = vector.broadcast %62 : vector<1x16xf32> to vector<8x16xf32>
      %64 = arith.addf %60, %63 : vector<8x16xf32>
      %c1_58 = arith.constant 1 : index
      %c0_59 = arith.constant 0 : index
      %c0_60 = arith.constant 0 : index
      %65 = vector.load %arg14[%c1_58, %c0_59, %c0_60] : memref<2x8x16xf32, #tpu.memory_space<vmem>>, vector<1x8x16xf32>
      %66 = vector.shape_cast %65 : vector<1x8x16xf32> to vector<8x16xf32>
      %67 = vector.shape_cast %64 : vector<8x16xf32> to vector<1x8x16xf32>
      tpu.vector_store %arg14[%c1_58, %c0_59, %c0_60], %67 {strides = array<i32>} : memref<2x8x16xf32, #tpu.memory_space<vmem>>, vector<1x8x16xf32>,
      %cst_61 = arith.constant 0xFF800000 : f32
      %68 = vector.broadcast %cst_61 : f32 to vector<2x8x1xf32>
      %c0_62 = arith.constant 0 : index
      %c0_63 = arith.constant 0 : index
      %c0_64 = arith.constant 0 : index
      %69 = vector.load %arg15[%c0_62, %c0_63, %c0_64] : memref<2x8x1xf32, #tpu.memory_space<vmem>>, vector<2x8x1xf32>
      tpu.vector_store %arg15[%c0_62, %c0_63, %c0_64], %68 {strides = array<i32>} : memref<2x8x1xf32, #tpu.memory_space<vmem>>, vector<2x8x1xf32>,
      %cst_65 = arith.constant 0.000000e+00 : f32
      %70 = vector.broadcast %cst_65 : f32 to vector<2x8x1xf32>
      %c0_66 = arith.constant 0 : index
      %c0_67 = arith.constant 0 : index
      %c0_68 = arith.constant 0 : index
      %71 = vector.load %arg16[%c0_66, %c0_67, %c0_68] : memref<2x8x1xf32, #tpu.memory_space<vmem>>, vector<2x8x1xf32>
      tpu.vector_store %arg16[%c0_66, %c0_67, %c0_68], %70 {strides = array<i32>} : memref<2x8x1xf32, #tpu.memory_space<vmem>>, vector<2x8x1xf32>,
      %cst_69 = arith.constant 0.000000e+00 : f32
      %72 = vector.broadcast %cst_69 : f32 to vector<2x8x16xf32>
      %c0_70 = arith.constant 0 : index
      %c0_71 = arith.constant 0 : index
      %c0_72 = arith.constant 0 : index
      %73 = vector.load %arg17[%c0_70, %c0_71, %c0_72] : memref<2x8x16xf32, #tpu.memory_space<vmem>>, vector<2x8x16xf32>
      tpu.vector_store %arg17[%c0_70, %c0_71, %c0_72], %72 {strides = array<i32>} : memref<2x8x16xf32, #tpu.memory_space<vmem>>, vector<2x8x16xf32>,
    } else {
    }
    %c0 = arith.constant 0 : index
    %c0_1 = arith.constant 0 : index
    %c0_2 = arith.constant 0 : index
    %c0_3 = arith.constant 0 : index
    %3 = vector.load %arg4[%c0, %c0_1, %c0_2, %c0_3] : memref<1x2x8x16xf32, #tpu.memory_space<vmem>>, vector<1x2x8x16xf32>
    %4 = vector.shape_cast %3 : vector<1x2x8x16xf32> to vector<2x8x16xf32>
    %c0_4 = arith.constant 0 : index
    %c0_5 = arith.constant 0 : index
    %c0_6 = arith.constant 0 : index
    %c0_7 = arith.constant 0 : index
    %5 = vector.load %arg5[%c0_4, %c0_5, %c0_6, %c0_7] : memref<1x2x8x16xf32, #tpu.memory_space<vmem>>, vector<1x2x8x16xf32>
    %6 = vector.shape_cast %5 : vector<1x2x8x16xf32> to vector<2x8x16xf32>
    %c0_8 = arith.constant 0 : index
    %c0_9 = arith.constant 0 : index
    %c0_10 = arith.constant 0 : index
    %7 = vector.load %arg14[%c0_8, %c0_9, %c0_10] : memref<2x8x16xf32, #tpu.memory_space<vmem>>, vector<2x8x16xf32>
    "tpu.trace_start"() <{level = 10 : i32, message = "hqd,hkd->hqk"}> : () -> ()
    %cst = arith.constant dense<0.000000e+00> : vector<2x8x8xf32>
    %8 = tpu.matmul %7, %4, %cst {dimension_numbers = #tpu.dot_dimension_numbers<[2], [2], [1], [1], [0, 0, 0, 1, 1, 1], [0], [0]>} : vector<2x8x16xf32>, vector<2x8x16xf32>, vector<2x8x8xf32> -> vector<2x8x8xf32>
    "tpu.trace_stop"() : () -> ()
    %c0_11 = arith.constant 0 : index
    %c0_12 = arith.constant 0 : index
    %c0_13 = arith.constant 0 : index
    %9 = vector.load %arg3[%c0_11, %c0_12, %c0_13] : memref<1x8x8xbf16, #tpu.memory_space<vmem>>, vector<1x8x8xbf16>
    %10 = vector.shape_cast %9 : vector<1x8x8xbf16> to vector<8x8xbf16>
    %11 = arith.extf %10 : vector<8x8xbf16> to vector<8x8xf32>
    %cst_14 = arith.constant 1.000000e+00 : f32
    %12 = vector.broadcast %cst_14 : f32 to vector<8x8xf32>
    %13 = arith.subf %12, %11 : vector<8x8xf32>
    %cst_15 = arith.constant -1.000000e+04 : f32
    %14 = vector.broadcast %cst_15 : f32 to vector<8x8xf32>
    %15 = arith.mulf %13, %14 : vector<8x8xf32>
    %16 = vector.shape_cast %15 : vector<8x8xf32> to vector<1x8x8xf32>
    %17 = vector.broadcast %16 : vector<1x8x8xf32> to vector<2x8x8xf32>
    %18 = arith.addf %8, %17 : vector<2x8x8xf32>
    %c0_16 = arith.constant 0 : index
    %c0_17 = arith.constant 0 : index
    %c0_18 = arith.constant 0 : index
    %19 = vector.load %arg15[%c0_16, %c0_17, %c0_18] : memref<2x8x1xf32, #tpu.memory_space<vmem>>, vector<2x8x1xf32>
    %cst_19 = arith.constant dense<0xFF800000> : vector<2x8xf32>
    %20 = vector.multi_reduction <maximumf>, %18, %cst_19 [2] : vector<2x8x8xf32> to vector<2x8xf32>
    %21 = vector.shape_cast %20 : vector<2x8xf32> to vector<2x8x1xf32>
    %22 = arith.maximumf %19, %21 : vector<2x8x1xf32>
    %23 = arith.subf %19, %22 : vector<2x8x1xf32>
    %24 = math.exp %23 : vector<2x8x1xf32>
    %25 = vector.broadcast %22 : vector<2x8x1xf32> to vector<2x8x8xf32>
    %26 = arith.subf %18, %25 : vector<2x8x8xf32>
    %27 = math.exp %26 : vector<2x8x8xf32>
    %c0_20 = arith.constant 0 : index
    %c0_21 = arith.constant 0 : index
    %c0_22 = arith.constant 0 : index
    %28 = vector.load %arg16[%c0_20, %c0_21, %c0_22] : memref<2x8x1xf32, #tpu.memory_space<vmem>>, vector<2x8x1xf32>
    %29 = arith.mulf %24, %28 : vector<2x8x1xf32>
    %cst_23 = arith.constant dense<0.000000e+00> : vector<2x8xf32>
    %30 = vector.multi_reduction <add>, %27, %cst_23 [2] : vector<2x8x8xf32> to vector<2x8xf32>
    %31 = vector.shape_cast %30 : vector<2x8xf32> to vector<2x8x1xf32>
    %32 = arith.addf %29, %31 : vector<2x8x1xf32>
    %c0_24 = arith.constant 0 : index
    %c0_25 = arith.constant 0 : index
    %c0_26 = arith.constant 0 : index
    %33 = vector.load %arg16[%c0_24, %c0_25, %c0_26] : memref<2x8x1xf32, #tpu.memory_space<vmem>>, vector<2x8x1xf32>
    tpu.vector_store %arg16[%c0_24, %c0_25, %c0_26], %32 {strides = array<i32>} : memref<2x8x1xf32, #tpu.memory_space<vmem>>, vector<2x8x1xf32>,
    %c0_27 = arith.constant 0 : index
    %c0_28 = arith.constant 0 : index
    %c0_29 = arith.constant 0 : index
    %34 = vector.load %arg17[%c0_27, %c0_28, %c0_29] : memref<2x8x16xf32, #tpu.memory_space<vmem>>, vector<2x8x16xf32>
    %35 = vector.broadcast %24 : vector<2x8x1xf32> to vector<2x8x16xf32>
    %36 = arith.mulf %35, %34 : vector<2x8x16xf32>
    "tpu.trace_start"() <{level = 10 : i32, message = "hqk,hkd->hqd"}> : () -> ()
    %cst_30 = arith.constant dense<0.000000e+00> : vector<2x8x16xf32>
    %37 = tpu.matmul %27, %6, %cst_30 {dimension_numbers = #tpu.dot_dimension_numbers<[2], [1], [1], [2], [0, 0, 0, 1, 1, 2], [0], [0]>} : vector<2x8x8xf32>, vector<2x8x16xf32>, vector<2x8x16xf32> -> vector<2x8x16xf32>
    "tpu.trace_stop"() : () -> ()
    %38 = arith.addf %36, %37 : vector<2x8x16xf32>
    %c0_31 = arith.constant 0 : index
    %c0_32 = arith.constant 0 : index
    %c0_33 = arith.constant 0 : index
    %39 = vector.load %arg17[%c0_31, %c0_32, %c0_33] : memref<2x8x16xf32, #tpu.memory_space<vmem>>, vector<2x8x16xf32>
    tpu.vector_store %arg17[%c0_31, %c0_32, %c0_33], %38 {strides = array<i32>} : memref<2x8x16xf32, #tpu.memory_space<vmem>>, vector<2x8x16xf32>,
    %c0_34 = arith.constant 0 : index
    %c0_35 = arith.constant 0 : index
    %c0_36 = arith.constant 0 : index
    %40 = vector.load %arg15[%c0_34, %c0_35, %c0_36] : memref<2x8x1xf32, #tpu.memory_space<vmem>>, vector<2x8x1xf32>
    tpu.vector_store %arg15[%c0_34, %c0_35, %c0_36], %22 {strides = array<i32>} : memref<2x8x1xf32, #tpu.memory_space<vmem>>, vector<2x8x1xf32>,
    %c0_i32_37 = arith.constant 0 : i32
    %41 = arith.cmpi eq, %arg2, %c0_i32_37 : i32
    %42 = arith.extui %41 : i1 to i32
    %c0_i32_38 = arith.constant 0 : i32
    %43 = arith.cmpi ne, %42, %c0_i32_38 : i32
    scf.if %43 {
      %c0_39 = arith.constant 0 : index
      %c0_40 = arith.constant 0 : index
      %c0_41 = arith.constant 0 : index
      %44 = vector.load %arg16[%c0_39, %c0_40, %c0_41] : memref<2x8x1xf32, #tpu.memory_space<vmem>>, vector<2x8x1xf32>
      %45 = tpu.reciprocal %44 {approx = true} : vector<2x8x1xf32> -> vector<2x8x1xf32>
      %46 = arith.mulf %44, %45 : vector<2x8x1xf32>
      %cst_42 = arith.constant 2.000000e+00 : f32
      %47 = vector.broadcast %cst_42 : f32 to vector<2x8x1xf32>
      %48 = arith.subf %47, %46 : vector<2x8x1xf32>
      %49 = arith.mulf %45, %48 : vector<2x8x1xf32>
      %c0_43 = arith.constant 0 : index
      %c0_44 = arith.constant 0 : index
      %c0_45 = arith.constant 0 : index
      %50 = vector.load %arg17[%c0_43, %c0_44, %c0_45] : memref<2x8x16xf32, #tpu.memory_space<vmem>>, vector<1x8x16xf32>
      %51 = vector.shape_cast %50 : vector<1x8x16xf32> to vector<8x16xf32>
      %52 = vector.extract_strided_slice %49 {offsets = [0, 0, 0], sizes = [1, 8, 1], strides = [1, 1, 1]} : vector<2x8x1xf32> to vector<1x8x1xf32>
      %53 = vector.shape_cast %52 : vector<1x8x1xf32> to vector<8x1xf32>
      %54 = vector.broadcast %53 : vector<8x1xf32> to vector<8x16xf32>
      %55 = arith.mulf %51, %54 : vector<8x16xf32>
      %c0_46 = arith.constant 0 : index
      %c0_47 = arith.constant 0 : index
      %56 = vector.load %arg18[%c0_46, %c0_47] : memref<8x32xf32, #tpu.memory_space<vmem>>, vector<8x16xf32>
      tpu.vector_store %arg18[%c0_46, %c0_47], %55 {strides = array<i32>} : memref<8x32xf32, #tpu.memory_space<vmem>>, vector<8x16xf32>,
      %c1 = arith.constant 1 : index
      %c0_48 = arith.constant 0 : index
      %c0_49 = arith.constant 0 : index
      %57 = vector.load %arg17[%c1, %c0_48, %c0_49] : memref<2x8x16xf32, #tpu.memory_space<vmem>>, vector<1x8x16xf32>
      %58 = vector.shape_cast %57 : vector<1x8x16xf32> to vector<8x16xf32>
      %59 = vector.extract_strided_slice %49 {offsets = [1, 0, 0], sizes = [1, 8, 1], strides = [1, 1, 1]} : vector<2x8x1xf32> to vector<1x8x1xf32>
      %60 = vector.shape_cast %59 : vector<1x8x1xf32> to vector<8x1xf32>
      %61 = vector.broadcast %60 : vector<8x1xf32> to vector<8x16xf32>
      %62 = arith.mulf %58, %61 : vector<8x16xf32>
      %c0_50 = arith.constant 0 : index
      %c16 = arith.constant 16 : index
      %63 = vector.load %arg18[%c0_50, %c16] : memref<8x32xf32, #tpu.memory_space<vmem>>, vector<8x16xf32>
      tpu.vector_store %arg18[%c0_50, %c16], %62 {strides = array<i32>} : memref<8x32xf32, #tpu.memory_space<vmem>>, vector<8x16xf32>,
      %c0_51 = arith.constant 0 : index
      %c0_52 = arith.constant 0 : index
      %64 = vector.load %arg18[%c0_51, %c0_52] : memref<8x32xf32, #tpu.memory_space<vmem>>, vector<8x32xf32>
      %c0_53 = arith.constant 0 : index
      %c0_54 = arith.constant 0 : index
      %65 = vector.load %arg9[%c0_53, %c0_54] : memref<32x32xf32, #tpu.memory_space<vmem>>, vector<32x32xf32>
      %cst_55 = arith.constant dense<0.000000e+00> : vector<8x32xf32>
      %66 = tpu.matmul %64, %65, %cst_55 {dimension_numbers = #tpu.dot_dimension_numbers<[1], [0], [0], [1], [0, 0, 1, 1], [], []>} : vector<8x32xf32>, vector<32x32xf32>, vector<8x32xf32> -> vector<8x32xf32>
      %c0_56 = arith.constant 0 : index
      %c0_57 = arith.constant 0 : index
      %67 = vector.load %arg10[%c0_56, %c0_57] : memref<1x32xf32, #tpu.memory_space<vmem>>, vector<1x32xf32>
      %68 = vector.broadcast %67 : vector<1x32xf32> to vector<8x32xf32>
      %69 = arith.addf %66, %68 : vector<8x32xf32>
      %c0_58 = arith.constant 0 : index
      %c0_59 = arith.constant 0 : index
      %c0_60 = arith.constant 0 : index
      %70 = vector.load %arg6[%c0_58, %c0_59, %c0_60] : memref<1x8x32xf32, #tpu.memory_space<vmem>>, vector<1x8x32xf32>
      %71 = vector.shape_cast %70 : vector<1x8x32xf32> to vector<8x32xf32>
      %72 = arith.addf %71, %69 : vector<8x32xf32>
      %cst_61 = arith.constant dense<0.000000e+00> : vector<8xf32>
      %73 = vector.multi_reduction <add>, %72, %cst_61 [1] : vector<8x32xf32> to vector<8xf32>
      %74 = vector.shape_cast %73 : vector<8xf32> to vector<8x1xf32>
      %cst_62 = arith.constant 3.200000e+01 : f32
      %75 = vector.broadcast %cst_62 : f32 to vector<8x1xf32>
      %76 = arith.divf %74, %75 : vector<8x1xf32>
      %77 = vector.broadcast %76 : vector<8x1xf32> to vector<8x32xf32>
      %78 = arith.subf %72, %77 : vector<8x32xf32>
      %79 = arith.mulf %78, %78 : vector<8x32xf32>
      %cst_63 = arith.constant dense<0.000000e+00> : vector<8xf32>
      %80 = vector.multi_reduction <add>, %79, %cst_63 [1] : vector<8x32xf32> to vector<8xf32>
      %81 = vector.shape_cast %80 : vector<8xf32> to vector<8x1xf32>
      %cst_64 = arith.constant 3.200000e+01 : f32
      %82 = vector.broadcast %cst_64 : f32 to vector<8x1xf32>
      %83 = arith.divf %81, %82 : vector<8x1xf32>
      %cst_65 = arith.constant 9.99999974E-6 : f32
      %84 = vector.broadcast %cst_65 : f32 to vector<8x1xf32>
      %85 = arith.addf %83, %84 : vector<8x1xf32>
      %86 = math.rsqrt %85 : vector<8x1xf32>
      %87 = vector.broadcast %86 : vector<8x1xf32> to vector<8x32xf32>
      %88 = arith.mulf %78, %87 : vector<8x32xf32>
      %c0_66 = arith.constant 0 : index
      %c0_67 = arith.constant 0 : index
      %89 = vector.load %arg11[%c0_66, %c0_67] : memref<1x32xf32, #tpu.memory_space<vmem>>, vector<1x32xf32>
      %90 = vector.broadcast %89 : vector<1x32xf32> to vector<8x32xf32>
      %91 = arith.mulf %88, %90 : vector<8x32xf32>
      %c0_68 = arith.constant 0 : index
      %c0_69 = arith.constant 0 : index
      %92 = vector.load %arg12[%c0_68, %c0_69] : memref<1x32xf32, #tpu.memory_space<vmem>>, vector<1x32xf32>
      %93 = vector.broadcast %92 : vector<1x32xf32> to vector<8x32xf32>
      %94 = arith.addf %91, %93 : vector<8x32xf32>
      %c0_70 = arith.constant 0 : index
      %c0_71 = arith.constant 0 : index
      %c0_72 = arith.constant 0 : index
      %95 = vector.load %arg13[%c0_70, %c0_71, %c0_72] : memref<1x8x32xf32, #tpu.memory_space<vmem>>, vector<1x8x32xf32>
      %96 = vector.shape_cast %95 : vector<1x8x32xf32> to vector<8x32xf32>
      %97 = vector.shape_cast %94 : vector<8x32xf32> to vector<1x8x32xf32>
      tpu.vector_store %arg13[%c0_70, %c0_71, %c0_72], %97 {strides = array<i32>} : memref<1x8x32xf32, #tpu.memory_space<vmem>>, vector<1x8x32xf32>,
    } else {
    }
    return
  }
  func.func @transform_0(%arg0: i32, %arg1: i32, %arg2: i32) -> (i32, i32, i32) {
    %c0_i32 = arith.constant 0 : i32
    return %arg0, %arg1, %arg2 : i32, i32, i32
  }
  func.func @transform_1(%arg0: i32, %arg1: i32, %arg2: i32) -> (i32, i32, i32, i32) {
    %c0_i32 = arith.constant 0 : i32
    %c0_i32_0 = arith.constant 0 : i32
    %c0_i32_1 = arith.constant 0 : i32
    return %arg0, %c0_i32, %arg2, %c0_i32_0 : i32, i32, i32, i32
  }
  func.func @transform_2(%arg0: i32, %arg1: i32, %arg2: i32) -> (i32, i32, i32, i32) {
    %c0_i32 = arith.constant 0 : i32
    %c0_i32_0 = arith.constant 0 : i32
    %c0_i32_1 = arith.constant 0 : i32
    return %arg0, %c0_i32, %arg2, %c0_i32_0 : i32, i32, i32, i32
  }
  func.func @transform_3(%arg0: i32, %arg1: i32, %arg2: i32) -> (i32, i32, i32) {
    %c0_i32 = arith.constant 0 : i32
    %c0_i32_0 = arith.constant 0 : i32
    return %arg0, %arg1, %c0_i32 : i32, i32, i32
  }
  func.func @transform_4(%arg0: i32, %arg1: i32, %arg2: i32) -> (i32, i32, i32) {
    %c0_i32 = arith.constant 0 : i32
    %c0_i32_0 = arith.constant 0 : i32
    %c0_i32_1 = arith.constant 0 : i32
    %c0_i32_2 = arith.constant 0 : i32
    return %c0_i32, %c0_i32_0, %c0_i32_1 : i32, i32, i32
  }
  func.func @transform_5(%arg0: i32, %arg1: i32, %arg2: i32) -> (i32, i32, i32) {
    %c0_i32 = arith.constant 0 : i32
    %c0_i32_0 = arith.constant 0 : i32
    %c0_i32_1 = arith.constant 0 : i32
    %c0_i32_2 = arith.constant 0 : i32
    return %c0_i32, %c0_i32_0, %c0_i32_1 : i32, i32, i32
  }
  func.func @transform_6(%arg0: i32, %arg1: i32, %arg2: i32) -> (i32, i32) {
    %c0_i32 = arith.constant 0 : i32
    %c0_i32_0 = arith.constant 0 : i32
    %c0_i32_1 = arith.constant 0 : i32
    return %c0_i32, %c0_i32_0 : i32, i32
  }
  func.func @transform_7(%arg0: i32, %arg1: i32, %arg2: i32) -> (i32, i32) {
    %c0_i32 = arith.constant 0 : i32
    %c0_i32_0 = arith.constant 0 : i32
    %c0_i32_1 = arith.constant 0 : i32
    return %c0_i32, %c0_i32_0 : i32, i32
  }
  func.func @transform_8(%arg0: i32, %arg1: i32, %arg2: i32) -> (i32, i32) {
    %c0_i32 = arith.constant 0 : i32
    %c0_i32_0 = arith.constant 0 : i32
    %c0_i32_1 = arith.constant 0 : i32
    return %c0_i32, %c0_i32_0 : i32, i32
  }
  func.func @transform_9(%arg0: i32, %arg1: i32, %arg2: i32) -> (i32, i32) {
    %c0_i32 = arith.constant 0 : i32
    %c0_i32_0 = arith.constant 0 : i32
    %c0_i32_1 = arith.constant 0 : i32
    return %c0_i32, %c0_i32_0 : i32, i32
  }
  func.func @transform_10(%arg0: i32, %arg1: i32, %arg2: i32) -> (i32, i32, i32) {
    %c0_i32 = arith.constant 0 : i32
    %c0_i32_0 = arith.constant 0 : i32
    return %arg0, %arg1, %c0_i32 : i32, i32, i32
  }
}

module attributes {stable_mosaic.version = 11 : i64} {
  func.func @_mha_kernel(%arg0: i32, %arg1: i32, %arg2: i32, %arg3: memref<1x2x16x16xf32, #tpu.memory_space<vmem>>, %arg4: memref<1x2x16x16xf32, #tpu.memory_space<vmem>>, %arg5: memref<1x8x32xf32, #tpu.memory_space<vmem>>, %arg6: memref<2x16x16xf32, #tpu.memory_space<vmem>>, %arg7: memref<2x1x16xf32, #tpu.memory_space<vmem>>, %arg8: memref<32x32xf32, #tpu.memory_space<vmem>>, %arg9: memref<1x32xf32, #tpu.memory_space<vmem>>, %arg10: memref<1x32xf32, #tpu.memory_space<vmem>>, %arg11: memref<1x32xf32, #tpu.memory_space<vmem>>, %arg12: memref<1x8x32xf32, #tpu.memory_space<vmem>>, %arg13: memref<2x8x16xf32, #tpu.memory_space<vmem>>, %arg14: memref<2x8x1xf32, #tpu.memory_space<vmem>>, %arg15: memref<2x8x1xf32, #tpu.memory_space<vmem>>, %arg16: memref<2x8x16xf32, #tpu.memory_space<vmem>>, %arg17: memref<8x32xf32, #tpu.memory_space<vmem>>) attributes {dimension_semantics = [#tpu.dimension_semantics<parallel>, #tpu.dimension_semantics<parallel>, #tpu.dimension_semantics<arbitrary>], iteration_bounds = array<i64: 2, 1, 1>, scalar_prefetch = 0 : i64, scratch_operands = 5 : i64, tpu.core_type = #tpu.core_type<tc>, window_params = [{transform_indices = @transform_0, window_bounds = array<i64: 1, 2, 16, 16>}, {transform_indices = @transform_1, window_bounds = array<i64: 1, 2, 16, 16>}, {transform_indices = @transform_2, window_bounds = array<i64: 1, 8, 32>}, {pipeline_mode = #tpu.pipeline_mode<synchronous>, transform_indices = @transform_3, window_bounds = array<i64: 2, 16, 16>}, {pipeline_mode = #tpu.pipeline_mode<synchronous>, transform_indices = @transform_4, window_bounds = array<i64: 2, 1, 16>}, {pipeline_mode = #tpu.pipeline_mode<synchronous>, transform_indices = @transform_5, window_bounds = array<i64: 32, 32>}, {pipeline_mode = #tpu.pipeline_mode<synchronous>, transform_indices = @transform_6, window_bounds = array<i64: 1, 32>}, {pipeline_mode = #tpu.pipeline_mode<synchronous>, transform_indices = @transform_7, window_bounds = array<i64: 1, 32>}, {pipeline_mode = #tpu.pipeline_mode<synchronous>, transform_indices = @transform_8, window_bounds = array<i64: 1, 32>}, {transform_indices = @transform_9, window_bounds = array<i64: 1, 8, 32>}]} {
    %c0_i32 = arith.constant 0 : i32
    %0 = arith.cmpi eq, %arg2, %c0_i32 : i32
    %1 = arith.extui %0 : i1 to i32
    %c0_i32_0 = arith.constant 0 : i32
    %2 = arith.cmpi ne, %1, %c0_i32_0 : i32
    scf.if %2 {
      %c0_34 = arith.constant 0 : index
      %c0_35 = arith.constant 0 : index
      %c0_36 = arith.constant 0 : index
      %34 = vector.load %arg5[%c0_34, %c0_35, %c0_36] : memref<1x8x32xf32, #tpu.memory_space<vmem>>, vector<1x8x32xf32>
      %35 = vector.shape_cast %34 : vector<1x8x32xf32> to vector<8x32xf32>
      %36 = vector.extract_strided_slice %35 {offsets = [0, 0], sizes = [8, 16], strides = [1, 1]} : vector<8x32xf32> to vector<8x16xf32>
      %c0_37 = arith.constant 0 : index
      %c0_38 = arith.constant 0 : index
      %c0_39 = arith.constant 0 : index
      %37 = vector.load %arg6[%c0_37, %c0_38, %c0_39] : memref<2x16x16xf32, #tpu.memory_space<vmem>>, vector<1x16x16xf32>
      %38 = vector.shape_cast %37 : vector<1x16x16xf32> to vector<16x16xf32>
      %cst_40 = arith.constant dense<0.000000e+00> : vector<8x16xf32>
      %39 = tpu.matmul %36, %38, %cst_40 {dimension_numbers = #tpu.dot_dimension_numbers<[1], [0], [0], [1], [0, 0, 1, 1], [], []>} : vector<8x16xf32>, vector<16x16xf32>, vector<8x16xf32> -> vector<8x16xf32>
      %c0_41 = arith.constant 0 : index
      %c0_42 = arith.constant 0 : index
      %c0_43 = arith.constant 0 : index
      %40 = vector.load %arg7[%c0_41, %c0_42, %c0_43] : memref<2x1x16xf32, #tpu.memory_space<vmem>>, vector<1x1x16xf32>
      %41 = vector.shape_cast %40 : vector<1x1x16xf32> to vector<1x16xf32>
      %42 = vector.broadcast %41 : vector<1x16xf32> to vector<8x16xf32>
      %43 = arith.addf %39, %42 : vector<8x16xf32>
      %c0_44 = arith.constant 0 : index
      %c0_45 = arith.constant 0 : index
      %c0_46 = arith.constant 0 : index
      %44 = vector.load %arg13[%c0_44, %c0_45, %c0_46] : memref<2x8x16xf32, #tpu.memory_space<vmem>>, vector<1x8x16xf32>
      %45 = vector.shape_cast %44 : vector<1x8x16xf32> to vector<8x16xf32>
      %46 = vector.shape_cast %43 : vector<8x16xf32> to vector<1x8x16xf32>
      tpu.vector_store %arg13[%c0_44, %c0_45, %c0_46], %46 {strides = array<i32>} : memref<2x8x16xf32, #tpu.memory_space<vmem>>, vector<1x8x16xf32>,
      %47 = vector.extract_strided_slice %35 {offsets = [0, 16], sizes = [8, 16], strides = [1, 1]} : vector<8x32xf32> to vector<8x16xf32>
      %c1 = arith.constant 1 : index
      %c0_47 = arith.constant 0 : index
      %c0_48 = arith.constant 0 : index
      %48 = vector.load %arg6[%c1, %c0_47, %c0_48] : memref<2x16x16xf32, #tpu.memory_space<vmem>>, vector<1x16x16xf32>
      %49 = vector.shape_cast %48 : vector<1x16x16xf32> to vector<16x16xf32>
      %cst_49 = arith.constant dense<0.000000e+00> : vector<8x16xf32>
      %50 = tpu.matmul %47, %49, %cst_49 {dimension_numbers = #tpu.dot_dimension_numbers<[1], [0], [0], [1], [0, 0, 1, 1], [], []>} : vector<8x16xf32>, vector<16x16xf32>, vector<8x16xf32> -> vector<8x16xf32>
      %c1_50 = arith.constant 1 : index
      %c0_51 = arith.constant 0 : index
      %c0_52 = arith.constant 0 : index
      %51 = vector.load %arg7[%c1_50, %c0_51, %c0_52] : memref<2x1x16xf32, #tpu.memory_space<vmem>>, vector<1x1x16xf32>
      %52 = vector.shape_cast %51 : vector<1x1x16xf32> to vector<1x16xf32>
      %53 = vector.broadcast %52 : vector<1x16xf32> to vector<8x16xf32>
      %54 = arith.addf %50, %53 : vector<8x16xf32>
      %c1_53 = arith.constant 1 : index
      %c0_54 = arith.constant 0 : index
      %c0_55 = arith.constant 0 : index
      %55 = vector.load %arg13[%c1_53, %c0_54, %c0_55] : memref<2x8x16xf32, #tpu.memory_space<vmem>>, vector<1x8x16xf32>
      %56 = vector.shape_cast %55 : vector<1x8x16xf32> to vector<8x16xf32>
      %57 = vector.shape_cast %54 : vector<8x16xf32> to vector<1x8x16xf32>
      tpu.vector_store %arg13[%c1_53, %c0_54, %c0_55], %57 {strides = array<i32>} : memref<2x8x16xf32, #tpu.memory_space<vmem>>, vector<1x8x16xf32>,
      %cst_56 = arith.constant 0xFF800000 : f32
      %58 = vector.broadcast %cst_56 : f32 to vector<2x8x1xf32>
      %c0_57 = arith.constant 0 : index
      %c0_58 = arith.constant 0 : index
      %c0_59 = arith.constant 0 : index
      %59 = vector.load %arg14[%c0_57, %c0_58, %c0_59] : memref<2x8x1xf32, #tpu.memory_space<vmem>>, vector<2x8x1xf32>
      tpu.vector_store %arg14[%c0_57, %c0_58, %c0_59], %58 {strides = array<i32>} : memref<2x8x1xf32, #tpu.memory_space<vmem>>, vector<2x8x1xf32>,
      %cst_60 = arith.constant 0.000000e+00 : f32
      %60 = vector.broadcast %cst_60 : f32 to vector<2x8x1xf32>
      %c0_61 = arith.constant 0 : index
      %c0_62 = arith.constant 0 : index
      %c0_63 = arith.constant 0 : index
      %61 = vector.load %arg15[%c0_61, %c0_62, %c0_63] : memref<2x8x1xf32, #tpu.memory_space<vmem>>, vector<2x8x1xf32>
      tpu.vector_store %arg15[%c0_61, %c0_62, %c0_63], %60 {strides = array<i32>} : memref<2x8x1xf32, #tpu.memory_space<vmem>>, vector<2x8x1xf32>,
      %cst_64 = arith.constant 0.000000e+00 : f32
      %62 = vector.broadcast %cst_64 : f32 to vector<2x8x16xf32>
      %c0_65 = arith.constant 0 : index
      %c0_66 = arith.constant 0 : index
      %c0_67 = arith.constant 0 : index
      %63 = vector.load %arg16[%c0_65, %c0_66, %c0_67] : memref<2x8x16xf32, #tpu.memory_space<vmem>>, vector<2x8x16xf32>
      tpu.vector_store %arg16[%c0_65, %c0_66, %c0_67], %62 {strides = array<i32>} : memref<2x8x16xf32, #tpu.memory_space<vmem>>, vector<2x8x16xf32>,
    } else {
    }
    %c0 = arith.constant 0 : index
    %c0_1 = arith.constant 0 : index
    %c0_2 = arith.constant 0 : index
    %c0_3 = arith.constant 0 : index
    %3 = vector.load %arg3[%c0, %c0_1, %c0_2, %c0_3] : memref<1x2x16x16xf32, #tpu.memory_space<vmem>>, vector<1x2x16x16xf32>
    %4 = vector.shape_cast %3 : vector<1x2x16x16xf32> to vector<2x16x16xf32>
    %c0_4 = arith.constant 0 : index
    %c0_5 = arith.constant 0 : index
    %c0_6 = arith.constant 0 : index
    %c0_7 = arith.constant 0 : index
    %5 = vector.load %arg4[%c0_4, %c0_5, %c0_6, %c0_7] : memref<1x2x16x16xf32, #tpu.memory_space<vmem>>, vector<1x2x16x16xf32>
    %6 = vector.shape_cast %5 : vector<1x2x16x16xf32> to vector<2x16x16xf32>
    %c0_8 = arith.constant 0 : index
    %c0_9 = arith.constant 0 : index
    %c0_10 = arith.constant 0 : index
    %7 = vector.load %arg13[%c0_8, %c0_9, %c0_10] : memref<2x8x16xf32, #tpu.memory_space<vmem>>, vector<2x8x16xf32>
    "tpu.trace_start"() <{level = 10 : i32, message = "hqd,hkd->hqk"}> : () -> ()
    %cst = arith.constant dense<0.000000e+00> : vector<2x8x16xf32>
    %8 = tpu.matmul %7, %4, %cst {dimension_numbers = #tpu.dot_dimension_numbers<[2], [2], [1], [1], [0, 0, 0, 1, 1, 1], [0], [0]>} : vector<2x8x16xf32>, vector<2x16x16xf32>, vector<2x8x16xf32> -> vector<2x8x16xf32>
    "tpu.trace_stop"() : () -> ()
    %c0_11 = arith.constant 0 : index
    %c0_12 = arith.constant 0 : index
    %c0_13 = arith.constant 0 : index
    %9 = vector.load %arg14[%c0_11, %c0_12, %c0_13] : memref<2x8x1xf32, #tpu.memory_space<vmem>>, vector<2x8x1xf32>
    %cst_14 = arith.constant dense<0xFF800000> : vector<2x8xf32>
    %10 = vector.multi_reduction <maximumf>, %8, %cst_14 [2] : vector<2x8x16xf32> to vector<2x8xf32>
    %11 = vector.shape_cast %10 : vector<2x8xf32> to vector<2x8x1xf32>
    %12 = arith.maximumf %9, %11 : vector<2x8x1xf32>
    %13 = arith.subf %9, %12 : vector<2x8x1xf32>
    %14 = math.exp %13 : vector<2x8x1xf32>
    %15 = vector.broadcast %12 : vector<2x8x1xf32> to vector<2x8x16xf32>
    %16 = arith.subf %8, %15 : vector<2x8x16xf32>
    %17 = math.exp %16 : vector<2x8x16xf32>
    %c0_15 = arith.constant 0 : index
    %c0_16 = arith.constant 0 : index
    %c0_17 = arith.constant 0 : index
    %18 = vector.load %arg15[%c0_15, %c0_16, %c0_17] : memref<2x8x1xf32, #tpu.memory_space<vmem>>, vector<2x8x1xf32>
    %19 = arith.mulf %14, %18 : vector<2x8x1xf32>
    %cst_18 = arith.constant dense<0.000000e+00> : vector<2x8xf32>
    %20 = vector.multi_reduction <add>, %17, %cst_18 [2] : vector<2x8x16xf32> to vector<2x8xf32>
    %21 = vector.shape_cast %20 : vector<2x8xf32> to vector<2x8x1xf32>
    %22 = arith.addf %19, %21 : vector<2x8x1xf32>
    %c0_19 = arith.constant 0 : index
    %c0_20 = arith.constant 0 : index
    %c0_21 = arith.constant 0 : index
    %23 = vector.load %arg15[%c0_19, %c0_20, %c0_21] : memref<2x8x1xf32, #tpu.memory_space<vmem>>, vector<2x8x1xf32>
    tpu.vector_store %arg15[%c0_19, %c0_20, %c0_21], %22 {strides = array<i32>} : memref<2x8x1xf32, #tpu.memory_space<vmem>>, vector<2x8x1xf32>,
    %c0_22 = arith.constant 0 : index
    %c0_23 = arith.constant 0 : index
    %c0_24 = arith.constant 0 : index
    %24 = vector.load %arg16[%c0_22, %c0_23, %c0_24] : memref<2x8x16xf32, #tpu.memory_space<vmem>>, vector<2x8x16xf32>
    %25 = vector.broadcast %14 : vector<2x8x1xf32> to vector<2x8x16xf32>
    %26 = arith.mulf %25, %24 : vector<2x8x16xf32>
    "tpu.trace_start"() <{level = 10 : i32, message = "hqk,hkd->hqd"}> : () -> ()
    %cst_25 = arith.constant dense<0.000000e+00> : vector<2x8x16xf32>
    %27 = tpu.matmul %17, %6, %cst_25 {dimension_numbers = #tpu.dot_dimension_numbers<[2], [1], [1], [2], [0, 0, 0, 1, 1, 2], [0], [0]>} : vector<2x8x16xf32>, vector<2x16x16xf32>, vector<2x8x16xf32> -> vector<2x8x16xf32>
    "tpu.trace_stop"() : () -> ()
    %28 = arith.addf %26, %27 : vector<2x8x16xf32>
    %c0_26 = arith.constant 0 : index
    %c0_27 = arith.constant 0 : index
    %c0_28 = arith.constant 0 : index
    %29 = vector.load %arg16[%c0_26, %c0_27, %c0_28] : memref<2x8x16xf32, #tpu.memory_space<vmem>>, vector<2x8x16xf32>
    tpu.vector_store %arg16[%c0_26, %c0_27, %c0_28], %28 {strides = array<i32>} : memref<2x8x16xf32, #tpu.memory_space<vmem>>, vector<2x8x16xf32>,
    %c0_29 = arith.constant 0 : index
    %c0_30 = arith.constant 0 : index
    %c0_31 = arith.constant 0 : index
    %30 = vector.load %arg14[%c0_29, %c0_30, %c0_31] : memref<2x8x1xf32, #tpu.memory_space<vmem>>, vector<2x8x1xf32>
    tpu.vector_store %arg14[%c0_29, %c0_30, %c0_31], %12 {strides = array<i32>} : memref<2x8x1xf32, #tpu.memory_space<vmem>>, vector<2x8x1xf32>,
    %c0_i32_32 = arith.constant 0 : i32
    %31 = arith.cmpi eq, %arg2, %c0_i32_32 : i32
    %32 = arith.extui %31 : i1 to i32
    %c0_i32_33 = arith.constant 0 : i32
    %33 = arith.cmpi ne, %32, %c0_i32_33 : i32
    scf.if %33 {
      %c0_34 = arith.constant 0 : index
      %c0_35 = arith.constant 0 : index
      %c0_36 = arith.constant 0 : index
      %34 = vector.load %arg15[%c0_34, %c0_35, %c0_36] : memref<2x8x1xf32, #tpu.memory_space<vmem>>, vector<2x8x1xf32>
      %35 = tpu.reciprocal %34 {approx = true} : vector<2x8x1xf32> -> vector<2x8x1xf32>
      %36 = arith.mulf %34, %35 : vector<2x8x1xf32>
      %cst_37 = arith.constant 2.000000e+00 : f32
      %37 = vector.broadcast %cst_37 : f32 to vector<2x8x1xf32>
      %38 = arith.subf %37, %36 : vector<2x8x1xf32>
      %39 = arith.mulf %35, %38 : vector<2x8x1xf32>
      %c0_38 = arith.constant 0 : index
      %c0_39 = arith.constant 0 : index
      %c0_40 = arith.constant 0 : index
      %40 = vector.load %arg16[%c0_38, %c0_39, %c0_40] : memref<2x8x16xf32, #tpu.memory_space<vmem>>, vector<1x8x16xf32>
      %41 = vector.shape_cast %40 : vector<1x8x16xf32> to vector<8x16xf32>
      %42 = vector.extract_strided_slice %39 {offsets = [0, 0, 0], sizes = [1, 8, 1], strides = [1, 1, 1]} : vector<2x8x1xf32> to vector<1x8x1xf32>
      %43 = vector.shape_cast %42 : vector<1x8x1xf32> to vector<8x1xf32>
      %44 = vector.broadcast %43 : vector<8x1xf32> to vector<8x16xf32>
      %45 = arith.mulf %41, %44 : vector<8x16xf32>
      %c0_41 = arith.constant 0 : index
      %c0_42 = arith.constant 0 : index
      %46 = vector.load %arg17[%c0_41, %c0_42] : memref<8x32xf32, #tpu.memory_space<vmem>>, vector<8x16xf32>
      tpu.vector_store %arg17[%c0_41, %c0_42], %45 {strides = array<i32>} : memref<8x32xf32, #tpu.memory_space<vmem>>, vector<8x16xf32>,
      %c1 = arith.constant 1 : index
      %c0_43 = arith.constant 0 : index
      %c0_44 = arith.constant 0 : index
      %47 = vector.load %arg16[%c1, %c0_43, %c0_44] : memref<2x8x16xf32, #tpu.memory_space<vmem>>, vector<1x8x16xf32>
      %48 = vector.shape_cast %47 : vector<1x8x16xf32> to vector<8x16xf32>
      %49 = vector.extract_strided_slice %39 {offsets = [1, 0, 0], sizes = [1, 8, 1], strides = [1, 1, 1]} : vector<2x8x1xf32> to vector<1x8x1xf32>
      %50 = vector.shape_cast %49 : vector<1x8x1xf32> to vector<8x1xf32>
      %51 = vector.broadcast %50 : vector<8x1xf32> to vector<8x16xf32>
      %52 = arith.mulf %48, %51 : vector<8x16xf32>
      %c0_45 = arith.constant 0 : index
      %c16 = arith.constant 16 : index
      %53 = vector.load %arg17[%c0_45, %c16] : memref<8x32xf32, #tpu.memory_space<vmem>>, vector<8x16xf32>
      tpu.vector_store %arg17[%c0_45, %c16], %52 {strides = array<i32>} : memref<8x32xf32, #tpu.memory_space<vmem>>, vector<8x16xf32>,
      %c0_46 = arith.constant 0 : index
      %c0_47 = arith.constant 0 : index
      %54 = vector.load %arg17[%c0_46, %c0_47] : memref<8x32xf32, #tpu.memory_space<vmem>>, vector<8x32xf32>
      %c0_48 = arith.constant 0 : index
      %c0_49 = arith.constant 0 : index
      %55 = vector.load %arg8[%c0_48, %c0_49] : memref<32x32xf32, #tpu.memory_space<vmem>>, vector<32x32xf32>
      %cst_50 = arith.constant dense<0.000000e+00> : vector<8x32xf32>
      %56 = tpu.matmul %54, %55, %cst_50 {dimension_numbers = #tpu.dot_dimension_numbers<[1], [0], [0], [1], [0, 0, 1, 1], [], []>} : vector<8x32xf32>, vector<32x32xf32>, vector<8x32xf32> -> vector<8x32xf32>
      %c0_51 = arith.constant 0 : index
      %c0_52 = arith.constant 0 : index
      %57 = vector.load %arg9[%c0_51, %c0_52] : memref<1x32xf32, #tpu.memory_space<vmem>>, vector<1x32xf32>
      %58 = vector.broadcast %57 : vector<1x32xf32> to vector<8x32xf32>
      %59 = arith.addf %56, %58 : vector<8x32xf32>
      %c0_53 = arith.constant 0 : index
      %c0_54 = arith.constant 0 : index
      %c0_55 = arith.constant 0 : index
      %60 = vector.load %arg5[%c0_53, %c0_54, %c0_55] : memref<1x8x32xf32, #tpu.memory_space<vmem>>, vector<1x8x32xf32>
      %61 = vector.shape_cast %60 : vector<1x8x32xf32> to vector<8x32xf32>
      %62 = arith.addf %61, %59 : vector<8x32xf32>
      %cst_56 = arith.constant dense<0.000000e+00> : vector<8xf32>
      %63 = vector.multi_reduction <add>, %62, %cst_56 [1] : vector<8x32xf32> to vector<8xf32>
      %64 = vector.shape_cast %63 : vector<8xf32> to vector<8x1xf32>
      %cst_57 = arith.constant 3.200000e+01 : f32
      %65 = vector.broadcast %cst_57 : f32 to vector<8x1xf32>
      %66 = arith.divf %64, %65 : vector<8x1xf32>
      %67 = vector.broadcast %66 : vector<8x1xf32> to vector<8x32xf32>
      %68 = arith.subf %62, %67 : vector<8x32xf32>
      %69 = arith.mulf %68, %68 : vector<8x32xf32>
      %cst_58 = arith.constant dense<0.000000e+00> : vector<8xf32>
      %70 = vector.multi_reduction <add>, %69, %cst_58 [1] : vector<8x32xf32> to vector<8xf32>
      %71 = vector.shape_cast %70 : vector<8xf32> to vector<8x1xf32>
      %cst_59 = arith.constant 3.200000e+01 : f32
      %72 = vector.broadcast %cst_59 : f32 to vector<8x1xf32>
      %73 = arith.divf %71, %72 : vector<8x1xf32>
      %cst_60 = arith.constant 9.99999974E-6 : f32
      %74 = vector.broadcast %cst_60 : f32 to vector<8x1xf32>
      %75 = arith.addf %73, %74 : vector<8x1xf32>
      %76 = math.rsqrt %75 : vector<8x1xf32>
      %77 = vector.broadcast %76 : vector<8x1xf32> to vector<8x32xf32>
      %78 = arith.mulf %68, %77 : vector<8x32xf32>
      %c0_61 = arith.constant 0 : index
      %c0_62 = arith.constant 0 : index
      %79 = vector.load %arg10[%c0_61, %c0_62] : memref<1x32xf32, #tpu.memory_space<vmem>>, vector<1x32xf32>
      %80 = vector.broadcast %79 : vector<1x32xf32> to vector<8x32xf32>
      %81 = arith.mulf %78, %80 : vector<8x32xf32>
      %c0_63 = arith.constant 0 : index
      %c0_64 = arith.constant 0 : index
      %82 = vector.load %arg11[%c0_63, %c0_64] : memref<1x32xf32, #tpu.memory_space<vmem>>, vector<1x32xf32>
      %83 = vector.broadcast %82 : vector<1x32xf32> to vector<8x32xf32>
      %84 = arith.addf %81, %83 : vector<8x32xf32>
      %c0_65 = arith.constant 0 : index
      %c0_66 = arith.constant 0 : index
      %c0_67 = arith.constant 0 : index
      %85 = vector.load %arg12[%c0_65, %c0_66, %c0_67] : memref<1x8x32xf32, #tpu.memory_space<vmem>>, vector<1x8x32xf32>
      %86 = vector.shape_cast %85 : vector<1x8x32xf32> to vector<8x32xf32>
      %87 = vector.shape_cast %84 : vector<8x32xf32> to vector<1x8x32xf32>
      tpu.vector_store %arg12[%c0_65, %c0_66, %c0_67], %87 {strides = array<i32>} : memref<1x8x32xf32, #tpu.memory_space<vmem>>, vector<1x8x32xf32>,
    } else {
    }
    return
  }
  func.func @transform_0(%arg0: i32, %arg1: i32, %arg2: i32) -> (i32, i32, i32, i32) {
    %c0_i32 = arith.constant 0 : i32
    %c0_i32_0 = arith.constant 0 : i32
    %c0_i32_1 = arith.constant 0 : i32
    return %arg0, %c0_i32, %arg2, %c0_i32_0 : i32, i32, i32, i32
  }
  func.func @transform_1(%arg0: i32, %arg1: i32, %arg2: i32) -> (i32, i32, i32, i32) {
    %c0_i32 = arith.constant 0 : i32
    %c0_i32_0 = arith.constant 0 : i32
    %c0_i32_1 = arith.constant 0 : i32
    return %arg0, %c0_i32, %arg2, %c0_i32_0 : i32, i32, i32, i32
  }
  func.func @transform_2(%arg0: i32, %arg1: i32, %arg2: i32) -> (i32, i32, i32) {
    %c0_i32 = arith.constant 0 : i32
    %c0_i32_0 = arith.constant 0 : i32
    return %arg0, %arg1, %c0_i32 : i32, i32, i32
  }
  func.func @transform_3(%arg0: i32, %arg1: i32, %arg2: i32) -> (i32, i32, i32) {
    %c0_i32 = arith.constant 0 : i32
    %c0_i32_0 = arith.constant 0 : i32
    %c0_i32_1 = arith.constant 0 : i32
    %c0_i32_2 = arith.constant 0 : i32
    return %c0_i32, %c0_i32_0, %c0_i32_1 : i32, i32, i32
  }
  func.func @transform_4(%arg0: i32, %arg1: i32, %arg2: i32) -> (i32, i32, i32) {
    %c0_i32 = arith.constant 0 : i32
    %c0_i32_0 = arith.constant 0 : i32
    %c0_i32_1 = arith.constant 0 : i32
    %c0_i32_2 = arith.constant 0 : i32
    return %c0_i32, %c0_i32_0, %c0_i32_1 : i32, i32, i32
  }
  func.func @transform_5(%arg0: i32, %arg1: i32, %arg2: i32) -> (i32, i32) {
    %c0_i32 = arith.constant 0 : i32
    %c0_i32_0 = arith.constant 0 : i32
    %c0_i32_1 = arith.constant 0 : i32
    return %c0_i32, %c0_i32_0 : i32, i32
  }
  func.func @transform_6(%arg0: i32, %arg1: i32, %arg2: i32) -> (i32, i32) {
    %c0_i32 = arith.constant 0 : i32
    %c0_i32_0 = arith.constant 0 : i32
    %c0_i32_1 = arith.constant 0 : i32
    return %c0_i32, %c0_i32_0 : i32, i32
  }
  func.func @transform_7(%arg0: i32, %arg1: i32, %arg2: i32) -> (i32, i32) {
    %c0_i32 = arith.constant 0 : i32
    %c0_i32_0 = arith.constant 0 : i32
    %c0_i32_1 = arith.constant 0 : i32
    return %c0_i32, %c0_i32_0 : i32, i32
  }
  func.func @transform_8(%arg0: i32, %arg1: i32, %arg2: i32) -> (i32, i32) {
    %c0_i32 = arith.constant 0 : i32
    %c0_i32_0 = arith.constant 0 : i32
    %c0_i32_1 = arith.constant 0 : i32
    return %c0_i32, %c0_i32_0 : i32, i32
  }
  func.func @transform_9(%arg0: i32, %arg1: i32, %arg2: i32) -> (i32, i32, i32) {
    %c0_i32 = arith.constant 0 : i32
    %c0_i32_0 = arith.constant 0 : i32
    return %arg0, %arg1, %c0_i32 : i32, i32, i32
  }
}

module attributes {stable_mosaic.version = 11 : i64} {
  func.func @_mlp_ln_kernel(%arg0: i32, %arg1: memref<16x32xf32, #tpu.memory_space<vmem>>, %arg2: memref<32x32xf32, #tpu.memory_space<vmem>>, %arg3: memref<1x32xf32, #tpu.memory_space<vmem>>, %arg4: memref<32x32xf32, #tpu.memory_space<vmem>>, %arg5: memref<1x32xf32, #tpu.memory_space<vmem>>, %arg6: memref<1x32xf32, #tpu.memory_space<vmem>>, %arg7: memref<1x32xf32, #tpu.memory_space<vmem>>, %arg8: memref<16x32xf32, #tpu.memory_space<vmem>>) attributes {dimension_semantics = [#tpu.dimension_semantics<parallel>], iteration_bounds = array<i64: 1>, scalar_prefetch = 0 : i64, scratch_operands = 0 : i64, tpu.core_type = #tpu.core_type<tc>, window_params = [{transform_indices = @transform_0, window_bounds = array<i64: 16, 32>}, {pipeline_mode = #tpu.pipeline_mode<synchronous>, transform_indices = @transform_1, window_bounds = array<i64: 32, 32>}, {pipeline_mode = #tpu.pipeline_mode<synchronous>, transform_indices = @transform_2, window_bounds = array<i64: 1, 32>}, {pipeline_mode = #tpu.pipeline_mode<synchronous>, transform_indices = @transform_3, window_bounds = array<i64: 32, 32>}, {pipeline_mode = #tpu.pipeline_mode<synchronous>, transform_indices = @transform_4, window_bounds = array<i64: 1, 32>}, {pipeline_mode = #tpu.pipeline_mode<synchronous>, transform_indices = @transform_5, window_bounds = array<i64: 1, 32>}, {pipeline_mode = #tpu.pipeline_mode<synchronous>, transform_indices = @transform_6, window_bounds = array<i64: 1, 32>}, {transform_indices = @transform_7, window_bounds = array<i64: 16, 32>}]} {
    %c0 = arith.constant 0 : index
    %c0_0 = arith.constant 0 : index
    %0 = vector.load %arg1[%c0, %c0_0] : memref<16x32xf32, #tpu.memory_space<vmem>>, vector<16x32xf32>
    %c0_1 = arith.constant 0 : index
    %c0_2 = arith.constant 0 : index
    %1 = vector.load %arg2[%c0_1, %c0_2] : memref<32x32xf32, #tpu.memory_space<vmem>>, vector<32x32xf32>
    %cst = arith.constant dense<0.000000e+00> : vector<16x32xf32>
    %2 = tpu.matmul %0, %1, %cst {dimension_numbers = #tpu.dot_dimension_numbers<[1], [0], [0], [1], [0, 0, 1, 1], [], []>} : vector<16x32xf32>, vector<32x32xf32>, vector<16x32xf32> -> vector<16x32xf32>
    %c0_3 = arith.constant 0 : index
    %c0_4 = arith.constant 0 : index
    %3 = vector.load %arg3[%c0_3, %c0_4] : memref<1x32xf32, #tpu.memory_space<vmem>>, vector<1x32xf32>
    %4 = vector.broadcast %3 : vector<1x32xf32> to vector<16x32xf32>
    %5 = arith.addf %2, %4 : vector<16x32xf32>
    %cst_5 = arith.constant 0.000000e+00 : f32
    %6 = vector.broadcast %cst_5 : f32 to vector<16x32xf32>
    %7 = arith.maximumf %5, %6 : vector<16x32xf32>
    %c0_6 = arith.constant 0 : index
    %c0_7 = arith.constant 0 : index
    %8 = vector.load %arg4[%c0_6, %c0_7] : memref<32x32xf32, #tpu.memory_space<vmem>>, vector<32x32xf32>
    %cst_8 = arith.constant dense<0.000000e+00> : vector<16x32xf32>
    %9 = tpu.matmul %7, %8, %cst_8 {dimension_numbers = #tpu.dot_dimension_numbers<[1], [0], [0], [1], [0, 0, 1, 1], [], []>} : vector<16x32xf32>, vector<32x32xf32>, vector<16x32xf32> -> vector<16x32xf32>
    %c0_9 = arith.constant 0 : index
    %c0_10 = arith.constant 0 : index
    %10 = vector.load %arg5[%c0_9, %c0_10] : memref<1x32xf32, #tpu.memory_space<vmem>>, vector<1x32xf32>
    %11 = vector.broadcast %10 : vector<1x32xf32> to vector<16x32xf32>
    %12 = arith.addf %9, %11 : vector<16x32xf32>
    %13 = arith.addf %0, %12 : vector<16x32xf32>
    %cst_11 = arith.constant dense<0.000000e+00> : vector<16xf32>
    %14 = vector.multi_reduction <add>, %13, %cst_11 [1] : vector<16x32xf32> to vector<16xf32>
    %15 = vector.shape_cast %14 : vector<16xf32> to vector<16x1xf32>
    %cst_12 = arith.constant 3.200000e+01 : f32
    %16 = vector.broadcast %cst_12 : f32 to vector<16x1xf32>
    %17 = arith.divf %15, %16 : vector<16x1xf32>
    %18 = vector.broadcast %17 : vector<16x1xf32> to vector<16x32xf32>
    %19 = arith.subf %13, %18 : vector<16x32xf32>
    %20 = arith.mulf %19, %19 : vector<16x32xf32>
    %cst_13 = arith.constant dense<0.000000e+00> : vector<16xf32>
    %21 = vector.multi_reduction <add>, %20, %cst_13 [1] : vector<16x32xf32> to vector<16xf32>
    %22 = vector.shape_cast %21 : vector<16xf32> to vector<16x1xf32>
    %cst_14 = arith.constant 3.200000e+01 : f32
    %23 = vector.broadcast %cst_14 : f32 to vector<16x1xf32>
    %24 = arith.divf %22, %23 : vector<16x1xf32>
    %cst_15 = arith.constant 9.99999974E-6 : f32
    %25 = vector.broadcast %cst_15 : f32 to vector<16x1xf32>
    %26 = arith.addf %24, %25 : vector<16x1xf32>
    %27 = math.rsqrt %26 : vector<16x1xf32>
    %28 = vector.broadcast %27 : vector<16x1xf32> to vector<16x32xf32>
    %29 = arith.mulf %19, %28 : vector<16x32xf32>
    %c0_16 = arith.constant 0 : index
    %c0_17 = arith.constant 0 : index
    %30 = vector.load %arg6[%c0_16, %c0_17] : memref<1x32xf32, #tpu.memory_space<vmem>>, vector<1x32xf32>
    %31 = vector.broadcast %30 : vector<1x32xf32> to vector<16x32xf32>
    %32 = arith.mulf %29, %31 : vector<16x32xf32>
    %c0_18 = arith.constant 0 : index
    %c0_19 = arith.constant 0 : index
    %33 = vector.load %arg7[%c0_18, %c0_19] : memref<1x32xf32, #tpu.memory_space<vmem>>, vector<1x32xf32>
    %34 = vector.broadcast %33 : vector<1x32xf32> to vector<16x32xf32>
    %35 = arith.addf %32, %34 : vector<16x32xf32>
    %c0_20 = arith.constant 0 : index
    %c0_21 = arith.constant 0 : index
    %36 = vector.load %arg8[%c0_20, %c0_21] : memref<16x32xf32, #tpu.memory_space<vmem>>, vector<16x32xf32>
    tpu.vector_store %arg8[%c0_20, %c0_21], %35 {strides = array<i32>} : memref<16x32xf32, #tpu.memory_space<vmem>>, vector<16x32xf32>,
    return
  }
  func.func @transform_0(%arg0: i32) -> (i32, i32) {
    %c0_i32 = arith.constant 0 : i32
    %c0_i32_0 = arith.constant 0 : i32
    return %arg0, %c0_i32 : i32, i32
  }
  func.func @transform_1(%arg0: i32) -> (i32, i32) {
    %c0_i32 = arith.constant 0 : i32
    %c0_i32_0 = arith.constant 0 : i32
    %c0_i32_1 = arith.constant 0 : i32
    return %c0_i32, %c0_i32_0 : i32, i32
  }
  func.func @transform_2(%arg0: i32) -> (i32, i32) {
    %c0_i32 = arith.constant 0 : i32
    %c0_i32_0 = arith.constant 0 : i32
    %c0_i32_1 = arith.constant 0 : i32
    return %c0_i32, %c0_i32_0 : i32, i32
  }
  func.func @transform_3(%arg0: i32) -> (i32, i32) {
    %c0_i32 = arith.constant 0 : i32
    %c0_i32_0 = arith.constant 0 : i32
    %c0_i32_1 = arith.constant 0 : i32
    return %c0_i32, %c0_i32_0 : i32, i32
  }
  func.func @transform_4(%arg0: i32) -> (i32, i32) {
    %c0_i32 = arith.constant 0 : i32
    %c0_i32_0 = arith.constant 0 : i32
    %c0_i32_1 = arith.constant 0 : i32
    return %c0_i32, %c0_i32_0 : i32, i32
  }
  func.func @transform_5(%arg0: i32) -> (i32, i32) {
    %c0_i32 = arith.constant 0 : i32
    %c0_i32_0 = arith.constant 0 : i32
    %c0_i32_1 = arith.constant 0 : i32
    return %c0_i32, %c0_i32_0 : i32, i32
  }
  func.func @transform_6(%arg0: i32) -> (i32, i32) {
    %c0_i32 = arith.constant 0 : i32
    %c0_i32_0 = arith.constant 0 : i32
    %c0_i32_1 = arith.constant 0 : i32
    return %c0_i32, %c0_i32_0 : i32, i32
  }
  func.func @transform_7(%arg0: i32) -> (i32, i32) {
    %c0_i32 = arith.constant 0 : i32
    %c0_i32_0 = arith.constant 0 : i32
    return %arg0, %c0_i32 : i32, i32
  }
}

</mosaic_0001>

<llo_original>
// kernel: decoder_block.5
$region0: #{decoder_block.5}
  #allocation0 [shape = 'u32[]', space=smem, size = 0x4, offset = 0x4, fixed_abs, tag = 'smem constant byte address 0x4 - core index']
  #allocation1 [shape = 'u32[72,128]{1,0:T(1,128)}', space=vmem, size = 0x9000, scoped, tag = 'internal scratch']
  %s0 = inlined_call_operand.vmem [shape: f32[16,32], index: 0, kind: input, shape index: {}]
  %s1 = inlined_call_operand.vmem [shape: f32[32,32], index: 1, kind: input, shape index: {}]
  %s2 = inlined_call_operand.vmem [shape: f32[1,32], index: 2, kind: input, shape index: {}]
  %s3 = inlined_call_operand.vmem [shape: f32[32,32], index: 3, kind: input, shape index: {}]
  %s4 = inlined_call_operand.vmem [shape: f32[1,32], index: 4, kind: input, shape index: {}]
  %s5 = inlined_call_operand.vmem [shape: f32[1,32], index: 5, kind: input, shape index: {}]
  %s6 = inlined_call_operand.vmem [shape: f32[1,32], index: 6, kind: input, shape index: {}]
  %s7 = inlined_call_operand.hbm [shape: f32[16,32], index: 7, kind: output, shape index: {}]
  %s8 = sld [smem:[#allocation0]]
  $region38: #{decoder_block.5} parent=0
    _
  %s10 = ssub.s32 1, %s8
  %s11 = scalar_select 0, %s10, %s8
  $region1: #{decoder_block.5} parent=0
    #allocation2 [shape = 'u8[8192]{0}', space=vmem, size = 0x2000, scoped, tag = 'output window, operand 0, single buffered']
    #allocation3 [shape = 's32[1]{0}', space=sflag, size = 0x4, scoped, tag = 'scoped memory for decoder_block.5']
    %12 = vsyncpa [#allocation3], 0
    // Predicated region
    $region2: #{decoder_block.5} parent=1 // pred_check
      _
    $region3: #{decoder_block.5} parent=1 // pred_check_branch
      %14 = sbr.rel (0) target = $region5
    $region4: #{decoder_block.5} parent=1 // pred_region
      _
    $region5: #{decoder_block.5} parent=1 // pred_fallthru
      _
    // Predicated region
    $region6: #{decoder_block.5} parent=1 // pred_check
      _
    $region7: #{decoder_block.5} parent=1 // pred_check_branch
      %16 = sbr.rel (0) target = $region9
    $region8: #{decoder_block.5} parent=1 // pred_region
      _
    $region9: #{decoder_block.5} parent=1 // pred_fallthru
      _
    // Predicated region
    $region10: #{decoder_block.5} parent=1 // pred_check
      _
    $region11: #{decoder_block.5} parent=1 // pred_check_branch
      %18 = sbr.rel (0) target = $region13
    $region12: #{decoder_block.5} parent=1 // pred_region
      _
    $region13: #{decoder_block.5} parent=1 // pred_fallthru
      _
    // Predicated region
    $region14: #{decoder_block.5} parent=1 // pred_check
      _
    $region15: #{decoder_block.5} parent=1 // pred_check_branch
      %20 = sbr.rel (0) target = $region17
    $region16: #{decoder_block.5} parent=1 // pred_region
      _
    $region17: #{decoder_block.5} parent=1 // pred_fallthru
      _
    // Predicated region
    $region18: #{decoder_block.5} parent=1 // pred_check
      _
    $region19: #{decoder_block.5} parent=1 // pred_check_branch
      %22 = sbr.rel (0) target = $region21
    $region20: #{decoder_block.5} parent=1 // pred_region
      _
    $region21: #{decoder_block.5} parent=1 // pred_fallthru
      _
    // Predicated region
    $region22: #{decoder_block.5} parent=1 // pred_check
      _
    $region23: #{decoder_block.5} parent=1 // pred_check_branch
      %24 = sbr.rel (0) target = $region25
    $region24: #{decoder_block.5} parent=1 // pred_region
      _
    $region25: #{decoder_block.5} parent=1 // pred_fallthru
      _
    // Predicated region
    $region26: #{decoder_block.5} parent=1 // pred_check
      _
    $region27: #{decoder_block.5} parent=1 // pred_check_branch
      %26 = sbr.rel (0) target = $region29
    $region28: #{decoder_block.5} parent=1 // pred_region
      _
    $region29: #{decoder_block.5} parent=1 // pred_fallthru
      _
    %v27 = vld [vmem:[%s0] sm:$0xff]
    %v28 = vld [vmem:[%s0 + $0x8] sm:$0xff]
    %v29 = vld [vmem:[%s1] sm:$0xff]
    %v30 = vld [vmem:[%s1 + $0x8] sm:$0xff]
    %v31 = vld [vmem:[%s1 + $0x10] sm:$0xff]
    %v32 = vld [vmem:[%s1 + $0x18] sm:$0xff]
    %v33 = vld [vmem:[%s2] sm:$0x1]
    %v35 = vperm.slane %v33, 0
    %vm37 = vcmask 261120
    %v39 = vsel %vm37, %v27, 0
    %v42 = vsel %vm37, %v28, 0
    %44 = vmatpush.msra.mxu0 0.0
    %45 = vmatpush.msra.mxu0 0.0
    %46 = vmatpush.msra.mxu0 0.0
    %47 = vmatpush.msra.mxu0 0.0
    %48 = vmatpush.msra.mxu0 0.0
    %49 = vmatpush.msra.mxu0 0.0
    %50 = vmatpush.msra.mxu0 0.0
    %51 = vmatpush.msra.mxu0 0.0
    %52 = vmatpush.msra.mxu0 0.0
    %53 = vmatpush.msra.mxu0 0.0
    %54 = vmatpush.msra.mxu0 0.0
    %55 = vmatpush.msra.mxu0 0.0
    %56 = vmatpush.msra.mxu0 %v32
    %57 = vmatpush.msra.mxu0 %v31
    %58 = vmatpush.msra.mxu0 %v30
    %59 = vmatpush.msra.mxu0 %v29
    %60 = vmatmul.f32.gmra.mxu0 %v39
    %v61 = vpop.f32.mrf.mxu0
    %v62 = vadd.f32 %v35, %v61
    %63 = vmatmul.f32.gmra.mxu0 %v42
    %v64 = vpop.f32.mrf.mxu0
    %v65 = vadd.f32 %v35, %v64
    %66 = vdwg.mxu0
    %v67 = vmax.f32 %v62, 0.0
    %v68 = vmax.f32 %v65, 0.0
    %v69 = vld [vmem:[%s3] sm:$0xff]
    %v70 = vld [vmem:[%s3 + $0x8] sm:$0xff]
    %v71 = vld [vmem:[%s3 + $0x10] sm:$0xff]
    %v72 = vld [vmem:[%s3 + $0x18] sm:$0xff]
    %v73 = vld [vmem:[%s4] sm:$0x1]
    %v75 = vperm.slane %v73, 0
    %v78 = vsel %vm37, %v67, 0
    %v81 = vsel %vm37, %v68, 0
    %83 = vmatpush.msra.mxu0 0.0
    %84 = vmatpush.msra.mxu0 0.0
    %85 = vmatpush.msra.mxu0 0.0
    %86 = vmatpush.msra.mxu0 0.0
    %87 = vmatpush.msra.mxu0 0.0
    %88 = vmatpush.msra.mxu0 0.0
    %89 = vmatpush.msra.mxu0 0.0
    %90 = vmatpush.msra.mxu0 0.0
    %91 = vmatpush.msra.mxu0 0.0
    %92 = vmatpush.msra.mxu0 0.0
    %93 = vmatpush.msra.mxu0 0.0
    %94 = vmatpush.msra.mxu0 0.0
    %95 = vmatpush.msra.mxu0 %v72
    %96 = vmatpush.msra.mxu0 %v71
    %97 = vmatpush.msra.mxu0 %v70
    %98 = vmatpush.msra.mxu0 %v69
    %99 = vmatmul.f32.gmra.mxu0 %v78
    %v100 = vpop.f32.mrf.mxu0
    %v101 = vadd.f32 %v75, %v100
    %102 = vmatmul.f32.gmra.mxu0 %v81
    %v103 = vpop.f32.mrf.mxu0
    %v104 = vadd.f32 %v75, %v103
    %105 = vdwg.mxu0
    %v106 = vadd.f32 %v27, %v101
    %v107 = vadd.f32 %v28, %v104
    %v108 = vsel %vm37, %v106, 0.0
    %109 = vadd.xlane.f32.xlu0 %v108
    %v110 = vpop.xlane.xlu0 %109
    %v111 = vsel %vm37, %v107, 0.0
    %112 = vadd.xlane.f32.xlu0 %v111
    %v113 = vpop.xlane.xlu0 %112
    %v114 = vrcp.pop 32.0
    %v115 = vmul.f32 32.0, %v114
    %v116 = vsub.f32 1.0, %v115
    %v117 = vmul.f32 %v114, %v116
    %v118 = vadd.f32 %v114, %v117
    %vm119 = vweird.f32 %v114
    %v120 = vsel %vm119, %v114, %v118
    %v121 = vmul.f32 %v110, %v120
    %v122 = vmul.f32 %v113, %v120
    %v123 = vsub.f32 %v106, %v121
    %v124 = vsub.f32 %v107, %v122
    %v125 = vmul.f32 %v123, %v123
    %v126 = vmul.f32 %v124, %v124
    %v127 = vsel %vm37, %v125, 0.0
    %128 = vadd.xlane.f32.xlu0 %v127
    %v129 = vpop.xlane.xlu0 %128
    %v130 = vsel %vm37, %v126, 0.0
    %131 = vadd.xlane.f32.xlu0 %v130
    %v132 = vpop.xlane.xlu0 %131
    %v133 = vmul.f32 %v129, %v120
    %v134 = vmul.f32 %v132, %v120
    %v135 = vadd.f32 %v133, 1e-05
    %v136 = vadd.f32 %v134, 1e-05
    %v137 = vrsqrt.pop %v135
    %v138 = vmul.f32 %v137, %v135
    %v139 = vmul.f32 %v138, %v137
    %v140 = vmul.f32 0.5, %v139
    %v141 = vsub.f32 1.5, %v140
    %v142 = vmul.f32 %v137, %v141
    %vm143 = vweird.f32 %v135
    %vm144 = vweird.f32 %v137
    %vm145 = vmor %vm143, %vm144
    %v146 = vsel %vm145, %v137, %v142
    %v147 = vrsqrt.pop %v136
    %v148 = vmul.f32 %v147, %v136
    %v149 = vmul.f32 %v148, %v147
    %v150 = vmul.f32 0.5, %v149
    %v151 = vsub.f32 1.5, %v150
    %v152 = vmul.f32 %v147, %v151
    %vm153 = vweird.f32 %v136
    %vm154 = vweird.f32 %v147
    %vm155 = vmor %vm153, %vm154
    %v156 = vsel %vm155, %v147, %v152
    %v157 = vmul.f32 %v123, %v146
    %v158 = vmul.f32 %v124, %v156
    %v159 = vld [vmem:[%s5] sm:$0x1]
    %v161 = vperm.slane %v159, 0
    %v163 = vmul.f32 %v157, %v161
    %v164 = vmul.f32 %v158, %v161
    %v165 = vld [vmem:[%s6] sm:$0x1]
    %v167 = vperm.slane %v165, 0
    %v169 = vadd.f32 %v163, %v167
    %v170 = vadd.f32 %v164, %v167
    %171 = vst.msk [vmem:[#allocation2] sm:$0xff] %vm37, %v169
    %172 = vst.msk [vmem:[#allocation2 + $0x8] sm:$0xff] %vm37, %v170
    // Predicated region
    $region30: #{decoder_block.5} parent=1 // pred_check
      _
    $region31: #{decoder_block.5} parent=1 // pred_check_branch
      %174 = sbr.rel (0) target = $region33
    $region32: #{decoder_block.5} parent=1 // pred_region
      %176 = vsyncadd [#allocation3], 0
      %s177 = sshll.u32 [#allocation2], 4
      %s178 = int_to_ptr.vmem [resolvable:$true] %s177
      %s179 = sshll.u32 %s7, 4
      %s180 = int_to_ptr.hbm [resolvable:$true] %s179
      %185 = dma.vmem_to_hbm [thread:$0]  %s178, 256, %s180, [#allocation3], 128, 128, 8
    $region33: #{decoder_block.5} parent=1 // pred_fallthru
      _
    // Predicated region
    $region34: #{decoder_block.5} parent=1 // pred_check
      _
    $region35: #{decoder_block.5} parent=1 // pred_check_branch
      %187 = sbr.rel (0) target = $region37
    $region36: #{decoder_block.5} parent=1 // pred_region
      %189 = dma.done [#allocation3], 256
    $region37: #{decoder_block.5} parent=1 // pred_fallthru
      _
    %190 = vsyncpa [#allocation3], 1

// kernel: decoder_block.3
$region0: #{decoder_block.3}
  #allocation0 [shape = 'u32[]', space=smem, size = 0x4, offset = 0x4, fixed_abs, tag = 'smem constant byte address 0x4 - core index']
  #allocation1 [shape = 'u32[72,128]{1,0:T(1,128)}', space=vmem, size = 0x9000, scoped, tag = 'internal scratch']
  #allocation2 [shape = 'f32[2,8,16]{2,1,0:T(8,128)}', space=vmem, size = 0x2000, scoped, tag = 'scratch operand']
  #allocation3 [shape = 'f32[2,8,1]{2,1,0:T(8,128)}', space=vmem, size = 0x2000, scoped, tag = 'scratch operand']
  #allocation4 [shape = 'f32[2,8,1]{2,1,0:T(8,128)}', space=vmem, size = 0x2000, scoped, tag = 'scratch operand']
  #allocation5 [shape = 'f32[2,8,16]{2,1,0:T(8,128)}', space=vmem, size = 0x2000, scoped, tag = 'scratch operand']
  #allocation6 [shape = 'f32[8,32]{1,0:T(8,128)}', space=vmem, size = 0x1000, scoped, tag = 'scratch operand']
  %s0 = inlined_call_operand.vmem [shape: bf16[2,8,8], index: 0, kind: input, shape index: {}]
  %s1 = inlined_call_operand.vmem [shape: f32[2,2,8,16], index: 1, kind: input, shape index: {}]
  %s2 = inlined_call_operand.vmem [shape: f32[2,2,8,16], index: 2, kind: input, shape index: {}]
  %s3 = inlined_call_operand.vmem [shape: f32[2,8,32], index: 3, kind: input, shape index: {}]
  %s4 = inlined_call_operand.vmem [shape: f32[2,16,16], index: 4, kind: input, shape index: {}]
  %s5 = inlined_call_operand.vmem [shape: f32[2,1,16], index: 5, kind: input, shape index: {}]
  %s6 = inlined_call_operand.vmem [shape: f32[32,32], index: 6, kind: input, shape index: {}]
  %s7 = inlined_call_operand.vmem [shape: f32[1,32], index: 7, kind: input, shape index: {}]
  %s8 = inlined_call_operand.vmem [shape: f32[1,32], index: 8, kind: input, shape index: {}]
  %s9 = inlined_call_operand.vmem [shape: f32[1,32], index: 9, kind: input, shape index: {}]
  %s10 = inlined_call_operand.vmem [shape: f32[2,8,32], index: 10, kind: output, shape index: {}]
  %s11 = sld [smem:[#allocation0]]
  $region81: #{decoder_block.3} parent=0
    _
  %s13 = ssub.s32 1, %s11
  %s14 = scalar_select 0, %s13, %s11
  loop: start=0, step=1, limit=4
  $region2: #{decoder_block.3} parent=0 // loop_pre_header
    _
  $region3: #{decoder_block.3} parent=0 // loop_header
    %s16 = sphi 0, %s20
    %p17 = scmp.ge.s32.totalorder %s16, 4
    %s23 = sphi 0, %s42
    %s24 = sphi 0, %s38
    %s25 = sphi 0, %s34
    %s26 = sphi 0, %s23
    %s27 = sphi 0, %s24
    %s28 = sphi 0, %s25
    %s29 = sphi 0, %s26
    %s30 = sphi 0, %s27
    %s31 = sphi 0, %s28
    %s49 = sphi 0, %s51
    %s52 = sphi 0, %s49
    %s53 = sphi 0, %s52
    %s69 = sphi 0, %s53
    %s77 = sphi 0, %s79
    %s80 = sphi 0, %s77
    %s81 = sphi 0, %s80
    %s97 = sphi 0, %s81
    %s105 = sphi 0, %s107
    %s108 = sphi 0, %s105
    %s109 = sphi 0, %s108
    %s125 = sphi 0, %s109
    %s133 = sphi 0, %s135
    %s136 = sphi 0, %s133
    %s137 = sphi 0, %s136
    %s153 = sphi 0, %s137
    %s157 = sphi 0, %s157
    %s159 = sphi 0, %s157
    %s160 = sphi 0, %s159
    %s174 = sphi 0, %s160
    %s178 = sphi 0, %s178
    %s180 = sphi 0, %s178
    %s181 = sphi 0, %s180
    %s195 = sphi 0, %s181
    %s199 = sphi 0, %s199
    %s201 = sphi 0, %s199
    %s202 = sphi 0, %s201
    %s216 = sphi 0, %s202
    %s220 = sphi 0, %s220
    %s222 = sphi 0, %s220
    %s223 = sphi 0, %s222
    %s237 = sphi 0, %s223
    %s241 = sphi 0, %s241
    %s243 = sphi 0, %s241
    %s244 = sphi 0, %s243
    %s258 = sphi 0, %s244
    %s262 = sphi 0, %s262
    %s264 = sphi 0, %s262
    %s265 = sphi 0, %s264
    %s279 = sphi 0, %s265
    %s287 = sphi 0, %s289
    %s290 = sphi 0, %s287
    %s291 = sphi 0, %s290
    %s307 = sphi 0, %s291
  $region4: #{decoder_block.3} parent=0 // loop_header_branch
    %19 = sbr.rel (%p17) target = $region8
  $region5: #{decoder_block.3} parent=0 // loop_body
    %s21 = ssub.s32 %s16, 1
    %s22 = ssub.s32 %s16, 2
    %s32 = sadd.s32 1, %s25
    %p33 = scmp.ge.s32.totalorder %s32, 1
    %s34 = scalar_select %p33, 0, %s32
    %s35 = sadd.s32 1, %s24
    %s36 = scalar_select %p33, %s35, %s24
    %p37 = scmp.ge.s32.totalorder %s36, 1
    %s38 = scalar_select %p37, 0, %s36
    %s39 = sadd.s32 1, %s23
    %s40 = scalar_select %p37, %s39, %s23
    %p41 = scmp.ge.s32.totalorder %s40, 2
    %s42 = scalar_select %p41, 0, %s40
    %s43 = ssub.s32 %s23, %s42
    %s44 = ssub.s32 %s24, %s38
    %s45 = sor.u32 %s43, %s44
    %s46 = ssub.s32 %s25, %s34
    %s47 = sor.u32 %s45, %s46
    %p48 = scmp.eq.s32.totalorder %s47, 0
    %s50 = sadd.s32 %s49, 1
    %s51 = scalar_select %p48, %s49, %s50
    %p54 = pneg %p48
    %p55 = scmp.eq.s32.totalorder %s16, 1
    %p56 = por %p54, %p55
    %p57 = scmp.ne.s32.totalorder %s49, %s52
    %p58 = scmp.eq.s32.totalorder %s16, 0
    %p59 = por %p57, %p58
    %p60 = scmp.ne.s32.totalorder %s49, %s52
    %p61 = scmp.eq.s32.totalorder %s21, 1
    %p62 = por %p60, %p61
    %p63 = scmp.ne.s32.totalorder %s52, %s53
    %p64 = scmp.eq.s32.totalorder %s21, 0
    %p65 = por %p63, %p64
    %p66 = scmp.ne.s32.totalorder %s52, %s53
    %p67 = scmp.eq.s32.totalorder %s22, 1
    %p68 = por %p66, %p67
    %p70 = scmp.ne.s32.totalorder %s53, %s69
    %p71 = scmp.eq.s32.totalorder %s22, 0
    %p72 = por %p70, %p71
    %s73 = ssub.s32 %s23, %s42
    %s74 = ssub.s32 %s25, %s34
    %s75 = sor.u32 %s73, %s74
    %p76 = scmp.eq.s32.totalorder %s75, 0
    %s78 = sadd.s32 %s77, 1
    %s79 = scalar_select %p76, %s77, %s78
    %p82 = pneg %p76
    %p83 = scmp.eq.s32.totalorder %s16, 1
    %p84 = por %p82, %p83
    %p85 = scmp.ne.s32.totalorder %s77, %s80
    %p86 = scmp.eq.s32.totalorder %s16, 0
    %p87 = por %p85, %p86
    %p88 = scmp.ne.s32.totalorder %s77, %s80
    %p89 = scmp.eq.s32.totalorder %s21, 1
    %p90 = por %p88, %p89
    %p91 = scmp.ne.s32.totalorder %s80, %s81
    %p92 = scmp.eq.s32.totalorder %s21, 0
    %p93 = por %p91, %p92
    %p94 = scmp.ne.s32.totalorder %s80, %s81
    %p95 = scmp.eq.s32.totalorder %s22, 1
    %p96 = por %p94, %p95
    %p98 = scmp.ne.s32.totalorder %s81, %s97
    %p99 = scmp.eq.s32.totalorder %s22, 0
    %p100 = por %p98, %p99
    %s101 = ssub.s32 %s23, %s42
    %s102 = ssub.s32 %s25, %s34
    %s103 = sor.u32 %s101, %s102
    %p104 = scmp.eq.s32.totalorder %s103, 0
    %s106 = sadd.s32 %s105, 1
    %s107 = scalar_select %p104, %s105, %s106
    %p110 = pneg %p104
    %p111 = scmp.eq.s32.totalorder %s16, 1
    %p112 = por %p110, %p111
    %p113 = scmp.ne.s32.totalorder %s105, %s108
    %p114 = scmp.eq.s32.totalorder %s16, 0
    %p115 = por %p113, %p114
    %p116 = scmp.ne.s32.totalorder %s105, %s108
    %p117 = scmp.eq.s32.totalorder %s21, 1
    %p118 = por %p116, %p117
    %p119 = scmp.ne.s32.totalorder %s108, %s109
    %p120 = scmp.eq.s32.totalorder %s21, 0
    %p121 = por %p119, %p120
    %p122 = scmp.ne.s32.totalorder %s108, %s109
    %p123 = scmp.eq.s32.totalorder %s22, 1
    %p124 = por %p122, %p123
    %p126 = scmp.ne.s32.totalorder %s109, %s125
    %p127 = scmp.eq.s32.totalorder %s22, 0
    %p128 = por %p126, %p127
    %s129 = ssub.s32 %s23, %s42
    %s130 = ssub.s32 %s24, %s38
    %s131 = sor.u32 %s129, %s130
    %p132 = scmp.eq.s32.totalorder %s131, 0
    %s134 = sadd.s32 %s133, 1
    %s135 = scalar_select %p132, %s133, %s134
    %p138 = pneg %p132
    %p139 = scmp.eq.s32.totalorder %s16, 1
    %p140 = por %p138, %p139
    %p141 = scmp.ne.s32.totalorder %s133, %s136
    %p142 = scmp.eq.s32.totalorder %s16, 0
    %p143 = por %p141, %p142
    %p144 = scmp.ne.s32.totalorder %s133, %s136
    %p145 = scmp.eq.s32.totalorder %s21, 1
    %p146 = por %p144, %p145
    %p147 = scmp.ne.s32.totalorder %s136, %s137
    %p148 = scmp.eq.s32.totalorder %s21, 0
    %p149 = por %p147, %p148
    %p150 = scmp.ne.s32.totalorder %s136, %s137
    %p151 = scmp.eq.s32.totalorder %s22, 1
    %p152 = por %p150, %p151
    %p154 = scmp.ne.s32.totalorder %s137, %s153
    %p155 = scmp.eq.s32.totalorder %s22, 0
    %p156 = por %p154, %p155
    %s158 = sadd.s32 %s157, 1
    %p161 = scmp.eq.s32.totalorder %s16, 1
    %p162 = scmp.ne.s32.totalorder %s157, %s159
    %p163 = scmp.eq.s32.totalorder %s16, 0
    %p164 = por %p162, %p163
    %p165 = scmp.ne.s32.totalorder %s157, %s159
    %p166 = scmp.eq.s32.totalorder %s21, 1
    %p167 = por %p165, %p166
    %p168 = scmp.ne.s32.totalorder %s159, %s160
    %p169 = scmp.eq.s32.totalorder %s21, 0
    %p170 = por %p168, %p169
    %p171 = scmp.ne.s32.totalorder %s159, %s160
    %p172 = scmp.eq.s32.totalorder %s22, 1
    %p173 = por %p171, %p172
    %p175 = scmp.ne.s32.totalorder %s160, %s174
    %p176 = scmp.eq.s32.totalorder %s22, 0
    %p177 = por %p175, %p176
    %s179 = sadd.s32 %s178, 1
    %p182 = scmp.eq.s32.totalorder %s16, 1
    %p183 = scmp.ne.s32.totalorder %s178, %s180
    %p184 = scmp.eq.s32.totalorder %s16, 0
    %p185 = por %p183, %p184
    %p186 = scmp.ne.s32.totalorder %s178, %s180
    %p187 = scmp.eq.s32.totalorder %s21, 1
    %p188 = por %p186, %p187
    %p189 = scmp.ne.s32.totalorder %s180, %s181
    %p190 = scmp.eq.s32.totalorder %s21, 0
    %p191 = por %p189, %p190
    %p192 = scmp.ne.s32.totalorder %s180, %s181
    %p193 = scmp.eq.s32.totalorder %s22, 1
    %p194 = por %p192, %p193
    %p196 = scmp.ne.s32.totalorder %s181, %s195
    %p197 = scmp.eq.s32.totalorder %s22, 0
    %p198 = por %p196, %p197
    %s200 = sadd.s32 %s199, 1
    %p203 = scmp.eq.s32.totalorder %s16, 1
    %p204 = scmp.ne.s32.totalorder %s199, %s201
    %p205 = scmp.eq.s32.totalorder %s16, 0
    %p206 = por %p204, %p205
    %p207 = scmp.ne.s32.totalorder %s199, %s201
    %p208 = scmp.eq.s32.totalorder %s21, 1
    %p209 = por %p207, %p208
    %p210 = scmp.ne.s32.totalorder %s201, %s202
    %p211 = scmp.eq.s32.totalorder %s21, 0
    %p212 = por %p210, %p211
    %p213 = scmp.ne.s32.totalorder %s201, %s202
    %p214 = scmp.eq.s32.totalorder %s22, 1
    %p215 = por %p213, %p214
    %p217 = scmp.ne.s32.totalorder %s202, %s216
    %p218 = scmp.eq.s32.totalorder %s22, 0
    %p219 = por %p217, %p218
    %s221 = sadd.s32 %s220, 1
    %p224 = scmp.eq.s32.totalorder %s16, 1
    %p225 = scmp.ne.s32.totalorder %s220, %s222
    %p226 = scmp.eq.s32.totalorder %s16, 0
    %p227 = por %p225, %p226
    %p228 = scmp.ne.s32.totalorder %s220, %s222
    %p229 = scmp.eq.s32.totalorder %s21, 1
    %p230 = por %p228, %p229
    %p231 = scmp.ne.s32.totalorder %s222, %s223
    %p232 = scmp.eq.s32.totalorder %s21, 0
    %p233 = por %p231, %p232
    %p234 = scmp.ne.s32.totalorder %s222, %s223
    %p235 = scmp.eq.s32.totalorder %s22, 1
    %p236 = por %p234, %p235
    %p238 = scmp.ne.s32.totalorder %s223, %s237
    %p239 = scmp.eq.s32.totalorder %s22, 0
    %p240 = por %p238, %p239
    %s242 = sadd.s32 %s241, 1
    %p245 = scmp.eq.s32.totalorder %s16, 1
    %p246 = scmp.ne.s32.totalorder %s241, %s243
    %p247 = scmp.eq.s32.totalorder %s16, 0
    %p248 = por %p246, %p247
    %p249 = scmp.ne.s32.totalorder %s241, %s243
    %p250 = scmp.eq.s32.totalorder %s21, 1
    %p251 = por %p249, %p250
    %p252 = scmp.ne.s32.totalorder %s243, %s244
    %p253 = scmp.eq.s32.totalorder %s21, 0
    %p254 = por %p252, %p253
    %p255 = scmp.ne.s32.totalorder %s243, %s244
    %p256 = scmp.eq.s32.totalorder %s22, 1
    %p257 = por %p255, %p256
    %p259 = scmp.ne.s32.totalorder %s244, %s258
    %p260 = scmp.eq.s32.totalorder %s22, 0
    %p261 = por %p259, %p260
    %s263 = sadd.s32 %s262, 1
    %p266 = scmp.eq.s32.totalorder %s16, 1
    %p267 = scmp.ne.s32.totalorder %s262, %s264
    %p268 = scmp.eq.s32.totalorder %s16, 0
    %p269 = por %p267, %p268
    %p270 = scmp.ne.s32.totalorder %s262, %s264
    %p271 = scmp.eq.s32.totalorder %s21, 1
    %p272 = por %p270, %p271
    %p273 = scmp.ne.s32.totalorder %s264, %s265
    %p274 = scmp.eq.s32.totalorder %s21, 0
    %p275 = por %p273, %p274
    %p276 = scmp.ne.s32.totalorder %s264, %s265
    %p277 = scmp.eq.s32.totalorder %s22, 1
    %p278 = por %p276, %p277
    %p280 = scmp.ne.s32.totalorder %s265, %s279
    %p281 = scmp.eq.s32.totalorder %s22, 0
    %p282 = por %p280, %p281
    %s283 = ssub.s32 %s23, %s42
    %s284 = ssub.s32 %s24, %s38
    %s285 = sor.u32 %s283, %s284
    %p286 = scmp.eq.s32.totalorder %s285, 0
    %s288 = sadd.s32 %s287, 1
    %s289 = scalar_select %p286, %s287, %s288
    %p292 = pneg %p286
    %p293 = scmp.eq.s32.totalorder %s16, 1
    %p294 = por %p292, %p293
    %p295 = scmp.ne.s32.totalorder %s287, %s290
    %p296 = scmp.eq.s32.totalorder %s16, 0
    %p297 = por %p295, %p296
    %p298 = scmp.ne.s32.totalorder %s287, %s290
    %p299 = scmp.eq.s32.totalorder %s21, 1
    %p300 = por %p298, %p299
    %p301 = scmp.ne.s32.totalorder %s290, %s291
    %p302 = scmp.eq.s32.totalorder %s21, 0
    %p303 = por %p301, %p302
    %p304 = scmp.ne.s32.totalorder %s290, %s291
    %p305 = scmp.eq.s32.totalorder %s22, 1
    %p306 = por %p304, %p305
    %p308 = scmp.ne.s32.totalorder %s291, %s307
    %p309 = scmp.eq.s32.totalorder %s22, 0
    %p310 = por %p308, %p309
    %p311 = scmp.le.s32.totalorder 1, %s16
    %p312 = scmp.lt.s32.totalorder %s16, 3
    %p313 = pnand %p311, %p312
    %p314 = pneg %p313
    // Predicated region
    $region9: #{decoder_block.3} parent=5 // pred_check
      _
    $region10: #{decoder_block.3} parent=5 // pred_check_branch
      %316 = sbr.rel (%p313) target = $region12
    $region11: #{decoder_block.3} parent=5 // pred_region
      %s317 = ssub.s32 %s16, 1
      // Predicated region
      $region13: #{decoder_block.3} parent=11 // pred_check
        %p318 = pneg %p170
      $region14: #{decoder_block.3} parent=11 // pred_check_branch
        %320 = sbr.rel (%p318) target = $region16
      $region15: #{decoder_block.3} parent=11 // pred_region
        _
      $region16: #{decoder_block.3} parent=11 // pred_fallthru
        _
      // Predicated region
      $region17: #{decoder_block.3} parent=11 // pred_check
        %p321 = pneg %p191
      $region18: #{decoder_block.3} parent=11 // pred_check_branch
        %323 = sbr.rel (%p321) target = $region20
      $region19: #{decoder_block.3} parent=11 // pred_region
        _
      $region20: #{decoder_block.3} parent=11 // pred_fallthru
        _
      // Predicated region
      $region21: #{decoder_block.3} parent=11 // pred_check
        %p324 = pneg %p212
      $region22: #{decoder_block.3} parent=11 // pred_check_branch
        %326 = sbr.rel (%p324) target = $region24
      $region23: #{decoder_block.3} parent=11 // pred_region
        _
      $region24: #{decoder_block.3} parent=11 // pred_fallthru
        _
      // Predicated region
      $region25: #{decoder_block.3} parent=11 // pred_check
        %p327 = pneg %p233
      $region26: #{decoder_block.3} parent=11 // pred_check_branch
        %329 = sbr.rel (%p327) target = $region28
      $region27: #{decoder_block.3} parent=11 // pred_region
        _
      $region28: #{decoder_block.3} parent=11 // pred_fallthru
        _
      // Predicated region
      $region29: #{decoder_block.3} parent=11 // pred_check
        %p330 = pneg %p254
      $region30: #{decoder_block.3} parent=11 // pred_check_branch
        %332 = sbr.rel (%p330) target = $region32
      $region31: #{decoder_block.3} parent=11 // pred_region
        _
      $region32: #{decoder_block.3} parent=11 // pred_fallthru
        _
      // Predicated region
      $region33: #{decoder_block.3} parent=11 // pred_check
        %p333 = pneg %p275
      $region34: #{decoder_block.3} parent=11 // pred_check_branch
        %335 = sbr.rel (%p333) target = $region36
      $region35: #{decoder_block.3} parent=11 // pred_region
        _
      $region36: #{decoder_block.3} parent=11 // pred_fallthru
        _
    $region12: #{decoder_block.3} parent=5 // pred_fallthru
      _
    %p336 = scmp.lt.s32.totalorder %s16, 2
    // Predicated region
    $region37: #{decoder_block.3} parent=5 // pred_check
      %p337 = pneg %p336
    $region38: #{decoder_block.3} parent=5 // pred_check_branch
      %339 = sbr.rel (%p337) target = $region40
    $region39: #{decoder_block.3} parent=5 // pred_region
      // Predicated region
      $region41: #{decoder_block.3} parent=39 // pred_check
        %p340 = pneg %p59
      $region42: #{decoder_block.3} parent=39 // pred_check_branch
        %342 = sbr.rel (%p340) target = $region44
      $region43: #{decoder_block.3} parent=39 // pred_region
        %p343 = scmp.lt.s32.totalorder %s23, 1
        %s344 = scalar_select %p343, %s23, 1
        %p345 = scmp.lt.s32.totalorder %s24, 0
        %s346 = scalar_select %p345, %s24, 0
        %p347 = scmp.lt.s32.totalorder %s25, 0
        %s348 = scalar_select %p347, %s25, 0
        %s349 = sadd.s32 %s348, %s346
        %s350 = sadd.s32 %s349, %s344
        %s351 = smul.addr %s350, 4
        %s352 = scalar_lea.vmem %s0, %s351
      $region44: #{decoder_block.3} parent=39 // pred_fallthru
        _
      // Predicated region
      $region45: #{decoder_block.3} parent=39 // pred_check
        %p353 = pneg %p87
      $region46: #{decoder_block.3} parent=39 // pred_check_branch
        %355 = sbr.rel (%p353) target = $region48
      $region47: #{decoder_block.3} parent=39 // pred_region
        %p356 = scmp.lt.s32.totalorder %s23, 1
        %s357 = scalar_select %p356, %s23, 1
        %p358 = scmp.lt.s32.totalorder %s25, 0
        %s359 = scalar_select %p358, %s25, 0
        %s360 = smul.addr %s357, 2
        %s361 = sadd.s32 %s359, %s360
        %s362 = smul.addr %s361, 8
        %s363 = scalar_lea.vmem %s1, %s362
      $region48: #{decoder_block.3} parent=39 // pred_fallthru
        _
      // Predicated region
      $region49: #{decoder_block.3} parent=39 // pred_check
        %p364 = pneg %p115
      $region50: #{decoder_block.3} parent=39 // pred_check_branch
        %366 = sbr.rel (%p364) target = $region52
      $region51: #{decoder_block.3} parent=39 // pred_region
        %p367 = scmp.lt.s32.totalorder %s23, 1
        %s368 = scalar_select %p367, %s23, 1
        %p369 = scmp.lt.s32.totalorder %s25, 0
        %s370 = scalar_select %p369, %s25, 0
        %s371 = smul.addr %s368, 2
        %s372 = sadd.s32 %s370, %s371
        %s373 = smul.addr %s372, 8
        %s374 = scalar_lea.vmem %s2, %s373
      $region52: #{decoder_block.3} parent=39 // pred_fallthru
        _
      // Predicated region
      $region53: #{decoder_block.3} parent=39 // pred_check
        %p375 = pneg %p143
      $region54: #{decoder_block.3} parent=39 // pred_check_branch
        %377 = sbr.rel (%p375) target = $region56
      $region55: #{decoder_block.3} parent=39 // pred_region
        %p378 = scmp.lt.s32.totalorder %s23, 1
        %s379 = scalar_select %p378, %s23, 1
        %p380 = scmp.lt.s32.totalorder %s24, 0
        %s381 = scalar_select %p380, %s24, 0
        %s382 = sadd.s32 %s381, %s379
        %s383 = smul.addr %s382, 8
        %s384 = scalar_lea.vmem %s3, %s383
      $region56: #{decoder_block.3} parent=39 // pred_fallthru
        _
    $region40: #{decoder_block.3} parent=5 // pred_fallthru
      _
    %p385 = scmp.le.s32.totalorder 1, %s16
    %p386 = scmp.lt.s32.totalorder %s16, 3
    %p387 = pnand %p385, %p386
    %p388 = pneg %p387
    // Predicated region
    $region57: #{decoder_block.3} parent=5 // pred_check
      _
    $region58: #{decoder_block.3} parent=5 // pred_check_branch
      %390 = sbr.rel (%p387) target = $region60
    $region59: #{decoder_block.3} parent=5 // pred_region
      %s391 = ssub.s32 %s16, 1
      %p392 = scmp.lt.s32.totalorder %s26, 1
      %s393 = scalar_select %p392, %s26, 1
      %p394 = scmp.lt.s32.totalorder %s27, 0
      %s395 = scalar_select %p394, %s27, 0
      %p396 = scmp.lt.s32.totalorder %s28, 0
      %s397 = scalar_select %p396, %s28, 0
      %s398 = sadd.s32 %s397, %s395
      %s399 = sadd.s32 %s398, %s393
      %s400 = smul.addr %s399, 4
      %s401 = scalar_lea.vmem %s0, %s400
      %p402 = pneg %p65
      %p403 = pneg %p62
      %p404 = scmp.lt.s32.totalorder %s26, 1
      %s405 = scalar_select %p404, %s26, 1
      %p406 = scmp.lt.s32.totalorder %s28, 0
      %s407 = scalar_select %p406, %s28, 0
      %s408 = smul.addr %s405, 2
      %s409 = sadd.s32 %s407, %s408
      %s410 = smul.addr %s409, 8
      %s411 = scalar_lea.vmem %s1, %s410
      %p412 = pneg %p93
      %p413 = pneg %p90
      %p414 = scmp.lt.s32.totalorder %s26, 1
      %s415 = scalar_select %p414, %s26, 1
      %p416 = scmp.lt.s32.totalorder %s28, 0
      %s417 = scalar_select %p416, %s28, 0
      %s418 = smul.addr %s415, 2
      %s419 = sadd.s32 %s417, %s418
      %s420 = smul.addr %s419, 8
      %s421 = scalar_lea.vmem %s2, %s420
      %p422 = pneg %p121
      %p423 = pneg %p118
      %p424 = scmp.lt.s32.totalorder %s26, 1
      %s425 = scalar_select %p424, %s26, 1
      %p426 = scmp.lt.s32.totalorder %s27, 0
      %s427 = scalar_select %p426, %s27, 0
      %s428 = sadd.s32 %s427, %s425
      %s429 = smul.addr %s428, 8
      %s430 = scalar_lea.vmem %s3, %s429
      %p431 = pneg %p149
      %p432 = pneg %p146
      %p433 = pneg %p170
      %p434 = pneg %p167
      %p435 = pneg %p191
      %p436 = pneg %p188
      %p437 = pneg %p212
      %p438 = pneg %p209
      %p439 = pneg %p233
      %p440 = pneg %p230
      %p441 = pneg %p254
      %p442 = pneg %p251
      %p443 = pneg %p275
      %p444 = pneg %p272
      %p445 = pneg %p303
      %p446 = pneg %p300
      %p447 = scmp.lt.s32.totalorder %s26, 1
      %s448 = scalar_select %p447, %s26, 1
      %p449 = scmp.lt.s32.totalorder %s27, 0
      %s450 = scalar_select %p449, %s27, 0
      %s451 = sadd.s32 %s450, %s448
      %s452 = smul.addr %s451, 8
      %s453 = scalar_lea.vmem %s10, %s452
      %p454 = scmp.lt.s32.totalorder %s26, 1
      %s455 = scalar_select %p454, %s26, 1
      %p456 = scmp.lt.s32.totalorder %s27, 0
      %s457 = scalar_select %p456, %s27, 0
      %p458 = scmp.lt.s32.totalorder %s28, 0
      %s459 = scalar_select %p458, %s28, 0
      %s460 = sadd.s32 %s459, %s457
      %s461 = sadd.s32 %s460, %s455
      %s462 = smul.addr %s461, 4
      %s463 = scalar_lea.vmem %s0, %s462
      %p464 = scmp.lt.s32.totalorder %s26, 1
      %s465 = scalar_select %p464, %s26, 1
      %p466 = scmp.lt.s32.totalorder %s28, 0
      %s467 = scalar_select %p466, %s28, 0
      %s468 = smul.addr %s465, 2
      %s469 = sadd.s32 %s467, %s468
      %s470 = smul.addr %s469, 8
      %s471 = scalar_lea.vmem %s1, %s470
      %p472 = scmp.lt.s32.totalorder %s26, 1
      %s473 = scalar_select %p472, %s26, 1
      %p474 = scmp.lt.s32.totalorder %s28, 0
      %s475 = scalar_select %p474, %s28, 0
      %s476 = smul.addr %s473, 2
      %s477 = sadd.s32 %s475, %s476
      %s478 = smul.addr %s477, 8
      %s479 = scalar_lea.vmem %s2, %s478
      %p480 = scmp.lt.s32.totalorder %s26, 1
      %s481 = scalar_select %p480, %s26, 1
      %p482 = scmp.lt.s32.totalorder %s27, 0
      %s483 = scalar_select %p482, %s27, 0
      %s484 = sadd.s32 %s483, %s481
      %s485 = smul.addr %s484, 8
      %s486 = scalar_lea.vmem %s3, %s485
      %p487 = scmp.lt.s32.totalorder %s26, 1
      %s488 = scalar_select %p487, %s26, 1
      %p489 = scmp.lt.s32.totalorder %s27, 0
      %s490 = scalar_select %p489, %s27, 0
      %s491 = sadd.s32 %s490, %s488
      %s492 = smul.addr %s491, 8
      %s493 = scalar_lea.vmem %s10, %s492
      %p494 = scmp.eq.s32.totalorder %s28, 0
      // Predicated region
      $region61: #{decoder_block.3} parent=59 // pred_check
        %p495 = pneg %p494
      $region62: #{decoder_block.3} parent=59 // pred_check_branch
        %497 = sbr.rel (%p495) target = $region64
      $region63: #{decoder_block.3} parent=59 // pred_region
        %v498 = vld [vmem:[%s486] sm:$0xff]
        %v499 = vld [vmem:[%s4] sm:$0xff]
        %v500 = vld [vmem:[%s4 + $0x8] sm:$0xff]
        %v501 = vld [vmem:[%s5] sm:$0x1]
        %v503 = vperm.slane %v501, 0
        %vm505 = vcmask 130048
        %v507 = vsel %vm505, %v498, 0
        %509 = vmatpush.msra.mxu0 0.0
        %510 = vmatpush.msra.mxu0 0.0
        %511 = vmatpush.msra.mxu0 0.0
        %512 = vmatpush.msra.mxu0 0.0
        %513 = vmatpush.msra.mxu0 0.0
        %514 = vmatpush.msra.mxu0 0.0
        %515 = vmatpush.msra.mxu0 0.0
        %516 = vmatpush.msra.mxu0 0.0
        %517 = vmatpush.msra.mxu0 0.0
        %518 = vmatpush.msra.mxu0 0.0
        %519 = vmatpush.msra.mxu0 0.0
        %520 = vmatpush.msra.mxu0 0.0
        %521 = vmatpush.msra.mxu0 0.0
        %522 = vmatpush.msra.mxu0 0.0
        %523 = vmatpush.msra.mxu0 %v500
        %524 = vmatpush.msra.mxu0 %v499
        %525 = vmatmul.f32.gmra.mxu0 %v507
        %v526 = vpop.f32.mrf.mxu0
        %v527 = vadd.f32 %v503, %v526
        %528 = vdwg.mxu0
        %529 = vst.msk [vmem:[#allocation2] sm:$0xff] %vm505, %v527
        %s530 = scalar_lea.vmem %s4, 16
        %v531 = vld [vmem:[%s530] sm:$0xff]
        %v532 = vld [vmem:[%s530 + $0x8] sm:$0xff]
        %s533 = scalar_lea.vmem %s5, 1
        %v534 = vld [vmem:[%s533] sm:$0x1]
        %v536 = vperm.slane %v534, 0
        %538 = vrot.lane.b32.xlu0 %v498, 112
        %v539 = vpop.permute.xlu0 %538
        %v540 = vsel %vm505, %v539, 0
        %542 = vmatpush.msra.mxu0 0.0
        %543 = vmatpush.msra.mxu0 0.0
        %544 = vmatpush.msra.mxu0 0.0
        %545 = vmatpush.msra.mxu0 0.0
        %546 = vmatpush.msra.mxu0 0.0
        %547 = vmatpush.msra.mxu0 0.0
        %548 = vmatpush.msra.mxu0 0.0
        %549 = vmatpush.msra.mxu0 0.0
        %550 = vmatpush.msra.mxu0 0.0
        %551 = vmatpush.msra.mxu0 0.0
        %552 = vmatpush.msra.mxu0 0.0
        %553 = vmatpush.msra.mxu0 0.0
        %554 = vmatpush.msra.mxu0 0.0
        %555 = vmatpush.msra.mxu0 0.0
        %556 = vmatpush.msra.mxu0 %v532
        %557 = vmatpush.msra.mxu0 %v531
        %558 = vmatmul.f32.gmra.mxu0 %v540
        %v559 = vpop.f32.mrf.mxu0
        %v560 = vadd.f32 %v536, %v559
        %561 = vdwg.mxu0
        %s562 = scalar_lea.vmem [#allocation2], 8
        %563 = vst.msk [vmem:[%s562] sm:$0xff] %vm505, %v560
        %vm564 = vcmask 7168
        %565 = vst.msk [vmem:[#allocation3] sm:$0xff] %vm564, -inf
        %566 = vst.msk [vmem:[#allocation3 + $0x8] sm:$0xff] %vm564, -inf
        %567 = vst.msk [vmem:[#allocation4] sm:$0xff] %vm564, 0.0
        %568 = vst.msk [vmem:[#allocation4 + $0x8] sm:$0xff] %vm564, 0.0
        %569 = vst.msk [vmem:[#allocation5] sm:$0xff] %vm505, 0.0
        %570 = vst.msk [vmem:[#allocation5 + $0x8] sm:$0xff] %vm505, 0.0
      $region64: #{decoder_block.3} parent=59 // pred_fallthru
        _
      %v571 = vld [vmem:[%s471] sm:$0xff]
      %v572 = vld [vmem:[%s471 + $0x8] sm:$0xff]
      %v573 = vld [vmem:[%s479] sm:$0xff]
      %v574 = vld [vmem:[%s479 + $0x8] sm:$0xff]
      %v575 = vld [vmem:[#allocation2] sm:$0xff]
      %v576 = vld [vmem:[#allocation2 + $0x8] sm:$0xff]
      %v577 = vld [vmem:[%s463] sm:$0xf]
      %v578 = vunpack.c.l.bf16 %v577
      %v579 = vsub.f32 1.0, %v578
      %v580 = vmul.f32 %v579, -10000.0
      %vm581 = vcmask 130048
      %v583 = vsel %vm581, %v575, 0
      %v586 = vsel %vm581, %v571, 0
      %588 = vmatpush.xpose.msra.mxu0 0.0
      %589 = vmatpush.xpose.msra.mxu0 0.0
      %590 = vmatpush.xpose.msra.mxu0 0.0
      %591 = vmatpush.xpose.msra.mxu0 0.0
      %592 = vmatpush.xpose.msra.mxu0 0.0
      %593 = vmatpush.xpose.msra.mxu0 0.0
      %594 = vmatpush.xpose.msra.mxu0 0.0
      %595 = vmatpush.xpose.msra.mxu0 0.0
      %596 = vmatpush.xpose.msra.mxu0 0.0
      %597 = vmatpush.xpose.msra.mxu0 0.0
      %598 = vmatpush.xpose.msra.mxu0 0.0
      %599 = vmatpush.xpose.msra.mxu0 0.0
      %600 = vmatpush.xpose.msra.mxu0 0.0
      %601 = vmatpush.xpose.msra.mxu0 0.0
      %602 = vmatpush.xpose.msra.mxu0 0.0
      %603 = vmatpush.xpose.msra.mxu0 %v586
      %604 = vmatmul.f32.gmra.mxu0 %v583
      %v605 = vpop.f32.mrf.mxu0
      %v606 = vadd.f32 %v580, %v605
      %607 = vdwg.mxu0
      %v609 = vsel %vm581, %v576, 0
      %v612 = vsel %vm581, %v572, 0
      %614 = vmatpush.xpose.msra.mxu0 0.0
      %615 = vmatpush.xpose.msra.mxu0 0.0
      %616 = vmatpush.xpose.msra.mxu0 0.0
      %617 = vmatpush.xpose.msra.mxu0 0.0
      %618 = vmatpush.xpose.msra.mxu0 0.0
      %619 = vmatpush.xpose.msra.mxu0 0.0
      %620 = vmatpush.xpose.msra.mxu0 0.0
      %621 = vmatpush.xpose.msra.mxu0 0.0
      %622 = vmatpush.xpose.msra.mxu0 0.0
      %623 = vmatpush.xpose.msra.mxu0 0.0
      %624 = vmatpush.xpose.msra.mxu0 0.0
      %625 = vmatpush.xpose.msra.mxu0 0.0
      %626 = vmatpush.xpose.msra.mxu0 0.0
      %627 = vmatpush.xpose.msra.mxu0 0.0
      %628 = vmatpush.xpose.msra.mxu0 0.0
      %629 = vmatpush.xpose.msra.mxu0 %v612
      %630 = vmatmul.f32.gmra.mxu0 %v609
      %v631 = vpop.f32.mrf.mxu0
      %v632 = vadd.f32 %v580, %v631
      %633 = vdwg.mxu0
      %v634 = vld [vmem:[#allocation3] sm:$0xff]
      %v635 = vld [vmem:[#allocation3 + $0x8] sm:$0xff]
      %vm636 = vcmask 64512
      %v637 = vsel %vm636, %v606, -inf
      %638 = vmax.xlane.f32.xlu0 %v637
      %v639 = vpop.xlane.xlu0 %638
      %v640 = vsel %vm636, %v632, -inf
      %641 = vmax.xlane.f32.xlu0 %v640
      %v642 = vpop.xlane.xlu0 %641
      %v643 = vmax.f32 %v634, %v639
      %v644 = vmax.f32 %v635, %v642
      %v645 = vsub.f32 %v634, %v643
      %v646 = vsub.f32 %v635, %v644
      %v647 = vmul.f32 %v645, 1.442695
      %v648 = vpow.pop %v647
      %v649 = vmul.f32 %v646, 1.442695
      %v650 = vpow.pop %v649
      %652 = vset.pattern.permute.xlu0 0
      %653 = vperm.xlu0 %652, %v643
      %v654 = vpop.permute.xlu0 %653
      %657 = vset.pattern.permute.xlu0 0
      %658 = vperm.xlu0 %657, %v644
      %v659 = vpop.permute.xlu0 %658
      %v661 = vsub.f32 %v606, %v654
      %v662 = vsub.f32 %v632, %v659
      %v663 = vmul.f32 %v661, 1.442695
      %v664 = vpow.pop %v663
      %v665 = vmul.f32 %v662, 1.442695
      %v666 = vpow.pop %v665
      %v667 = vld [vmem:[#allocation4] sm:$0xff]
      %v668 = vld [vmem:[#allocation4 + $0x8] sm:$0xff]
      %v669 = vmul.f32 %v648, %v667
      %v670 = vmul.f32 %v650, %v668
      %v671 = vsel %vm636, %v664, 0.0
      %672 = vadd.xlane.f32.xlu0 %v671
      %v673 = vpop.xlane.xlu0 %672
      %v674 = vsel %vm636, %v666, 0.0
      %675 = vadd.xlane.f32.xlu0 %v674
      %v676 = vpop.xlane.xlu0 %675
      %v677 = vadd.f32 %v669, %v673
      %v678 = vadd.f32 %v670, %v676
      %vm679 = vcmask 7168
      %680 = vst.msk [vmem:[#allocation4] sm:$0xff] %vm679, %v677
      %681 = vst.msk [vmem:[#allocation4 + $0x8] sm:$0xff] %vm679, %v678
      %v682 = vld [vmem:[#allocation5] sm:$0xff]
      %v683 = vld [vmem:[#allocation5 + $0x8] sm:$0xff]
      %685 = vset.pattern.permute.xlu0 0
      %686 = vperm.xlu0 %685, %v648
      %v687 = vpop.permute.xlu0 %686
      %690 = vset.pattern.permute.xlu0 0
      %691 = vperm.xlu0 %690, %v650
      %v692 = vpop.permute.xlu0 %691
      %v694 = vmul.f32 %v687, %v682
      %v695 = vmul.f32 %v692, %v683
      %v697 = vsel %vm636, %v664, 0
      %699 = vmatpush.msra.mxu0 0.0
      %700 = vmatpush.msra.mxu0 0.0
      %701 = vmatpush.msra.mxu0 0.0
      %702 = vmatpush.msra.mxu0 0.0
      %703 = vmatpush.msra.mxu0 0.0
      %704 = vmatpush.msra.mxu0 0.0
      %705 = vmatpush.msra.mxu0 0.0
      %706 = vmatpush.msra.mxu0 0.0
      %707 = vmatpush.msra.mxu0 0.0
      %708 = vmatpush.msra.mxu0 0.0
      %709 = vmatpush.msra.mxu0 0.0
      %710 = vmatpush.msra.mxu0 0.0
      %711 = vmatpush.msra.mxu0 0.0
      %712 = vmatpush.msra.mxu0 0.0
      %713 = vmatpush.msra.mxu0 0.0
      %714 = vmatpush.msra.mxu0 %v573
      %715 = vmatmul.f32.gmra.mxu0 %v697
      %v716 = vpop.f32.mrf.mxu0
      %v717 = vadd.f32 0.0, %v716
      %718 = vdwg.mxu0
      %v720 = vsel %vm636, %v666, 0
      %722 = vmatpush.msra.mxu0 0.0
      %723 = vmatpush.msra.mxu0 0.0
      %724 = vmatpush.msra.mxu0 0.0
      %725 = vmatpush.msra.mxu0 0.0
      %726 = vmatpush.msra.mxu0 0.0
      %727 = vmatpush.msra.mxu0 0.0
      %728 = vmatpush.msra.mxu0 0.0
      %729 = vmatpush.msra.mxu0 0.0
      %730 = vmatpush.msra.mxu0 0.0
      %731 = vmatpush.msra.mxu0 0.0
      %732 = vmatpush.msra.mxu0 0.0
      %733 = vmatpush.msra.mxu0 0.0
      %734 = vmatpush.msra.mxu0 0.0
      %735 = vmatpush.msra.mxu0 0.0
      %736 = vmatpush.msra.mxu0 0.0
      %737 = vmatpush.msra.mxu0 %v574
      %738 = vmatmul.f32.gmra.mxu0 %v720
      %v739 = vpop.f32.mrf.mxu0
      %v740 = vadd.f32 0.0, %v739
      %741 = vdwg.mxu0
      %v742 = vadd.f32 %v694, %v717
      %v743 = vadd.f32 %v695, %v740
      %744 = vst.msk [vmem:[#allocation5] sm:$0xff] %vm581, %v742
      %745 = vst.msk [vmem:[#allocation5 + $0x8] sm:$0xff] %vm581, %v743
      %746 = vst.msk [vmem:[#allocation3] sm:$0xff] %vm679, %v643
      %747 = vst.msk [vmem:[#allocation3 + $0x8] sm:$0xff] %vm679, %v644
      // Predicated region
      $region65: #{decoder_block.3} parent=59 // pred_check
        %p748 = pneg %p494
      $region66: #{decoder_block.3} parent=59 // pred_check_branch
        %750 = sbr.rel (%p748) target = $region68
      $region67: #{decoder_block.3} parent=59 // pred_region
        %v751 = vld [vmem:[#allocation4] sm:$0xff]
        %v752 = vld [vmem:[#allocation4 + $0x8] sm:$0xff]
        %v753 = vrcp.pop %v751
        %v754 = vrcp.pop %v752
        %v755 = vmul.f32 %v751, %v753
        %v756 = vmul.f32 %v752, %v754
        %v757 = vsub.f32 2.0, %v755
        %v758 = vsub.f32 2.0, %v756
        %v759 = vmul.f32 %v753, %v757
        %v760 = vmul.f32 %v754, %v758
        %v761 = vld [vmem:[#allocation5] sm:$0xff]
        %763 = vset.pattern.permute.xlu0 0
        %764 = vperm.xlu0 %763, %v759
        %v765 = vpop.permute.xlu0 %764
        %v767 = vmul.f32 %v761, %v765
        %768 = vst.msk [vmem:[#allocation6] sm:$0xff] %vm581, %v767
        %s769 = scalar_lea.vmem [#allocation5], 8
        %v770 = vld [vmem:[%s769] sm:$0xff]
        %772 = vset.pattern.permute.xlu0 0
        %773 = vperm.xlu0 %772, %v760
        %v774 = vpop.permute.xlu0 %773
        %v776 = vmul.f32 %v770, %v774
        %778 = vrot.lane.b32.xlu0 %v776, 16
        %v779 = vpop.permute.xlu0 %778
        %vm781 = vcmask 261248
        %782 = vst.msk [vmem:[#allocation6] sm:$0xff] %vm781, %v779
        %v783 = vld [vmem:[#allocation6] sm:$0xff]
        %v784 = vld [vmem:[%s6] sm:$0xff]
        %v785 = vld [vmem:[%s6 + $0x8] sm:$0xff]
        %v786 = vld [vmem:[%s6 + $0x10] sm:$0xff]
        %v787 = vld [vmem:[%s6 + $0x18] sm:$0xff]
        %v788 = vld [vmem:[%s7] sm:$0x1]
        %v790 = vperm.slane %v788, 0
        %vm792 = vcmask 261120
        %v794 = vsel %vm792, %v783, 0
        %796 = vmatpush.msra.mxu0 0.0
        %797 = vmatpush.msra.mxu0 0.0
        %798 = vmatpush.msra.mxu0 0.0
        %799 = vmatpush.msra.mxu0 0.0
        %800 = vmatpush.msra.mxu0 0.0
        %801 = vmatpush.msra.mxu0 0.0
        %802 = vmatpush.msra.mxu0 0.0
        %803 = vmatpush.msra.mxu0 0.0
        %804 = vmatpush.msra.mxu0 0.0
        %805 = vmatpush.msra.mxu0 0.0
        %806 = vmatpush.msra.mxu0 0.0
        %807 = vmatpush.msra.mxu0 0.0
        %808 = vmatpush.msra.mxu0 %v787
        %809 = vmatpush.msra.mxu0 %v786
        %810 = vmatpush.msra.mxu0 %v785
        %811 = vmatpush.msra.mxu0 %v784
        %812 = vmatmul.f32.gmra.mxu0 %v794
        %v813 = vpop.f32.mrf.mxu0
        %v814 = vadd.f32 %v790, %v813
        %815 = vdwg.mxu0
        %v816 = vld [vmem:[%s486] sm:$0xff]
        %v817 = vadd.f32 %v816, %v814
        %v818 = vsel %vm792, %v817, 0.0
        %819 = vadd.xlane.f32.xlu0 %v818
        %v820 = vpop.xlane.xlu0 %819
        %v821 = vrcp.pop 32.0
        %v822 = vmul.f32 32.0, %v821
        %v823 = vsub.f32 1.0, %v822
        %v824 = vmul.f32 %v821, %v823
        %v825 = vadd.f32 %v821, %v824
        %vm826 = vweird.f32 %v821
        %v827 = vsel %vm826, %v821, %v825
        %v828 = vmul.f32 %v820, %v827
        %v829 = vsub.f32 %v817, %v828
        %v830 = vmul.f32 %v829, %v829
        %v831 = vsel %vm792, %v830, 0.0
        %832 = vadd.xlane.f32.xlu0 %v831
        %v833 = vpop.xlane.xlu0 %832
        %v834 = vmul.f32 %v833, %v827
        %v835 = vadd.f32 %v834, 1e-05
        %v836 = vrsqrt.pop %v835
        %v837 = vmul.f32 %v836, %v835
        %v838 = vmul.f32 %v837, %v836
        %v839 = vmul.f32 0.5, %v838
        %v840 = vsub.f32 1.5, %v839
        %v841 = vmul.f32 %v836, %v840
        %vm842 = vweird.f32 %v835
        %vm843 = vweird.f32 %v836
        %vm844 = vmor %vm842, %vm843
        %v845 = vsel %vm844, %v836, %v841
        %v846 = vmul.f32 %v829, %v845
        %v847 = vld [vmem:[%s8] sm:$0x1]
        %v849 = vperm.slane %v847, 0
        %v851 = vmul.f32 %v846, %v849
        %v852 = vld [vmem:[%s9] sm:$0x1]
        %v854 = vperm.slane %v852, 0
        %v856 = vadd.f32 %v851, %v854
        %857 = vst.msk [vmem:[%s493] sm:$0xff] %vm792, %v856
      $region68: #{decoder_block.3} parent=59 // pred_fallthru
        _
      %p858 = scmp.lt.s32.totalorder %s26, 1
      %s859 = scalar_select %p858, %s26, 1
      %p860 = scmp.lt.s32.totalorder %s27, 0
      %s861 = scalar_select %p860, %s27, 0
      %s862 = sadd.s32 %s861, %s859
      %s863 = smul.addr %s862, 8
      %s864 = scalar_lea.vmem %s10, %s863
      // Predicated region
      $region69: #{decoder_block.3} parent=59 // pred_check
        %p865 = pneg %p300
      $region70: #{decoder_block.3} parent=59 // pred_check_branch
        %867 = sbr.rel (%p865) target = $region72
      $region71: #{decoder_block.3} parent=59 // pred_region
        _
      $region72: #{decoder_block.3} parent=59 // pred_fallthru
        _
    $region60: #{decoder_block.3} parent=5 // pred_fallthru
      _
    %p868 = scmp.le.s32.totalorder 2, %s16
    // Predicated region
    $region73: #{decoder_block.3} parent=5 // pred_check
      %p869 = pneg %p868
    $region74: #{decoder_block.3} parent=5 // pred_check_branch
      %871 = sbr.rel (%p869) target = $region76
    $region75: #{decoder_block.3} parent=5 // pred_region
      %s872 = ssub.s32 %s16, 2
      // Predicated region
      $region77: #{decoder_block.3} parent=75 // pred_check
        %p873 = pneg %p306
      $region78: #{decoder_block.3} parent=75 // pred_check_branch
        %875 = sbr.rel (%p873) target = $region80
      $region79: #{decoder_block.3} parent=75 // pred_region
        %p876 = scmp.lt.s32.totalorder %s29, 1
        %s877 = scalar_select %p876, %s29, 1
        %p878 = scmp.lt.s32.totalorder %s30, 0
        %s879 = scalar_select %p878, %s30, 0
        %s880 = sadd.s32 %s879, %s877
        %s881 = smul.addr %s880, 8
        %s882 = scalar_lea.vmem %s10, %s881
      $region80: #{decoder_block.3} parent=75 // pred_fallthru
        _
    $region76: #{decoder_block.3} parent=5 // pred_fallthru
      _
  $region6: #{decoder_block.3} parent=0 // loop_footer
    %s20 = sadd.s32 1, %s16
  $region7: #{decoder_block.3} parent=0 // loop_footer_branch
    %15 = sbr.rel target = $region3
  $region8: #{decoder_block.3} parent=0 // loop_exit
    _

// kernel: decoder_block.4
$region0: #{decoder_block.4}
  #allocation0 [shape = 'u32[]', space=smem, size = 0x4, offset = 0x4, fixed_abs, tag = 'smem constant byte address 0x4 - core index']
  #allocation1 [shape = 'u32[72,128]{1,0:T(1,128)}', space=vmem, size = 0x9000, scoped, tag = 'internal scratch']
  #allocation2 [shape = 'f32[2,8,16]{2,1,0:T(8,128)}', space=vmem, size = 0x2000, scoped, tag = 'scratch operand']
  #allocation3 [shape = 'f32[2,8,1]{2,1,0:T(8,128)}', space=vmem, size = 0x2000, scoped, tag = 'scratch operand']
  #allocation4 [shape = 'f32[2,8,1]{2,1,0:T(8,128)}', space=vmem, size = 0x2000, scoped, tag = 'scratch operand']
  #allocation5 [shape = 'f32[2,8,16]{2,1,0:T(8,128)}', space=vmem, size = 0x2000, scoped, tag = 'scratch operand']
  #allocation6 [shape = 'f32[8,32]{1,0:T(8,128)}', space=vmem, size = 0x1000, scoped, tag = 'scratch operand']
  %s0 = inlined_call_operand.vmem [shape: f32[2,2,16,16], index: 0, kind: input, shape index: {}]
  %s1 = inlined_call_operand.vmem [shape: f32[2,2,16,16], index: 1, kind: input, shape index: {}]
  %s2 = inlined_call_operand.vmem [shape: f32[2,8,32], index: 2, kind: input, shape index: {}]
  %s3 = inlined_call_operand.vmem [shape: f32[2,16,16], index: 3, kind: input, shape index: {}]
  %s4 = inlined_call_operand.vmem [shape: f32[2,1,16], index: 4, kind: input, shape index: {}]
  %s5 = inlined_call_operand.vmem [shape: f32[32,32], index: 5, kind: input, shape index: {}]
  %s6 = inlined_call_operand.vmem [shape: f32[1,32], index: 6, kind: input, shape index: {}]
  %s7 = inlined_call_operand.vmem [shape: f32[1,32], index: 7, kind: input, shape index: {}]
  %s8 = inlined_call_operand.vmem [shape: f32[1,32], index: 8, kind: input, shape index: {}]
  %s9 = inlined_call_operand.vmem [shape: f32[2,8,32], index: 9, kind: output, shape index: {}]
  %s10 = sld [smem:[#allocation0]]
  $region77: #{decoder_block.4} parent=0
    _
  %s12 = ssub.s32 1, %s10
  %s13 = scalar_select 0, %s12, %s10
  loop: start=0, step=1, limit=4
  $region2: #{decoder_block.4} parent=0 // loop_pre_header
    _
  $region3: #{decoder_block.4} parent=0 // loop_header
    %s15 = sphi 0, %s19
    %p16 = scmp.ge.s32.totalorder %s15, 4
    %s22 = sphi 0, %s41
    %s23 = sphi 0, %s37
    %s24 = sphi 0, %s33
    %s25 = sphi 0, %s22
    %s26 = sphi 0, %s23
    %s27 = sphi 0, %s24
    %s28 = sphi 0, %s25
    %s29 = sphi 0, %s26
    %s30 = sphi 0, %s27
    %s46 = sphi 0, %s48
    %s49 = sphi 0, %s46
    %s50 = sphi 0, %s49
    %s66 = sphi 0, %s50
    %s74 = sphi 0, %s76
    %s77 = sphi 0, %s74
    %s78 = sphi 0, %s77
    %s94 = sphi 0, %s78
    %s102 = sphi 0, %s104
    %s105 = sphi 0, %s102
    %s106 = sphi 0, %s105
    %s122 = sphi 0, %s106
    %s126 = sphi 0, %s126
    %s128 = sphi 0, %s126
    %s129 = sphi 0, %s128
    %s143 = sphi 0, %s129
    %s147 = sphi 0, %s147
    %s149 = sphi 0, %s147
    %s150 = sphi 0, %s149
    %s164 = sphi 0, %s150
    %s168 = sphi 0, %s168
    %s170 = sphi 0, %s168
    %s171 = sphi 0, %s170
    %s185 = sphi 0, %s171
    %s189 = sphi 0, %s189
    %s191 = sphi 0, %s189
    %s192 = sphi 0, %s191
    %s206 = sphi 0, %s192
    %s210 = sphi 0, %s210
    %s212 = sphi 0, %s210
    %s213 = sphi 0, %s212
    %s227 = sphi 0, %s213
    %s231 = sphi 0, %s231
    %s233 = sphi 0, %s231
    %s234 = sphi 0, %s233
    %s248 = sphi 0, %s234
    %s256 = sphi 0, %s258
    %s259 = sphi 0, %s256
    %s260 = sphi 0, %s259
    %s276 = sphi 0, %s260
  $region4: #{decoder_block.4} parent=0 // loop_header_branch
    %18 = sbr.rel (%p16) target = $region8
  $region5: #{decoder_block.4} parent=0 // loop_body
    %s20 = ssub.s32 %s15, 1
    %s21 = ssub.s32 %s15, 2
    %s31 = sadd.s32 1, %s24
    %p32 = scmp.ge.s32.totalorder %s31, 1
    %s33 = scalar_select %p32, 0, %s31
    %s34 = sadd.s32 1, %s23
    %s35 = scalar_select %p32, %s34, %s23
    %p36 = scmp.ge.s32.totalorder %s35, 1
    %s37 = scalar_select %p36, 0, %s35
    %s38 = sadd.s32 1, %s22
    %s39 = scalar_select %p36, %s38, %s22
    %p40 = scmp.ge.s32.totalorder %s39, 2
    %s41 = scalar_select %p40, 0, %s39
    %s42 = ssub.s32 %s22, %s41
    %s43 = ssub.s32 %s24, %s33
    %s44 = sor.u32 %s42, %s43
    %p45 = scmp.eq.s32.totalorder %s44, 0
    %s47 = sadd.s32 %s46, 1
    %s48 = scalar_select %p45, %s46, %s47
    %p51 = pneg %p45
    %p52 = scmp.eq.s32.totalorder %s15, 1
    %p53 = por %p51, %p52
    %p54 = scmp.ne.s32.totalorder %s46, %s49
    %p55 = scmp.eq.s32.totalorder %s15, 0
    %p56 = por %p54, %p55
    %p57 = scmp.ne.s32.totalorder %s46, %s49
    %p58 = scmp.eq.s32.totalorder %s20, 1
    %p59 = por %p57, %p58
    %p60 = scmp.ne.s32.totalorder %s49, %s50
    %p61 = scmp.eq.s32.totalorder %s20, 0
    %p62 = por %p60, %p61
    %p63 = scmp.ne.s32.totalorder %s49, %s50
    %p64 = scmp.eq.s32.totalorder %s21, 1
    %p65 = por %p63, %p64
    %p67 = scmp.ne.s32.totalorder %s50, %s66
    %p68 = scmp.eq.s32.totalorder %s21, 0
    %p69 = por %p67, %p68
    %s70 = ssub.s32 %s22, %s41
    %s71 = ssub.s32 %s24, %s33
    %s72 = sor.u32 %s70, %s71
    %p73 = scmp.eq.s32.totalorder %s72, 0
    %s75 = sadd.s32 %s74, 1
    %s76 = scalar_select %p73, %s74, %s75
    %p79 = pneg %p73
    %p80 = scmp.eq.s32.totalorder %s15, 1
    %p81 = por %p79, %p80
    %p82 = scmp.ne.s32.totalorder %s74, %s77
    %p83 = scmp.eq.s32.totalorder %s15, 0
    %p84 = por %p82, %p83
    %p85 = scmp.ne.s32.totalorder %s74, %s77
    %p86 = scmp.eq.s32.totalorder %s20, 1
    %p87 = por %p85, %p86
    %p88 = scmp.ne.s32.totalorder %s77, %s78
    %p89 = scmp.eq.s32.totalorder %s20, 0
    %p90 = por %p88, %p89
    %p91 = scmp.ne.s32.totalorder %s77, %s78
    %p92 = scmp.eq.s32.totalorder %s21, 1
    %p93 = por %p91, %p92
    %p95 = scmp.ne.s32.totalorder %s78, %s94
    %p96 = scmp.eq.s32.totalorder %s21, 0
    %p97 = por %p95, %p96
    %s98 = ssub.s32 %s22, %s41
    %s99 = ssub.s32 %s23, %s37
    %s100 = sor.u32 %s98, %s99
    %p101 = scmp.eq.s32.totalorder %s100, 0
    %s103 = sadd.s32 %s102, 1
    %s104 = scalar_select %p101, %s102, %s103
    %p107 = pneg %p101
    %p108 = scmp.eq.s32.totalorder %s15, 1
    %p109 = por %p107, %p108
    %p110 = scmp.ne.s32.totalorder %s102, %s105
    %p111 = scmp.eq.s32.totalorder %s15, 0
    %p112 = por %p110, %p111
    %p113 = scmp.ne.s32.totalorder %s102, %s105
    %p114 = scmp.eq.s32.totalorder %s20, 1
    %p115 = por %p113, %p114
    %p116 = scmp.ne.s32.totalorder %s105, %s106
    %p117 = scmp.eq.s32.totalorder %s20, 0
    %p118 = por %p116, %p117
    %p119 = scmp.ne.s32.totalorder %s105, %s106
    %p120 = scmp.eq.s32.totalorder %s21, 1
    %p121 = por %p119, %p120
    %p123 = scmp.ne.s32.totalorder %s106, %s122
    %p124 = scmp.eq.s32.totalorder %s21, 0
    %p125 = por %p123, %p124
    %s127 = sadd.s32 %s126, 1
    %p130 = scmp.eq.s32.totalorder %s15, 1
    %p131 = scmp.ne.s32.totalorder %s126, %s128
    %p132 = scmp.eq.s32.totalorder %s15, 0
    %p133 = por %p131, %p132
    %p134 = scmp.ne.s32.totalorder %s126, %s128
    %p135 = scmp.eq.s32.totalorder %s20, 1
    %p136 = por %p134, %p135
    %p137 = scmp.ne.s32.totalorder %s128, %s129
    %p138 = scmp.eq.s32.totalorder %s20, 0
    %p139 = por %p137, %p138
    %p140 = scmp.ne.s32.totalorder %s128, %s129
    %p141 = scmp.eq.s32.totalorder %s21, 1
    %p142 = por %p140, %p141
    %p144 = scmp.ne.s32.totalorder %s129, %s143
    %p145 = scmp.eq.s32.totalorder %s21, 0
    %p146 = por %p144, %p145
    %s148 = sadd.s32 %s147, 1
    %p151 = scmp.eq.s32.totalorder %s15, 1
    %p152 = scmp.ne.s32.totalorder %s147, %s149
    %p153 = scmp.eq.s32.totalorder %s15, 0
    %p154 = por %p152, %p153
    %p155 = scmp.ne.s32.totalorder %s147, %s149
    %p156 = scmp.eq.s32.totalorder %s20, 1
    %p157 = por %p155, %p156
    %p158 = scmp.ne.s32.totalorder %s149, %s150
    %p159 = scmp.eq.s32.totalorder %s20, 0
    %p160 = por %p158, %p159
    %p161 = scmp.ne.s32.totalorder %s149, %s150
    %p162 = scmp.eq.s32.totalorder %s21, 1
    %p163 = por %p161, %p162
    %p165 = scmp.ne.s32.totalorder %s150, %s164
    %p166 = scmp.eq.s32.totalorder %s21, 0
    %p167 = por %p165, %p166
    %s169 = sadd.s32 %s168, 1
    %p172 = scmp.eq.s32.totalorder %s15, 1
    %p173 = scmp.ne.s32.totalorder %s168, %s170
    %p174 = scmp.eq.s32.totalorder %s15, 0
    %p175 = por %p173, %p174
    %p176 = scmp.ne.s32.totalorder %s168, %s170
    %p177 = scmp.eq.s32.totalorder %s20, 1
    %p178 = por %p176, %p177
    %p179 = scmp.ne.s32.totalorder %s170, %s171
    %p180 = scmp.eq.s32.totalorder %s20, 0
    %p181 = por %p179, %p180
    %p182 = scmp.ne.s32.totalorder %s170, %s171
    %p183 = scmp.eq.s32.totalorder %s21, 1
    %p184 = por %p182, %p183
    %p186 = scmp.ne.s32.totalorder %s171, %s185
    %p187 = scmp.eq.s32.totalorder %s21, 0
    %p188 = por %p186, %p187
    %s190 = sadd.s32 %s189, 1
    %p193 = scmp.eq.s32.totalorder %s15, 1
    %p194 = scmp.ne.s32.totalorder %s189, %s191
    %p195 = scmp.eq.s32.totalorder %s15, 0
    %p196 = por %p194, %p195
    %p197 = scmp.ne.s32.totalorder %s189, %s191
    %p198 = scmp.eq.s32.totalorder %s20, 1
    %p199 = por %p197, %p198
    %p200 = scmp.ne.s32.totalorder %s191, %s192
    %p201 = scmp.eq.s32.totalorder %s20, 0
    %p202 = por %p200, %p201
    %p203 = scmp.ne.s32.totalorder %s191, %s192
    %p204 = scmp.eq.s32.totalorder %s21, 1
    %p205 = por %p203, %p204
    %p207 = scmp.ne.s32.totalorder %s192, %s206
    %p208 = scmp.eq.s32.totalorder %s21, 0
    %p209 = por %p207, %p208
    %s211 = sadd.s32 %s210, 1
    %p214 = scmp.eq.s32.totalorder %s15, 1
    %p215 = scmp.ne.s32.totalorder %s210, %s212
    %p216 = scmp.eq.s32.totalorder %s15, 0
    %p217 = por %p215, %p216
    %p218 = scmp.ne.s32.totalorder %s210, %s212
    %p219 = scmp.eq.s32.totalorder %s20, 1
    %p220 = por %p218, %p219
    %p221 = scmp.ne.s32.totalorder %s212, %s213
    %p222 = scmp.eq.s32.totalorder %s20, 0
    %p223 = por %p221, %p222
    %p224 = scmp.ne.s32.totalorder %s212, %s213
    %p225 = scmp.eq.s32.totalorder %s21, 1
    %p226 = por %p224, %p225
    %p228 = scmp.ne.s32.totalorder %s213, %s227
    %p229 = scmp.eq.s32.totalorder %s21, 0
    %p230 = por %p228, %p229
    %s232 = sadd.s32 %s231, 1
    %p235 = scmp.eq.s32.totalorder %s15, 1
    %p236 = scmp.ne.s32.totalorder %s231, %s233
    %p237 = scmp.eq.s32.totalorder %s15, 0
    %p238 = por %p236, %p237
    %p239 = scmp.ne.s32.totalorder %s231, %s233
    %p240 = scmp.eq.s32.totalorder %s20, 1
    %p241 = por %p239, %p240
    %p242 = scmp.ne.s32.totalorder %s233, %s234
    %p243 = scmp.eq.s32.totalorder %s20, 0
    %p244 = por %p242, %p243
    %p245 = scmp.ne.s32.totalorder %s233, %s234
    %p246 = scmp.eq.s32.totalorder %s21, 1
    %p247 = por %p245, %p246
    %p249 = scmp.ne.s32.totalorder %s234, %s248
    %p250 = scmp.eq.s32.totalorder %s21, 0
    %p251 = por %p249, %p250
    %s252 = ssub.s32 %s22, %s41
    %s253 = ssub.s32 %s23, %s37
    %s254 = sor.u32 %s252, %s253
    %p255 = scmp.eq.s32.totalorder %s254, 0
    %s257 = sadd.s32 %s256, 1
    %s258 = scalar_select %p255, %s256, %s257
    %p261 = pneg %p255
    %p262 = scmp.eq.s32.totalorder %s15, 1
    %p263 = por %p261, %p262
    %p264 = scmp.ne.s32.totalorder %s256, %s259
    %p265 = scmp.eq.s32.totalorder %s15, 0
    %p266 = por %p264, %p265
    %p267 = scmp.ne.s32.totalorder %s256, %s259
    %p268 = scmp.eq.s32.totalorder %s20, 1
    %p269 = por %p267, %p268
    %p270 = scmp.ne.s32.totalorder %s259, %s260
    %p271 = scmp.eq.s32.totalorder %s20, 0
    %p272 = por %p270, %p271
    %p273 = scmp.ne.s32.totalorder %s259, %s260
    %p274 = scmp.eq.s32.totalorder %s21, 1
    %p275 = por %p273, %p274
    %p277 = scmp.ne.s32.totalorder %s260, %s276
    %p278 = scmp.eq.s32.totalorder %s21, 0
    %p279 = por %p277, %p278
    %p280 = scmp.le.s32.totalorder 1, %s15
    %p281 = scmp.lt.s32.totalorder %s15, 3
    %p282 = pnand %p280, %p281
    %p283 = pneg %p282
    // Predicated region
    $region9: #{decoder_block.4} parent=5 // pred_check
      _
    $region10: #{decoder_block.4} parent=5 // pred_check_branch
      %285 = sbr.rel (%p282) target = $region12
    $region11: #{decoder_block.4} parent=5 // pred_region
      %s286 = ssub.s32 %s15, 1
      // Predicated region
      $region13: #{decoder_block.4} parent=11 // pred_check
        %p287 = pneg %p139
      $region14: #{decoder_block.4} parent=11 // pred_check_branch
        %289 = sbr.rel (%p287) target = $region16
      $region15: #{decoder_block.4} parent=11 // pred_region
        _
      $region16: #{decoder_block.4} parent=11 // pred_fallthru
        _
      // Predicated region
      $region17: #{decoder_block.4} parent=11 // pred_check
        %p290 = pneg %p160
      $region18: #{decoder_block.4} parent=11 // pred_check_branch
        %292 = sbr.rel (%p290) target = $region20
      $region19: #{decoder_block.4} parent=11 // pred_region
        _
      $region20: #{decoder_block.4} parent=11 // pred_fallthru
        _
      // Predicated region
      $region21: #{decoder_block.4} parent=11 // pred_check
        %p293 = pneg %p181
      $region22: #{decoder_block.4} parent=11 // pred_check_branch
        %295 = sbr.rel (%p293) target = $region24
      $region23: #{decoder_block.4} parent=11 // pred_region
        _
      $region24: #{decoder_block.4} parent=11 // pred_fallthru
        _
      // Predicated region
      $region25: #{decoder_block.4} parent=11 // pred_check
        %p296 = pneg %p202
      $region26: #{decoder_block.4} parent=11 // pred_check_branch
        %298 = sbr.rel (%p296) target = $region28
      $region27: #{decoder_block.4} parent=11 // pred_region
        _
      $region28: #{decoder_block.4} parent=11 // pred_fallthru
        _
      // Predicated region
      $region29: #{decoder_block.4} parent=11 // pred_check
        %p299 = pneg %p223
      $region30: #{decoder_block.4} parent=11 // pred_check_branch
        %301 = sbr.rel (%p299) target = $region32
      $region31: #{decoder_block.4} parent=11 // pred_region
        _
      $region32: #{decoder_block.4} parent=11 // pred_fallthru
        _
      // Predicated region
      $region33: #{decoder_block.4} parent=11 // pred_check
        %p302 = pneg %p244
      $region34: #{decoder_block.4} parent=11 // pred_check_branch
        %304 = sbr.rel (%p302) target = $region36
      $region35: #{decoder_block.4} parent=11 // pred_region
        _
      $region36: #{decoder_block.4} parent=11 // pred_fallthru
        _
    $region12: #{decoder_block.4} parent=5 // pred_fallthru
      _
    %p305 = scmp.lt.s32.totalorder %s15, 2
    // Predicated region
    $region37: #{decoder_block.4} parent=5 // pred_check
      %p306 = pneg %p305
    $region38: #{decoder_block.4} parent=5 // pred_check_branch
      %308 = sbr.rel (%p306) target = $region40
    $region39: #{decoder_block.4} parent=5 // pred_region
      // Predicated region
      $region41: #{decoder_block.4} parent=39 // pred_check
        %p309 = pneg %p56
      $region42: #{decoder_block.4} parent=39 // pred_check_branch
        %311 = sbr.rel (%p309) target = $region44
      $region43: #{decoder_block.4} parent=39 // pred_region
        %s312 = smul.u32 2, %s24
        %p313 = scmp.lt.s32.totalorder %s22, 1
        %s314 = scalar_select %p313, %s22, 1
        %p315 = scmp.lt.s32.totalorder %s312, 1
        %s316 = scalar_select %p315, %s312, 1
        %s317 = smul.addr %s314, 4
        %s318 = sadd.s32 %s316, %s317
        %s319 = smul.addr %s318, 8
        %s320 = scalar_lea.vmem %s0, %s319
        %s321 = smul.u32 2, %s24
      $region44: #{decoder_block.4} parent=39 // pred_fallthru
        _
      // Predicated region
      $region45: #{decoder_block.4} parent=39 // pred_check
        %p322 = pneg %p84
      $region46: #{decoder_block.4} parent=39 // pred_check_branch
        %324 = sbr.rel (%p322) target = $region48
      $region47: #{decoder_block.4} parent=39 // pred_region
        %s325 = smul.u32 2, %s24
        %p326 = scmp.lt.s32.totalorder %s22, 1
        %s327 = scalar_select %p326, %s22, 1
        %p328 = scmp.lt.s32.totalorder %s325, 1
        %s329 = scalar_select %p328, %s325, 1
        %s330 = smul.addr %s327, 4
        %s331 = sadd.s32 %s329, %s330
        %s332 = smul.addr %s331, 8
        %s333 = scalar_lea.vmem %s1, %s332
        %s334 = smul.u32 2, %s24
      $region48: #{decoder_block.4} parent=39 // pred_fallthru
        _
      // Predicated region
      $region49: #{decoder_block.4} parent=39 // pred_check
        %p335 = pneg %p112
      $region50: #{decoder_block.4} parent=39 // pred_check_branch
        %337 = sbr.rel (%p335) target = $region52
      $region51: #{decoder_block.4} parent=39 // pred_region
        %p338 = scmp.lt.s32.totalorder %s22, 1
        %s339 = scalar_select %p338, %s22, 1
        %p340 = scmp.lt.s32.totalorder %s23, 0
        %s341 = scalar_select %p340, %s23, 0
        %s342 = sadd.s32 %s341, %s339
        %s343 = smul.addr %s342, 8
        %s344 = scalar_lea.vmem %s2, %s343
      $region52: #{decoder_block.4} parent=39 // pred_fallthru
        _
    $region40: #{decoder_block.4} parent=5 // pred_fallthru
      _
    %p345 = scmp.le.s32.totalorder 1, %s15
    %p346 = scmp.lt.s32.totalorder %s15, 3
    %p347 = pnand %p345, %p346
    %p348 = pneg %p347
    // Predicated region
    $region53: #{decoder_block.4} parent=5 // pred_check
      _
    $region54: #{decoder_block.4} parent=5 // pred_check_branch
      %350 = sbr.rel (%p347) target = $region56
    $region55: #{decoder_block.4} parent=5 // pred_region
      %s351 = ssub.s32 %s15, 1
      %s352 = smul.u32 2, %s27
      %p353 = scmp.lt.s32.totalorder %s25, 1
      %s354 = scalar_select %p353, %s25, 1
      %p355 = scmp.lt.s32.totalorder %s352, 1
      %s356 = scalar_select %p355, %s352, 1
      %s357 = smul.addr %s354, 4
      %s358 = sadd.s32 %s356, %s357
      %s359 = smul.addr %s358, 8
      %s360 = scalar_lea.vmem %s0, %s359
      %p361 = pneg %p62
      %p362 = pneg %p59
      %s363 = smul.u32 2, %s27
      %p364 = scmp.lt.s32.totalorder %s25, 1
      %s365 = scalar_select %p364, %s25, 1
      %p366 = scmp.lt.s32.totalorder %s363, 1
      %s367 = scalar_select %p366, %s363, 1
      %s368 = smul.addr %s365, 4
      %s369 = sadd.s32 %s367, %s368
      %s370 = smul.addr %s369, 8
      %s371 = scalar_lea.vmem %s1, %s370
      %p372 = pneg %p90
      %p373 = pneg %p87
      %p374 = scmp.lt.s32.totalorder %s25, 1
      %s375 = scalar_select %p374, %s25, 1
      %p376 = scmp.lt.s32.totalorder %s26, 0
      %s377 = scalar_select %p376, %s26, 0
      %s378 = sadd.s32 %s377, %s375
      %s379 = smul.addr %s378, 8
      %s380 = scalar_lea.vmem %s2, %s379
      %p381 = pneg %p118
      %p382 = pneg %p115
      %p383 = pneg %p139
      %p384 = pneg %p136
      %p385 = pneg %p160
      %p386 = pneg %p157
      %p387 = pneg %p181
      %p388 = pneg %p178
      %p389 = pneg %p202
      %p390 = pneg %p199
      %p391 = pneg %p223
      %p392 = pneg %p220
      %p393 = pneg %p244
      %p394 = pneg %p241
      %p395 = pneg %p272
      %p396 = pneg %p269
      %p397 = scmp.lt.s32.totalorder %s25, 1
      %s398 = scalar_select %p397, %s25, 1
      %p399 = scmp.lt.s32.totalorder %s26, 0
      %s400 = scalar_select %p399, %s26, 0
      %s401 = sadd.s32 %s400, %s398
      %s402 = smul.addr %s401, 8
      %s403 = scalar_lea.vmem %s9, %s402
      %s404 = smul.u32 2, %s27
      %p405 = scmp.lt.s32.totalorder %s25, 1
      %s406 = scalar_select %p405, %s25, 1
      %p407 = scmp.lt.s32.totalorder %s404, 1
      %s408 = scalar_select %p407, %s404, 1
      %s409 = smul.addr %s406, 4
      %s410 = sadd.s32 %s408, %s409
      %s411 = smul.addr %s410, 8
      %s412 = scalar_lea.vmem %s0, %s411
      %s413 = smul.u32 2, %s27
      %s414 = smul.u32 2, %s27
      %p415 = scmp.lt.s32.totalorder %s25, 1
      %s416 = scalar_select %p415, %s25, 1
      %p417 = scmp.lt.s32.totalorder %s414, 1
      %s418 = scalar_select %p417, %s414, 1
      %s419 = smul.addr %s416, 4
      %s420 = sadd.s32 %s418, %s419
      %s421 = smul.addr %s420, 8
      %s422 = scalar_lea.vmem %s1, %s421
      %s423 = smul.u32 2, %s27
      %p424 = scmp.lt.s32.totalorder %s25, 1
      %s425 = scalar_select %p424, %s25, 1
      %p426 = scmp.lt.s32.totalorder %s26, 0
      %s427 = scalar_select %p426, %s26, 0
      %s428 = sadd.s32 %s427, %s425
      %s429 = smul.addr %s428, 8
      %s430 = scalar_lea.vmem %s2, %s429
      %p431 = scmp.lt.s32.totalorder %s25, 1
      %s432 = scalar_select %p431, %s25, 1
      %p433 = scmp.lt.s32.totalorder %s26, 0
      %s434 = scalar_select %p433, %s26, 0
      %s435 = sadd.s32 %s434, %s432
      %s436 = smul.addr %s435, 8
      %s437 = scalar_lea.vmem %s9, %s436
      %p438 = scmp.eq.s32.totalorder %s27, 0
      // Predicated region
      $region57: #{decoder_block.4} parent=55 // pred_check
        %p439 = pneg %p438
      $region58: #{decoder_block.4} parent=55 // pred_check_branch
        %441 = sbr.rel (%p439) target = $region60
      $region59: #{decoder_block.4} parent=55 // pred_region
        %v442 = vld [vmem:[%s430] sm:$0xff]
        %v443 = vld [vmem:[%s3] sm:$0xff]
        %v444 = vld [vmem:[%s3 + $0x8] sm:$0xff]
        %v445 = vld [vmem:[%s4] sm:$0x1]
        %v447 = vperm.slane %v445, 0
        %vm449 = vcmask 130048
        %v451 = vsel %vm449, %v442, 0
        %453 = vmatpush.msra.mxu0 0.0
        %454 = vmatpush.msra.mxu0 0.0
        %455 = vmatpush.msra.mxu0 0.0
        %456 = vmatpush.msra.mxu0 0.0
        %457 = vmatpush.msra.mxu0 0.0
        %458 = vmatpush.msra.mxu0 0.0
        %459 = vmatpush.msra.mxu0 0.0
        %460 = vmatpush.msra.mxu0 0.0
        %461 = vmatpush.msra.mxu0 0.0
        %462 = vmatpush.msra.mxu0 0.0
        %463 = vmatpush.msra.mxu0 0.0
        %464 = vmatpush.msra.mxu0 0.0
        %465 = vmatpush.msra.mxu0 0.0
        %466 = vmatpush.msra.mxu0 0.0
        %467 = vmatpush.msra.mxu0 %v444
        %468 = vmatpush.msra.mxu0 %v443
        %469 = vmatmul.f32.gmra.mxu0 %v451
        %v470 = vpop.f32.mrf.mxu0
        %v471 = vadd.f32 %v447, %v470
        %472 = vdwg.mxu0
        %473 = vst.msk [vmem:[#allocation2] sm:$0xff] %vm449, %v471
        %s474 = scalar_lea.vmem %s3, 16
        %v475 = vld [vmem:[%s474] sm:$0xff]
        %v476 = vld [vmem:[%s474 + $0x8] sm:$0xff]
        %s477 = scalar_lea.vmem %s4, 1
        %v478 = vld [vmem:[%s477] sm:$0x1]
        %v480 = vperm.slane %v478, 0
        %482 = vrot.lane.b32.xlu0 %v442, 112
        %v483 = vpop.permute.xlu0 %482
        %v484 = vsel %vm449, %v483, 0
        %486 = vmatpush.msra.mxu0 0.0
        %487 = vmatpush.msra.mxu0 0.0
        %488 = vmatpush.msra.mxu0 0.0
        %489 = vmatpush.msra.mxu0 0.0
        %490 = vmatpush.msra.mxu0 0.0
        %491 = vmatpush.msra.mxu0 0.0
        %492 = vmatpush.msra.mxu0 0.0
        %493 = vmatpush.msra.mxu0 0.0
        %494 = vmatpush.msra.mxu0 0.0
        %495 = vmatpush.msra.mxu0 0.0
        %496 = vmatpush.msra.mxu0 0.0
        %497 = vmatpush.msra.mxu0 0.0
        %498 = vmatpush.msra.mxu0 0.0
        %499 = vmatpush.msra.mxu0 0.0
        %500 = vmatpush.msra.mxu0 %v476
        %501 = vmatpush.msra.mxu0 %v475
        %502 = vmatmul.f32.gmra.mxu0 %v484
        %v503 = vpop.f32.mrf.mxu0
        %v504 = vadd.f32 %v480, %v503
        %505 = vdwg.mxu0
        %s506 = scalar_lea.vmem [#allocation2], 8
        %507 = vst.msk [vmem:[%s506] sm:$0xff] %vm449, %v504
        %vm508 = vcmask 7168
        %509 = vst.msk [vmem:[#allocation3] sm:$0xff] %vm508, -inf
        %510 = vst.msk [vmem:[#allocation3 + $0x8] sm:$0xff] %vm508, -inf
        %511 = vst.msk [vmem:[#allocation4] sm:$0xff] %vm508, 0.0
        %512 = vst.msk [vmem:[#allocation4 + $0x8] sm:$0xff] %vm508, 0.0
        %513 = vst.msk [vmem:[#allocation5] sm:$0xff] %vm449, 0.0
        %514 = vst.msk [vmem:[#allocation5 + $0x8] sm:$0xff] %vm449, 0.0
      $region60: #{decoder_block.4} parent=55 // pred_fallthru
        _
      %v515 = vld [vmem:[%s412] sm:$0xff]
      %v516 = vld [vmem:[%s412 + $0x8] sm:$0xff]
      %v517 = vld [vmem:[%s412 + $0x10] sm:$0xff]
      %v518 = vld [vmem:[%s412 + $0x18] sm:$0xff]
      %v519 = vld [vmem:[%s422] sm:$0xff]
      %v520 = vld [vmem:[%s422 + $0x8] sm:$0xff]
      %v521 = vld [vmem:[%s422 + $0x10] sm:$0xff]
      %v522 = vld [vmem:[%s422 + $0x18] sm:$0xff]
      %v523 = vld [vmem:[#allocation2] sm:$0xff]
      %v524 = vld [vmem:[#allocation2 + $0x8] sm:$0xff]
      %vm525 = vcmask 130048
      %v527 = vsel %vm525, %v523, 0
      %v530 = vsel %vm525, %v515, 0
      %v533 = vsel %vm525, %v516, 0
      %535 = vmatpush.xpose.msra.mxu0 0.0
      %536 = vmatpush.xpose.msra.mxu0 0.0
      %537 = vmatpush.xpose.msra.mxu0 0.0
      %538 = vmatpush.xpose.msra.mxu0 0.0
      %539 = vmatpush.xpose.msra.mxu0 0.0
      %540 = vmatpush.xpose.msra.mxu0 0.0
      %541 = vmatpush.xpose.msra.mxu0 0.0
      %542 = vmatpush.xpose.msra.mxu0 0.0
      %543 = vmatpush.xpose.msra.mxu0 0.0
      %544 = vmatpush.xpose.msra.mxu0 0.0
      %545 = vmatpush.xpose.msra.mxu0 0.0
      %546 = vmatpush.xpose.msra.mxu0 0.0
      %547 = vmatpush.xpose.msra.mxu0 0.0
      %548 = vmatpush.xpose.msra.mxu0 0.0
      %549 = vmatpush.xpose.msra.mxu0 %v533
      %550 = vmatpush.xpose.msra.mxu0 %v530
      %551 = vmatmul.f32.gmra.mxu0 %v527
      %v552 = vpop.f32.mrf.mxu0
      %v553 = vadd.f32 0.0, %v552
      %554 = vdwg.mxu0
      %v556 = vsel %vm525, %v524, 0
      %v559 = vsel %vm525, %v517, 0
      %v562 = vsel %vm525, %v518, 0
      %564 = vmatpush.xpose.msra.mxu0 0.0
      %565 = vmatpush.xpose.msra.mxu0 0.0
      %566 = vmatpush.xpose.msra.mxu0 0.0
      %567 = vmatpush.xpose.msra.mxu0 0.0
      %568 = vmatpush.xpose.msra.mxu0 0.0
      %569 = vmatpush.xpose.msra.mxu0 0.0
      %570 = vmatpush.xpose.msra.mxu0 0.0
      %571 = vmatpush.xpose.msra.mxu0 0.0
      %572 = vmatpush.xpose.msra.mxu0 0.0
      %573 = vmatpush.xpose.msra.mxu0 0.0
      %574 = vmatpush.xpose.msra.mxu0 0.0
      %575 = vmatpush.xpose.msra.mxu0 0.0
      %576 = vmatpush.xpose.msra.mxu0 0.0
      %577 = vmatpush.xpose.msra.mxu0 0.0
      %578 = vmatpush.xpose.msra.mxu0 %v562
      %579 = vmatpush.xpose.msra.mxu0 %v559
      %580 = vmatmul.f32.gmra.mxu0 %v556
      %v581 = vpop.f32.mrf.mxu0
      %v582 = vadd.f32 0.0, %v581
      %583 = vdwg.mxu0
      %v584 = vld [vmem:[#allocation3] sm:$0xff]
      %v585 = vld [vmem:[#allocation3 + $0x8] sm:$0xff]
      %v586 = vsel %vm525, %v553, -inf
      %587 = vmax.xlane.f32.xlu0 %v586
      %v588 = vpop.xlane.xlu0 %587
      %v589 = vsel %vm525, %v582, -inf
      %590 = vmax.xlane.f32.xlu0 %v589
      %v591 = vpop.xlane.xlu0 %590
      %v592 = vmax.f32 %v584, %v588
      %v593 = vmax.f32 %v585, %v591
      %v594 = vsub.f32 %v584, %v592
      %v595 = vsub.f32 %v585, %v593
      %v596 = vmul.f32 %v594, 1.442695
      %v597 = vpow.pop %v596
      %v598 = vmul.f32 %v595, 1.442695
      %v599 = vpow.pop %v598
      %601 = vset.pattern.permute.xlu0 0
      %602 = vperm.xlu0 %601, %v592
      %v603 = vpop.permute.xlu0 %602
      %606 = vset.pattern.permute.xlu0 0
      %607 = vperm.xlu0 %606, %v593
      %v608 = vpop.permute.xlu0 %607
      %v610 = vsub.f32 %v553, %v603
      %v611 = vsub.f32 %v582, %v608
      %v612 = vmul.f32 %v610, 1.442695
      %v613 = vpow.pop %v612
      %v614 = vmul.f32 %v611, 1.442695
      %v615 = vpow.pop %v614
      %v616 = vld [vmem:[#allocation4] sm:$0xff]
      %v617 = vld [vmem:[#allocation4 + $0x8] sm:$0xff]
      %v618 = vmul.f32 %v597, %v616
      %v619 = vmul.f32 %v599, %v617
      %v620 = vsel %vm525, %v613, 0.0
      %621 = vadd.xlane.f32.xlu0 %v620
      %v622 = vpop.xlane.xlu0 %621
      %v623 = vsel %vm525, %v615, 0.0
      %624 = vadd.xlane.f32.xlu0 %v623
      %v625 = vpop.xlane.xlu0 %624
      %v626 = vadd.f32 %v618, %v622
      %v627 = vadd.f32 %v619, %v625
      %vm628 = vcmask 7168
      %629 = vst.msk [vmem:[#allocation4] sm:$0xff] %vm628, %v626
      %630 = vst.msk [vmem:[#allocation4 + $0x8] sm:$0xff] %vm628, %v627
      %v631 = vld [vmem:[#allocation5] sm:$0xff]
      %v632 = vld [vmem:[#allocation5 + $0x8] sm:$0xff]
      %634 = vset.pattern.permute.xlu0 0
      %635 = vperm.xlu0 %634, %v597
      %v636 = vpop.permute.xlu0 %635
      %639 = vset.pattern.permute.xlu0 0
      %640 = vperm.xlu0 %639, %v599
      %v641 = vpop.permute.xlu0 %640
      %v643 = vmul.f32 %v636, %v631
      %v644 = vmul.f32 %v641, %v632
      %v646 = vsel %vm525, %v613, 0
      %648 = vmatpush.msra.mxu0 0.0
      %649 = vmatpush.msra.mxu0 0.0
      %650 = vmatpush.msra.mxu0 0.0
      %651 = vmatpush.msra.mxu0 0.0
      %652 = vmatpush.msra.mxu0 0.0
      %653 = vmatpush.msra.mxu0 0.0
      %654 = vmatpush.msra.mxu0 0.0
      %655 = vmatpush.msra.mxu0 0.0
      %656 = vmatpush.msra.mxu0 0.0
      %657 = vmatpush.msra.mxu0 0.0
      %658 = vmatpush.msra.mxu0 0.0
      %659 = vmatpush.msra.mxu0 0.0
      %660 = vmatpush.msra.mxu0 0.0
      %661 = vmatpush.msra.mxu0 0.0
      %662 = vmatpush.msra.mxu0 %v520
      %663 = vmatpush.msra.mxu0 %v519
      %664 = vmatmul.f32.gmra.mxu0 %v646
      %v665 = vpop.f32.mrf.mxu0
      %v666 = vadd.f32 0.0, %v665
      %667 = vdwg.mxu0
      %v669 = vsel %vm525, %v615, 0
      %671 = vmatpush.msra.mxu0 0.0
      %672 = vmatpush.msra.mxu0 0.0
      %673 = vmatpush.msra.mxu0 0.0
      %674 = vmatpush.msra.mxu0 0.0
      %675 = vmatpush.msra.mxu0 0.0
      %676 = vmatpush.msra.mxu0 0.0
      %677 = vmatpush.msra.mxu0 0.0
      %678 = vmatpush.msra.mxu0 0.0
      %679 = vmatpush.msra.mxu0 0.0
      %680 = vmatpush.msra.mxu0 0.0
      %681 = vmatpush.msra.mxu0 0.0
      %682 = vmatpush.msra.mxu0 0.0
      %683 = vmatpush.msra.mxu0 0.0
      %684 = vmatpush.msra.mxu0 0.0
      %685 = vmatpush.msra.mxu0 %v522
      %686 = vmatpush.msra.mxu0 %v521
      %687 = vmatmul.f32.gmra.mxu0 %v669
      %v688 = vpop.f32.mrf.mxu0
      %v689 = vadd.f32 0.0, %v688
      %690 = vdwg.mxu0
      %v691 = vadd.f32 %v643, %v666
      %v692 = vadd.f32 %v644, %v689
      %693 = vst.msk [vmem:[#allocation5] sm:$0xff] %vm525, %v691
      %694 = vst.msk [vmem:[#allocation5 + $0x8] sm:$0xff] %vm525, %v692
      %695 = vst.msk [vmem:[#allocation3] sm:$0xff] %vm628, %v592
      %696 = vst.msk [vmem:[#allocation3 + $0x8] sm:$0xff] %vm628, %v593
      // Predicated region
      $region61: #{decoder_block.4} parent=55 // pred_check
        %p697 = pneg %p438
      $region62: #{decoder_block.4} parent=55 // pred_check_branch
        %699 = sbr.rel (%p697) target = $region64
      $region63: #{decoder_block.4} parent=55 // pred_region
        %v700 = vld [vmem:[#allocation4] sm:$0xff]
        %v701 = vld [vmem:[#allocation4 + $0x8] sm:$0xff]
        %v702 = vrcp.pop %v700
        %v703 = vrcp.pop %v701
        %v704 = vmul.f32 %v700, %v702
        %v705 = vmul.f32 %v701, %v703
        %v706 = vsub.f32 2.0, %v704
        %v707 = vsub.f32 2.0, %v705
        %v708 = vmul.f32 %v702, %v706
        %v709 = vmul.f32 %v703, %v707
        %v710 = vld [vmem:[#allocation5] sm:$0xff]
        %712 = vset.pattern.permute.xlu0 0
        %713 = vperm.xlu0 %712, %v708
        %v714 = vpop.permute.xlu0 %713
        %v716 = vmul.f32 %v710, %v714
        %717 = vst.msk [vmem:[#allocation6] sm:$0xff] %vm525, %v716
        %s718 = scalar_lea.vmem [#allocation5], 8
        %v719 = vld [vmem:[%s718] sm:$0xff]
        %721 = vset.pattern.permute.xlu0 0
        %722 = vperm.xlu0 %721, %v709
        %v723 = vpop.permute.xlu0 %722
        %v725 = vmul.f32 %v719, %v723
        %727 = vrot.lane.b32.xlu0 %v725, 16
        %v728 = vpop.permute.xlu0 %727
        %vm730 = vcmask 261248
        %731 = vst.msk [vmem:[#allocation6] sm:$0xff] %vm730, %v728
        %v732 = vld [vmem:[#allocation6] sm:$0xff]
        %v733 = vld [vmem:[%s5] sm:$0xff]
        %v734 = vld [vmem:[%s5 + $0x8] sm:$0xff]
        %v735 = vld [vmem:[%s5 + $0x10] sm:$0xff]
        %v736 = vld [vmem:[%s5 + $0x18] sm:$0xff]
        %v737 = vld [vmem:[%s6] sm:$0x1]
        %v739 = vperm.slane %v737, 0
        %vm741 = vcmask 261120
        %v743 = vsel %vm741, %v732, 0
        %745 = vmatpush.msra.mxu0 0.0
        %746 = vmatpush.msra.mxu0 0.0
        %747 = vmatpush.msra.mxu0 0.0
        %748 = vmatpush.msra.mxu0 0.0
        %749 = vmatpush.msra.mxu0 0.0
        %750 = vmatpush.msra.mxu0 0.0
        %751 = vmatpush.msra.mxu0 0.0
        %752 = vmatpush.msra.mxu0 0.0
        %753 = vmatpush.msra.mxu0 0.0
        %754 = vmatpush.msra.mxu0 0.0
        %755 = vmatpush.msra.mxu0 0.0
        %756 = vmatpush.msra.mxu0 0.0
        %757 = vmatpush.msra.mxu0 %v736
        %758 = vmatpush.msra.mxu0 %v735
        %759 = vmatpush.msra.mxu0 %v734
        %760 = vmatpush.msra.mxu0 %v733
        %761 = vmatmul.f32.gmra.mxu0 %v743
        %v762 = vpop.f32.mrf.mxu0
        %v763 = vadd.f32 %v739, %v762
        %764 = vdwg.mxu0
        %v765 = vld [vmem:[%s430] sm:$0xff]
        %v766 = vadd.f32 %v765, %v763
        %v767 = vsel %vm741, %v766, 0.0
        %768 = vadd.xlane.f32.xlu0 %v767
        %v769 = vpop.xlane.xlu0 %768
        %v770 = vrcp.pop 32.0
        %v771 = vmul.f32 32.0, %v770
        %v772 = vsub.f32 1.0, %v771
        %v773 = vmul.f32 %v770, %v772
        %v774 = vadd.f32 %v770, %v773
        %vm775 = vweird.f32 %v770
        %v776 = vsel %vm775, %v770, %v774
        %v777 = vmul.f32 %v769, %v776
        %v778 = vsub.f32 %v766, %v777
        %v779 = vmul.f32 %v778, %v778
        %v780 = vsel %vm741, %v779, 0.0
        %781 = vadd.xlane.f32.xlu0 %v780
        %v782 = vpop.xlane.xlu0 %781
        %v783 = vmul.f32 %v782, %v776
        %v784 = vadd.f32 %v783, 1e-05
        %v785 = vrsqrt.pop %v784
        %v786 = vmul.f32 %v785, %v784
        %v787 = vmul.f32 %v786, %v785
        %v788 = vmul.f32 0.5, %v787
        %v789 = vsub.f32 1.5, %v788
        %v790 = vmul.f32 %v785, %v789
        %vm791 = vweird.f32 %v784
        %vm792 = vweird.f32 %v785
        %vm793 = vmor %vm791, %vm792
        %v794 = vsel %vm793, %v785, %v790
        %v795 = vmul.f32 %v778, %v794
        %v796 = vld [vmem:[%s7] sm:$0x1]
        %v798 = vperm.slane %v796, 0
        %v800 = vmul.f32 %v795, %v798
        %v801 = vld [vmem:[%s8] sm:$0x1]
        %v803 = vperm.slane %v801, 0
        %v805 = vadd.f32 %v800, %v803
        %806 = vst.msk [vmem:[%s437] sm:$0xff] %vm741, %v805
      $region64: #{decoder_block.4} parent=55 // pred_fallthru
        _
      %p807 = scmp.lt.s32.totalorder %s25, 1
      %s808 = scalar_select %p807, %s25, 1
      %p809 = scmp.lt.s32.totalorder %s26, 0
      %s810 = scalar_select %p809, %s26, 0
      %s811 = sadd.s32 %s810, %s808
      %s812 = smul.addr %s811, 8
      %s813 = scalar_lea.vmem %s9, %s812
      // Predicated region
      $region65: #{decoder_block.4} parent=55 // pred_check
        %p814 = pneg %p269
      $region66: #{decoder_block.4} parent=55 // pred_check_branch
        %816 = sbr.rel (%p814) target = $region68
      $region67: #{decoder_block.4} parent=55 // pred_region
        _
      $region68: #{decoder_block.4} parent=55 // pred_fallthru
        _
    $region56: #{decoder_block.4} parent=5 // pred_fallthru
      _
    %p817 = scmp.le.s32.totalorder 2, %s15
    // Predicated region
    $region69: #{decoder_block.4} parent=5 // pred_check
      %p818 = pneg %p817
    $region70: #{decoder_block.4} parent=5 // pred_check_branch
      %820 = sbr.rel (%p818) target = $region72
    $region71: #{decoder_block.4} parent=5 // pred_region
      %s821 = ssub.s32 %s15, 2
      // Predicated region
      $region73: #{decoder_block.4} parent=71 // pred_check
        %p822 = pneg %p275
      $region74: #{decoder_block.4} parent=71 // pred_check_branch
        %824 = sbr.rel (%p822) target = $region76
      $region75: #{decoder_block.4} parent=71 // pred_region
        %p825 = scmp.lt.s32.totalorder %s28, 1
        %s826 = scalar_select %p825, %s28, 1
        %p827 = scmp.lt.s32.totalorder %s29, 0
        %s828 = scalar_select %p827, %s29, 0
        %s829 = sadd.s32 %s828, %s826
        %s830 = smul.addr %s829, 8
        %s831 = scalar_lea.vmem %s9, %s830
      $region76: #{decoder_block.4} parent=71 // pred_fallthru
        _
    $region72: #{decoder_block.4} parent=5 // pred_fallthru
      _
  $region6: #{decoder_block.4} parent=0 // loop_footer
    %s19 = sadd.s32 1, %s15
  $region7: #{decoder_block.4} parent=0 // loop_footer_branch
    %14 = sbr.rel target = $region3
  $region8: #{decoder_block.4} parent=0 // loop_exit
    _

</llo_original>
